<compile_context>
chip_gen: v6e
topology: v6e:2x2x1
jax: 0.10.0
libtpu: 0.0.40
codegen_flags: <defaults>
</compile_context>

<pallas_src>
import jax
import jax.numpy as jnp
from jax.experimental import pallas as pl
from jax.experimental.pallas import tpu as pltpu


# ----------------------------------------------------------------------------
# Layer table:  name, true_in, true_out, padded_in, padded_out
#   "muvarFC" is the fused muFC+varFC head (cols [0:256] = mu, [256:512] = logvar).
# ----------------------------------------------------------------------------
_LAYERS = [
    ("efn1",    196, 400, 256, 512),
    ("efn2",    400, 400, 512, 512),
    ("efn3",    400, 400, 512, 512),
    ("efn4",    400, 256, 512, 256),
    ("muvarFC", 256, 512, 256, 512),
    ("zFC",     256, 256, 256, 256),
    ("dfn4",    256, 400, 256, 512),
    ("dfn3",    400, 400, 512, 512),
    ("dfn2",    400, 400, 512, 512),
    ("dfn1",    400, 196, 512, 256),
]


# ----------------------------------------------------------------------------
# Kernel: whole forward pass for one batch tile. Weights are bf16 and resident
# in VMEM across the batch grid (constant index maps, single-buffered); biases
# arrive as one packed (10, 512) f32 array.
# ----------------------------------------------------------------------------
def vae_kernel(
    x_ref, eps_ref, b_ref,
    w_e1, w_e2, w_e3, w_e4, w_muvar, w_z, w_d4, w_d3, w_d2, w_d1,
    out_ref, mu_ref, logvar_ref,
):
    def dense(h, w_r, bias_row, out_dim, relu=True, out_dtype=jnp.bfloat16):
        # bf16 x bf16 matmul on the MXU with f32 accumulation; bias/ReLU in f32;
        # activation handed to the next layer in bf16 (half the spill footprint).
        y = jnp.dot(h, w_r[...], preferred_element_type=jnp.float32)
        y = y + b_ref[bias_row:bias_row + 1, :out_dim]
        if relu:
            y = jnp.maximum(y, 0.0)
        return y.astype(out_dtype)

    # ---- encoder ----
    h = dense(x_ref[...], w_e1, 0, 512)
    h = dense(h, w_e2, 1, 512)
    h = dense(h, w_e3, 2, 512)
    h = dense(h, w_e4, 3, 256)
    muvar = dense(h, w_muvar, 4, 512, relu=False, out_dtype=jnp.float32)
    mu = muvar[:, :256]
    logvar = muvar[:, 256:]

    # Store the heads immediately: retires the (bt, 512) f32 live range before
    # the 5 decoder layers (avoids holding ~64 vregs across the decoder).
    mu_ref[...] = mu
    logvar_ref[...] = logvar

    # ---- reparameterize: z = mu + exp(logvar / 2) * eps ----
    std = jnp.exp(logvar * 0.5)
    z = mu + std * eps_ref[...].astype(jnp.float32)

    # ---- decoder (final layer keeps ReLU, matching the reference module) ----
    d = dense(z.astype(jnp.bfloat16), w_z, 5, 256)
    d = dense(d, w_d4, 6, 512)
    d = dense(d, w_d3, 7, 512)
    d = dense(d, w_d2, 8, 512)
    d = dense(d, w_d1, 9, 256, out_dtype=jnp.float32)

    out_ref[...] = d


# ----------------------------------------------------------------------------
# Parameter init (mimics nn.Linear uniform(-1/sqrt(in), 1/sqrt(in)); weights
# stored padded + bf16, biases packed into one padded (10, 512) f32 array).
# Padded weight rows/cols and bias entries are exactly zero, so sliced results
# match the unpadded math (ReLU(0)=0 propagates zeros through padded lanes).
# ----------------------------------------------------------------------------
def init_params(key):
    weights = []
    bias_rows = []
    for name, fin, fout, pin, pout in _LAYERS:
        key, kw, kb = jax.random.split(key, 3)
        bound = float(fin) ** -0.5
        w = jax.random.uniform(kw, (fin, fout), jnp.float32, -bound, bound)
        b = jax.random.uniform(kb, (fout,), jnp.float32, -bound, bound)
        wp = jnp.zeros((pin, pout), jnp.float32).at[:fin, :fout].set(w)
        bp = jnp.zeros((512,), jnp.float32).at[:fout].set(b)
        weights.append(wp.astype(jnp.bfloat16))
        bias_rows.append(bp)
    biases = jnp.stack(bias_rows, axis=0)   # (10, 512) f32
    return {"weights": weights, "biases": biases}


# ----------------------------------------------------------------------------
# Batch-tile selection:
#   * small batches: one sublane-rounded tile.
#   * large batches: biggest tile in {512, 256, 128} that still yields >= 2 grid
#     steps, so v7x's two TensorCores both get work via the "parallel" axis.
# ----------------------------------------------------------------------------
def _choose_batch_tile(nrows):
    if nrows <= 128:
        return max(8, pl.cdiv(nrows, 8) * 8)
    for cand in (512, 256):
        if nrows >= 2 * cand:
            return cand
    return 128


# ----------------------------------------------------------------------------
# Wrapper (jit'ed so the pad / slice ops fuse instead of adding HBM round trips)
# ----------------------------------------------------------------------------
@jax.jit
def vae_forward(x_nchw, eps, params):
    """x_nchw: (B, 1, 14, 14) f32, eps: (B, 256) f32 standard normal."""
    x = x_nchw.reshape(-1, 196).astype(jnp.float32)   # matches x.view(-1, 196)
    nrows = x.shape[0]

    bt = _choose_batch_tile(nrows)
    padded_rows = pl.cdiv(nrows, bt) * bt

    # Lane-pad features 196->256, pad the batch to the tile boundary, and feed
    # the kernel bf16 inputs (halves input HBM bytes; matmuls are bf16 anyway).
    xp = jnp.zeros((padded_rows, 256), jnp.bfloat16)
    xp = xp.at[:nrows, :196].set(x.astype(jnp.bfloat16))
    epsp = jnp.zeros((padded_rows, 256), jnp.bfloat16)
    epsp = epsp.at[:nrows, :].set(eps.astype(jnp.bfloat16))

    weights = params["weights"]
    biases = params["biases"]

    batch_map = lambda i: (i, 0)
    const_map = lambda i: (0, 0)

    in_specs = [
        pl.BlockSpec((bt, 256), batch_map),          # x tile (double-buffered)
        pl.BlockSpec((bt, 256), batch_map),          # eps tile (double-buffered)
        # Resident operands: constant index_map -> fetched once; single-buffered
        # to avoid paying 2x VMEM for buffers that are never re-filled.
        pl.BlockSpec(biases.shape, const_map, pipeline_mode=pl.Buffered(1)),
    ] + [
        pl.BlockSpec(w.shape, const_map, pipeline_mode=pl.Buffered(1))
        for w in weights
    ]

    out_specs = (
        pl.BlockSpec((bt, 256), batch_map),
        pl.BlockSpec((bt, 256), batch_map),
        pl.BlockSpec((bt, 256), batch_map),
    )

    # Actual footprint: ~3.8 MiB resident weights + pipelined I/O tiles + compiler
    # scratch for the (bt, 512) intermediates.  Keep the limit tight for v7x.
    vmem_limit = (16 << 20) if bt <= 256 else (24 << 20)

    out_p, mu_p, logvar_p = pl.pallas_call(
        vae_kernel,
        out_shape=(
            jax.ShapeDtypeStruct((padded_rows, 256), jnp.float32),
            jax.ShapeDtypeStruct((padded_rows, 256), jnp.float32),
            jax.ShapeDtypeStruct((padded_rows, 256), jnp.float32),
        ),
        grid=(padded_rows // bt,),
        in_specs=in_specs,
        out_specs=out_specs,
        compiler_params=pltpu.CompilerParams(
            dimension_semantics=("parallel",),
            vmem_limit_bytes=vmem_limit,
        ),
    )(xp, epsp, biases, *weights)

    out = out_p[:nrows, :196].reshape(-1, 1, 14, 14)   # matches out.view(-1,1,14,14)
    mu = mu_p[:nrows]
    logvar = logvar_p[:nrows]
    return out, mu, logvar


# ----------------------------------------------------------------------------
# Main
# ----------------------------------------------------------------------------
if __name__ == "__main__":
    key = jax.random.PRNGKey(0)
    k_params, k_x, k_eps = jax.random.split(key, 3)

    params = init_params(k_params)

    B = 8
    x = jax.random.normal(k_x, (B, 1, 14, 14), jnp.float32)
    # Reparameterization noise (torch.randn_like equivalent), drawn in JAX glue.
    eps = jax.random.normal(k_eps, (B, 256), jnp.float32)

    out, mu, logvar = vae_forward(x, eps, params)
    jax.block_until_ready((out, mu, logvar))

    assert out.shape == (B, 1, 14, 14)
    assert mu.shape == (B, 256)
    assert logvar.shape == (B, 256)
    assert bool(jnp.isfinite(out).all())
    assert bool(jnp.isfinite(mu).all())
    assert bool(jnp.isfinite(logvar).all())

    print("KERNEL_OK")
</pallas_src>

<mosaic_0001>
module attributes {stable_mosaic.version = 11 : i64} {
  func.func @vae_kernel(%arg0: i32, %arg1: memref<8x256xbf16, #tpu.memory_space<vmem>>, %arg2: memref<8x256xbf16, #tpu.memory_space<vmem>>, %arg3: memref<10x512xf32, #tpu.memory_space<vmem>>, %arg4: memref<256x512xbf16, #tpu.memory_space<vmem>>, %arg5: memref<512x512xbf16, #tpu.memory_space<vmem>>, %arg6: memref<512x512xbf16, #tpu.memory_space<vmem>>, %arg7: memref<512x256xbf16, #tpu.memory_space<vmem>>, %arg8: memref<256x512xbf16, #tpu.memory_space<vmem>>, %arg9: memref<256x256xbf16, #tpu.memory_space<vmem>>, %arg10: memref<256x512xbf16, #tpu.memory_space<vmem>>, %arg11: memref<512x512xbf16, #tpu.memory_space<vmem>>, %arg12: memref<512x512xbf16, #tpu.memory_space<vmem>>, %arg13: memref<512x256xbf16, #tpu.memory_space<vmem>>, %arg14: memref<8x256xf32, #tpu.memory_space<vmem>>, %arg15: memref<8x256xf32, #tpu.memory_space<vmem>>, %arg16: memref<8x256xf32, #tpu.memory_space<vmem>>) attributes {dimension_semantics = [#tpu.dimension_semantics<parallel>], iteration_bounds = array<i64: 1>, scalar_prefetch = 0 : i64, scratch_operands = 0 : i64, tpu.core_type = #tpu.core_type<tc>, window_params = [{transform_indices = @transform_0, window_bounds = array<i64: 8, 256>}, {transform_indices = @transform_1, window_bounds = array<i64: 8, 256>}, {pipeline_mode = #tpu.pipeline_mode<synchronous>, transform_indices = @transform_2, window_bounds = array<i64: 10, 512>}, {pipeline_mode = #tpu.pipeline_mode<synchronous>, transform_indices = @transform_3, window_bounds = array<i64: 256, 512>}, {pipeline_mode = #tpu.pipeline_mode<synchronous>, transform_indices = @transform_4, window_bounds = array<i64: 512, 512>}, {pipeline_mode = #tpu.pipeline_mode<synchronous>, transform_indices = @transform_5, window_bounds = array<i64: 512, 512>}, {pipeline_mode = #tpu.pipeline_mode<synchronous>, transform_indices = @transform_6, window_bounds = array<i64: 512, 256>}, {pipeline_mode = #tpu.pipeline_mode<synchronous>, transform_indices = @transform_7, window_bounds = array<i64: 256, 512>}, {pipeline_mode = #tpu.pipeline_mode<synchronous>, transform_indices = @transform_8, window_bounds = array<i64: 256, 256>}, {pipeline_mode = #tpu.pipeline_mode<synchronous>, transform_indices = @transform_9, window_bounds = array<i64: 256, 512>}, {pipeline_mode = #tpu.pipeline_mode<synchronous>, transform_indices = @transform_10, window_bounds = array<i64: 512, 512>}, {pipeline_mode = #tpu.pipeline_mode<synchronous>, transform_indices = @transform_11, window_bounds = array<i64: 512, 512>}, {pipeline_mode = #tpu.pipeline_mode<synchronous>, transform_indices = @transform_12, window_bounds = array<i64: 512, 256>}, {transform_indices = @transform_13, window_bounds = array<i64: 8, 256>}, {transform_indices = @transform_14, window_bounds = array<i64: 8, 256>}, {transform_indices = @transform_15, window_bounds = array<i64: 8, 256>}]} {
    %c0 = arith.constant 0 : index
    %c0_0 = arith.constant 0 : index
    %0 = vector.load %arg1[%c0, %c0_0] : memref<8x256xbf16, #tpu.memory_space<vmem>>, vector<8x256xbf16>
    %c0_1 = arith.constant 0 : index
    %c0_2 = arith.constant 0 : index
    %1 = vector.load %arg4[%c0_1, %c0_2] : memref<256x512xbf16, #tpu.memory_space<vmem>>, vector<256x512xbf16>
    %cst = arith.constant dense<0.000000e+00> : vector<8x512xf32>
    %2 = tpu.matmul %0, %1, %cst {dimension_numbers = #tpu.dot_dimension_numbers<[1], [0], [0], [1], [0, 0, 1, 1], [], []>} : vector<8x256xbf16>, vector<256x512xbf16>, vector<8x512xf32> -> vector<8x512xf32>
    %c0_3 = arith.constant 0 : index
    %c0_4 = arith.constant 0 : index
    %3 = vector.load %arg3[%c0_3, %c0_4] : memref<10x512xf32, #tpu.memory_space<vmem>>, vector<1x512xf32>
    %4 = vector.broadcast %3 : vector<1x512xf32> to vector<8x512xf32>
    %5 = arith.addf %2, %4 : vector<8x512xf32>
    %cst_5 = arith.constant 0.000000e+00 : f32
    %6 = vector.broadcast %cst_5 : f32 to vector<8x512xf32>
    %7 = arith.maximumf %5, %6 : vector<8x512xf32>
    %8 = arith.truncf %7 : vector<8x512xf32> to vector<8x512xbf16>
    %c0_6 = arith.constant 0 : index
    %c0_7 = arith.constant 0 : index
    %9 = vector.load %arg5[%c0_6, %c0_7] : memref<512x512xbf16, #tpu.memory_space<vmem>>, vector<512x512xbf16>
    %cst_8 = arith.constant dense<0.000000e+00> : vector<8x512xf32>
    %10 = tpu.matmul %8, %9, %cst_8 {dimension_numbers = #tpu.dot_dimension_numbers<[1], [0], [0], [1], [0, 0, 1, 1], [], []>} : vector<8x512xbf16>, vector<512x512xbf16>, vector<8x512xf32> -> vector<8x512xf32>
    %c1 = arith.constant 1 : index
    %c0_9 = arith.constant 0 : index
    %11 = vector.load %arg3[%c1, %c0_9] : memref<10x512xf32, #tpu.memory_space<vmem>>, vector<1x512xf32>
    %12 = vector.broadcast %11 : vector<1x512xf32> to vector<8x512xf32>
    %13 = arith.addf %10, %12 : vector<8x512xf32>
    %cst_10 = arith.constant 0.000000e+00 : f32
    %14 = vector.broadcast %cst_10 : f32 to vector<8x512xf32>
    %15 = arith.maximumf %13, %14 : vector<8x512xf32>
    %16 = arith.truncf %15 : vector<8x512xf32> to vector<8x512xbf16>
    %c0_11 = arith.constant 0 : index
    %c0_12 = arith.constant 0 : index
    %17 = vector.load %arg6[%c0_11, %c0_12] : memref<512x512xbf16, #tpu.memory_space<vmem>>, vector<512x512xbf16>
    %cst_13 = arith.constant dense<0.000000e+00> : vector<8x512xf32>
    %18 = tpu.matmul %16, %17, %cst_13 {dimension_numbers = #tpu.dot_dimension_numbers<[1], [0], [0], [1], [0, 0, 1, 1], [], []>} : vector<8x512xbf16>, vector<512x512xbf16>, vector<8x512xf32> -> vector<8x512xf32>
    %c2 = arith.constant 2 : index
    %c0_14 = arith.constant 0 : index
    %19 = vector.load %arg3[%c2, %c0_14] : memref<10x512xf32, #tpu.memory_space<vmem>>, vector<1x512xf32>
    %20 = vector.broadcast %19 : vector<1x512xf32> to vector<8x512xf32>
    %21 = arith.addf %18, %20 : vector<8x512xf32>
    %cst_15 = arith.constant 0.000000e+00 : f32
    %22 = vector.broadcast %cst_15 : f32 to vector<8x512xf32>
    %23 = arith.maximumf %21, %22 : vector<8x512xf32>
    %24 = arith.truncf %23 : vector<8x512xf32> to vector<8x512xbf16>
    %c0_16 = arith.constant 0 : index
    %c0_17 = arith.constant 0 : index
    %25 = vector.load %arg7[%c0_16, %c0_17] : memref<512x256xbf16, #tpu.memory_space<vmem>>, vector<512x256xbf16>
    %cst_18 = arith.constant dense<0.000000e+00> : vector<8x256xf32>
    %26 = tpu.matmul %24, %25, %cst_18 {dimension_numbers = #tpu.dot_dimension_numbers<[1], [0], [0], [1], [0, 0, 1, 1], [], []>} : vector<8x512xbf16>, vector<512x256xbf16>, vector<8x256xf32> -> vector<8x256xf32>
    %c3 = arith.constant 3 : index
    %c0_19 = arith.constant 0 : index
    %27 = vector.load %arg3[%c3, %c0_19] : memref<10x512xf32, #tpu.memory_space<vmem>>, vector<1x256xf32>
    %28 = vector.broadcast %27 : vector<1x256xf32> to vector<8x256xf32>
    %29 = arith.addf %26, %28 : vector<8x256xf32>
    %cst_20 = arith.constant 0.000000e+00 : f32
    %30 = vector.broadcast %cst_20 : f32 to vector<8x256xf32>
    %31 = arith.maximumf %29, %30 : vector<8x256xf32>
    %32 = arith.truncf %31 : vector<8x256xf32> to vector<8x256xbf16>
    %c0_21 = arith.constant 0 : index
    %c0_22 = arith.constant 0 : index
    %33 = vector.load %arg8[%c0_21, %c0_22] : memref<256x512xbf16, #tpu.memory_space<vmem>>, vector<256x512xbf16>
    %cst_23 = arith.constant dense<0.000000e+00> : vector<8x512xf32>
    %34 = tpu.matmul %32, %33, %cst_23 {dimension_numbers = #tpu.dot_dimension_numbers<[1], [0], [0], [1], [0, 0, 1, 1], [], []>} : vector<8x256xbf16>, vector<256x512xbf16>, vector<8x512xf32> -> vector<8x512xf32>
    %c4 = arith.constant 4 : index
    %c0_24 = arith.constant 0 : index
    %35 = vector.load %arg3[%c4, %c0_24] : memref<10x512xf32, #tpu.memory_space<vmem>>, vector<1x512xf32>
    %36 = vector.broadcast %35 : vector<1x512xf32> to vector<8x512xf32>
    %37 = arith.addf %34, %36 : vector<8x512xf32>
    %38 = vector.extract_strided_slice %37 {offsets = [0, 0], sizes = [8, 256], strides = [1, 1]} : vector<8x512xf32> to vector<8x256xf32>
    %39 = vector.extract_strided_slice %37 {offsets = [0, 256], sizes = [8, 256], strides = [1, 1]} : vector<8x512xf32> to vector<8x256xf32>
    %c0_25 = arith.constant 0 : index
    %c0_26 = arith.constant 0 : index
    %40 = vector.load %arg15[%c0_25, %c0_26] : memref<8x256xf32, #tpu.memory_space<vmem>>, vector<8x256xf32>
    tpu.vector_store %arg15[%c0_25, %c0_26], %38 {strides = array<i32>} : memref<8x256xf32, #tpu.memory_space<vmem>>, vector<8x256xf32>,
    %c0_27 = arith.constant 0 : index
    %c0_28 = arith.constant 0 : index
    %41 = vector.load %arg16[%c0_27, %c0_28] : memref<8x256xf32, #tpu.memory_space<vmem>>, vector<8x256xf32>
    tpu.vector_store %arg16[%c0_27, %c0_28], %39 {strides = array<i32>} : memref<8x256xf32, #tpu.memory_space<vmem>>, vector<8x256xf32>,
    %cst_29 = arith.constant 5.000000e-01 : f32
    %42 = vector.broadcast %cst_29 : f32 to vector<8x256xf32>
    %43 = arith.mulf %39, %42 : vector<8x256xf32>
    %44 = math.exp %43 : vector<8x256xf32>
    %c0_30 = arith.constant 0 : index
    %c0_31 = arith.constant 0 : index
    %45 = vector.load %arg2[%c0_30, %c0_31] : memref<8x256xbf16, #tpu.memory_space<vmem>>, vector<8x256xbf16>
    %46 = arith.extf %45 : vector<8x256xbf16> to vector<8x256xf32>
    %47 = arith.mulf %44, %46 : vector<8x256xf32>
    %48 = arith.addf %38, %47 : vector<8x256xf32>
    %49 = arith.truncf %48 : vector<8x256xf32> to vector<8x256xbf16>
    %c0_32 = arith.constant 0 : index
    %c0_33 = arith.constant 0 : index
    %50 = vector.load %arg9[%c0_32, %c0_33] : memref<256x256xbf16, #tpu.memory_space<vmem>>, vector<256x256xbf16>
    %cst_34 = arith.constant dense<0.000000e+00> : vector<8x256xf32>
    %51 = tpu.matmul %49, %50, %cst_34 {dimension_numbers = #tpu.dot_dimension_numbers<[1], [0], [0], [1], [0, 0, 1, 1], [], []>} : vector<8x256xbf16>, vector<256x256xbf16>, vector<8x256xf32> -> vector<8x256xf32>
    %c5 = arith.constant 5 : index
    %c0_35 = arith.constant 0 : index
    %52 = vector.load %arg3[%c5, %c0_35] : memref<10x512xf32, #tpu.memory_space<vmem>>, vector<1x256xf32>
    %53 = vector.broadcast %52 : vector<1x256xf32> to vector<8x256xf32>
    %54 = arith.addf %51, %53 : vector<8x256xf32>
    %cst_36 = arith.constant 0.000000e+00 : f32
    %55 = vector.broadcast %cst_36 : f32 to vector<8x256xf32>
    %56 = arith.maximumf %54, %55 : vector<8x256xf32>
    %57 = arith.truncf %56 : vector<8x256xf32> to vector<8x256xbf16>
    %c0_37 = arith.constant 0 : index
    %c0_38 = arith.constant 0 : index
    %58 = vector.load %arg10[%c0_37, %c0_38] : memref<256x512xbf16, #tpu.memory_space<vmem>>, vector<256x512xbf16>
    %cst_39 = arith.constant dense<0.000000e+00> : vector<8x512xf32>
    %59 = tpu.matmul %57, %58, %cst_39 {dimension_numbers = #tpu.dot_dimension_numbers<[1], [0], [0], [1], [0, 0, 1, 1], [], []>} : vector<8x256xbf16>, vector<256x512xbf16>, vector<8x512xf32> -> vector<8x512xf32>
    %c6 = arith.constant 6 : index
    %c0_40 = arith.constant 0 : index
    %60 = vector.load %arg3[%c6, %c0_40] : memref<10x512xf32, #tpu.memory_space<vmem>>, vector<1x512xf32>
    %61 = vector.broadcast %60 : vector<1x512xf32> to vector<8x512xf32>
    %62 = arith.addf %59, %61 : vector<8x512xf32>
    %cst_41 = arith.constant 0.000000e+00 : f32
    %63 = vector.broadcast %cst_41 : f32 to vector<8x512xf32>
    %64 = arith.maximumf %62, %63 : vector<8x512xf32>
    %65 = arith.truncf %64 : vector<8x512xf32> to vector<8x512xbf16>
    %c0_42 = arith.constant 0 : index
    %c0_43 = arith.constant 0 : index
    %66 = vector.load %arg11[%c0_42, %c0_43] : memref<512x512xbf16, #tpu.memory_space<vmem>>, vector<512x512xbf16>
    %cst_44 = arith.constant dense<0.000000e+00> : vector<8x512xf32>
    %67 = tpu.matmul %65, %66, %cst_44 {dimension_numbers = #tpu.dot_dimension_numbers<[1], [0], [0], [1], [0, 0, 1, 1], [], []>} : vector<8x512xbf16>, vector<512x512xbf16>, vector<8x512xf32> -> vector<8x512xf32>
    %c7 = arith.constant 7 : index
    %c0_45 = arith.constant 0 : index
    %68 = vector.load %arg3[%c7, %c0_45] : memref<10x512xf32, #tpu.memory_space<vmem>>, vector<1x512xf32>
    %69 = vector.broadcast %68 : vector<1x512xf32> to vector<8x512xf32>
    %70 = arith.addf %67, %69 : vector<8x512xf32>
    %cst_46 = arith.constant 0.000000e+00 : f32
    %71 = vector.broadcast %cst_46 : f32 to vector<8x512xf32>
    %72 = arith.maximumf %70, %71 : vector<8x512xf32>
    %73 = arith.truncf %72 : vector<8x512xf32> to vector<8x512xbf16>
    %c0_47 = arith.constant 0 : index
    %c0_48 = arith.constant 0 : index
    %74 = vector.load %arg12[%c0_47, %c0_48] : memref<512x512xbf16, #tpu.memory_space<vmem>>, vector<512x512xbf16>
    %cst_49 = arith.constant dense<0.000000e+00> : vector<8x512xf32>
    %75 = tpu.matmul %73, %74, %cst_49 {dimension_numbers = #tpu.dot_dimension_numbers<[1], [0], [0], [1], [0, 0, 1, 1], [], []>} : vector<8x512xbf16>, vector<512x512xbf16>, vector<8x512xf32> -> vector<8x512xf32>
    %c8 = arith.constant 8 : index
    %c0_50 = arith.constant 0 : index
    %76 = vector.load %arg3[%c8, %c0_50] : memref<10x512xf32, #tpu.memory_space<vmem>>, vector<1x512xf32>
    %77 = vector.broadcast %76 : vector<1x512xf32> to vector<8x512xf32>
    %78 = arith.addf %75, %77 : vector<8x512xf32>
    %cst_51 = arith.constant 0.000000e+00 : f32
    %79 = vector.broadcast %cst_51 : f32 to vector<8x512xf32>
    %80 = arith.maximumf %78, %79 : vector<8x512xf32>
    %81 = arith.truncf %80 : vector<8x512xf32> to vector<8x512xbf16>
    %c0_52 = arith.constant 0 : index
    %c0_53 = arith.constant 0 : index
    %82 = vector.load %arg13[%c0_52, %c0_53] : memref<512x256xbf16, #tpu.memory_space<vmem>>, vector<512x256xbf16>
    %cst_54 = arith.constant dense<0.000000e+00> : vector<8x256xf32>
    %83 = tpu.matmul %81, %82, %cst_54 {dimension_numbers = #tpu.dot_dimension_numbers<[1], [0], [0], [1], [0, 0, 1, 1], [], []>} : vector<8x512xbf16>, vector<512x256xbf16>, vector<8x256xf32> -> vector<8x256xf32>
    %c9 = arith.constant 9 : index
    %c0_55 = arith.constant 0 : index
    %84 = vector.load %arg3[%c9, %c0_55] : memref<10x512xf32, #tpu.memory_space<vmem>>, vector<1x256xf32>
    %85 = vector.broadcast %84 : vector<1x256xf32> to vector<8x256xf32>
    %86 = arith.addf %83, %85 : vector<8x256xf32>
    %cst_56 = arith.constant 0.000000e+00 : f32
    %87 = vector.broadcast %cst_56 : f32 to vector<8x256xf32>
    %88 = arith.maximumf %86, %87 : vector<8x256xf32>
    %c0_57 = arith.constant 0 : index
    %c0_58 = arith.constant 0 : index
    %89 = vector.load %arg14[%c0_57, %c0_58] : memref<8x256xf32, #tpu.memory_space<vmem>>, vector<8x256xf32>
    tpu.vector_store %arg14[%c0_57, %c0_58], %88 {strides = array<i32>} : memref<8x256xf32, #tpu.memory_space<vmem>>, vector<8x256xf32>,
    return
  }
  func.func @transform_0(%arg0: i32) -> (i32, i32) {
    %c0_i32 = arith.constant 0 : i32
    %c0_i32_0 = arith.constant 0 : i32
    return %arg0, %c0_i32 : i32, i32
  }
  func.func @transform_1(%arg0: i32) -> (i32, i32) {
    %c0_i32 = arith.constant 0 : i32
    %c0_i32_0 = arith.constant 0 : i32
    return %arg0, %c0_i32 : i32, i32
  }
  func.func @transform_2(%arg0: i32) -> (i32, i32) {
    %c0_i32 = arith.constant 0 : i32
    %c0_i32_0 = arith.constant 0 : i32
    %c0_i32_1 = arith.constant 0 : i32
    return %c0_i32, %c0_i32_0 : i32, i32
  }
  func.func @transform_3(%arg0: i32) -> (i32, i32) {
    %c0_i32 = arith.constant 0 : i32
    %c0_i32_0 = arith.constant 0 : i32
    %c0_i32_1 = arith.constant 0 : i32
    return %c0_i32, %c0_i32_0 : i32, i32
  }
  func.func @transform_4(%arg0: i32) -> (i32, i32) {
    %c0_i32 = arith.constant 0 : i32
    %c0_i32_0 = arith.constant 0 : i32
    %c0_i32_1 = arith.constant 0 : i32
    return %c0_i32, %c0_i32_0 : i32, i32
  }
  func.func @transform_5(%arg0: i32) -> (i32, i32) {
    %c0_i32 = arith.constant 0 : i32
    %c0_i32_0 = arith.constant 0 : i32
    %c0_i32_1 = arith.constant 0 : i32
    return %c0_i32, %c0_i32_0 : i32, i32
  }
  func.func @transform_6(%arg0: i32) -> (i32, i32) {
    %c0_i32 = arith.constant 0 : i32
    %c0_i32_0 = arith.constant 0 : i32
    %c0_i32_1 = arith.constant 0 : i32
    return %c0_i32, %c0_i32_0 : i32, i32
  }
  func.func @transform_7(%arg0: i32) -> (i32, i32) {
    %c0_i32 = arith.constant 0 : i32
    %c0_i32_0 = arith.constant 0 : i32
    %c0_i32_1 = arith.constant 0 : i32
    return %c0_i32, %c0_i32_0 : i32, i32
  }
  func.func @transform_8(%arg0: i32) -> (i32, i32) {
    %c0_i32 = arith.constant 0 : i32
    %c0_i32_0 = arith.constant 0 : i32
    %c0_i32_1 = arith.constant 0 : i32
    return %c0_i32, %c0_i32_0 : i32, i32
  }
  func.func @transform_9(%arg0: i32) -> (i32, i32) {
    %c0_i32 = arith.constant 0 : i32
    %c0_i32_0 = arith.constant 0 : i32
    %c0_i32_1 = arith.constant 0 : i32
    return %c0_i32, %c0_i32_0 : i32, i32
  }
  func.func @transform_10(%arg0: i32) -> (i32, i32) {
    %c0_i32 = arith.constant 0 : i32
    %c0_i32_0 = arith.constant 0 : i32
    %c0_i32_1 = arith.constant 0 : i32
    return %c0_i32, %c0_i32_0 : i32, i32
  }
  func.func @transform_11(%arg0: i32) -> (i32, i32) {
    %c0_i32 = arith.constant 0 : i32
    %c0_i32_0 = arith.constant 0 : i32
    %c0_i32_1 = arith.constant 0 : i32
    return %c0_i32, %c0_i32_0 : i32, i32
  }
  func.func @transform_12(%arg0: i32) -> (i32, i32) {
    %c0_i32 = arith.constant 0 : i32
    %c0_i32_0 = arith.constant 0 : i32
    %c0_i32_1 = arith.constant 0 : i32
    return %c0_i32, %c0_i32_0 : i32, i32
  }
  func.func @transform_13(%arg0: i32) -> (i32, i32) {
    %c0_i32 = arith.constant 0 : i32
    %c0_i32_0 = arith.constant 0 : i32
    return %arg0, %c0_i32 : i32, i32
  }
  func.func @transform_14(%arg0: i32) -> (i32, i32) {
    %c0_i32 = arith.constant 0 : i32
    %c0_i32_0 = arith.constant 0 : i32
    return %arg0, %c0_i32 : i32, i32
  }
  func.func @transform_15(%arg0: i32) -> (i32, i32) {
    %c0_i32 = arith.constant 0 : i32
    %c0_i32_0 = arith.constant 0 : i32
    return %arg0, %c0_i32 : i32, i32
  }
}

</mosaic_0001>

<llo_original>
// kernel: vae_forward.1
$region0: #{vae_forward.1}
  #allocation0 [shape = 'u32[]', space=smem, size = 0x4, offset = 0x4, fixed_abs, tag = 'smem constant byte address 0x4 - core index']
  #allocation1 [shape = 'u32[144,128]{1,0:T(1,128)}', space=vmem, size = 0x12000, scoped, tag = 'internal scratch']
  %s0 = inlined_call_operand.vmem [shape: bf16[8,256], index: 0, kind: input, shape index: {}]
  %s1 = inlined_call_operand.vmem [shape: bf16[8,256], index: 1, kind: input, shape index: {}]
  %s2 = inlined_call_operand.hbm [shape: f32[10,512], index: 2, kind: input, shape index: {}]
  %s3 = inlined_call_operand.hbm [shape: bf16[256,512], index: 3, kind: input, shape index: {}]
  %s4 = inlined_call_operand.hbm [shape: bf16[512,512], index: 4, kind: input, shape index: {}]
  %s5 = inlined_call_operand.hbm [shape: bf16[512,512], index: 5, kind: input, shape index: {}]
  %s6 = inlined_call_operand.hbm [shape: bf16[512,256], index: 6, kind: input, shape index: {}]
  %s7 = inlined_call_operand.hbm [shape: bf16[256,512], index: 7, kind: input, shape index: {}]
  %s8 = inlined_call_operand.vmem [shape: bf16[256,256], index: 8, kind: input, shape index: {}]
  %s9 = inlined_call_operand.hbm [shape: bf16[256,512], index: 9, kind: input, shape index: {}]
  %s10 = inlined_call_operand.hbm [shape: bf16[512,512], index: 10, kind: input, shape index: {}]
  %s11 = inlined_call_operand.hbm [shape: bf16[512,512], index: 11, kind: input, shape index: {}]
  %s12 = inlined_call_operand.hbm [shape: bf16[512,256], index: 12, kind: input, shape index: {}]
  %s13 = inlined_call_operand.vmem [shape: f32[8,256], index: 13, kind: output, shape index: {0}]
  %s14 = inlined_call_operand.hbm [shape: f32[8,256], index: 14, kind: output, shape index: {1}]
  %s15 = inlined_call_operand.hbm [shape: f32[8,256], index: 15, kind: output, shape index: {2}]
  %16 = xla_tuple %s13, %s14, %s15
  %s17 = sld [smem:[#allocation0]]
  $region118: #{vae_forward.1} parent=0
    _
  %s19 = ssub.s32 1, %s17
  %s20 = scalar_select 0, %s19, %s17
  $region1: #{vae_forward.1} parent=0
    #allocation2 [shape = 'u8[32768]{0}', space=vmem, size = 0x8000, scoped, tag = 'input window, operand 2, single buffered']
    #allocation3 [shape = 's32[1]{0}', space=sflag, size = 0x4, scoped, tag = 'scoped memory for vae_forward.1']
    #allocation4 [shape = 's32[1]{0}', space=sflag, size = 0x4, scoped, tag = 'scoped memory for vae_forward.1']
    #allocation5 [shape = 'u8[262144]{0}', space=vmem, size = 0x40000, scoped, tag = 'input window, operand 3, single buffered']
    #allocation6 [shape = 's32[1]{0}', space=sflag, size = 0x4, scoped, tag = 'scoped memory for vae_forward.1']
    #allocation7 [shape = 'u8[524288]{0}', space=vmem, size = 0x80000, scoped, tag = 'input window, operand 4, single buffered']
    #allocation8 [shape = 'u8[524288]{0}', space=vmem, size = 0x80000, scoped, tag = 'input window, operand 5, single buffered']
    #allocation9 [shape = 's32[1]{0}', space=sflag, size = 0x4, scoped, tag = 'scoped memory for vae_forward.1']
    #allocation10 [shape = 'u8[262144]{0}', space=vmem, size = 0x40000, scoped, tag = 'input window, operand 6, single buffered']
    #allocation11 [shape = 'u8[262144]{0}', space=vmem, size = 0x40000, scoped, tag = 'input window, operand 7, single buffered']
    #allocation12 [shape = 's32[1]{0}', space=sflag, size = 0x4, scoped, tag = 'scoped memory for vae_forward.1']
    #allocation13 [shape = 'u8[262144]{0}', space=vmem, size = 0x40000, scoped, tag = 'input window, operand 9, single buffered']
    #allocation14 [shape = 'u8[524288]{0}', space=vmem, size = 0x80000, scoped, tag = 'input window, operand 10, single buffered']
    #allocation15 [shape = 's32[1]{0}', space=sflag, size = 0x4, scoped, tag = 'scoped memory for vae_forward.1']
    #allocation16 [shape = 'u8[524288]{0}', space=vmem, size = 0x80000, scoped, tag = 'input window, operand 11, single buffered']
    #allocation17 [shape = 'u8[262144]{0}', space=vmem, size = 0x40000, scoped, tag = 'input window, operand 12, single buffered']
    #allocation18 [shape = 's32[1]{0}', space=sflag, size = 0x4, scoped, tag = 'scoped memory for vae_forward.1']
    #allocation19 [shape = 'u8[8192]{0}', space=vmem, size = 0x2000, scoped, tag = 'output window, operand 1, single buffered']
    #allocation20 [shape = 'u8[8192]{0}', space=vmem, size = 0x2000, scoped, tag = 'output window, operand 2, single buffered']
    #allocation21 [shape = 's32[1]{0}', space=sflag, size = 0x4, scoped, tag = 'scoped memory for vae_forward.1']
    %21 = vsyncpa [#allocation3], 0
    %22 = vsyncpa [#allocation6], 0
    %23 = vsyncpa [#allocation9], 0
    %24 = vsyncpa [#allocation12], 0
    %25 = vsyncpa [#allocation15], 0
    %26 = vsyncpa [#allocation18], 0
    %27 = vsyncpa [#allocation4], 0
    %28 = vsyncpa [#allocation21], 0
    // Predicated region
    $region2: #{vae_forward.1} parent=1 // pred_check
      _
    $region3: #{vae_forward.1} parent=1 // pred_check_branch
      %30 = sbr.rel (0) target = $region5
    $region4: #{vae_forward.1} parent=1 // pred_region
      _
    $region5: #{vae_forward.1} parent=1 // pred_fallthru
      _
    // Predicated region
    $region6: #{vae_forward.1} parent=1 // pred_check
      _
    $region7: #{vae_forward.1} parent=1 // pred_check_branch
      %32 = sbr.rel (0) target = $region9
    $region8: #{vae_forward.1} parent=1 // pred_region
      _
    $region9: #{vae_forward.1} parent=1 // pred_fallthru
      _
    // Predicated region
    $region10: #{vae_forward.1} parent=1 // pred_check
      _
    $region11: #{vae_forward.1} parent=1 // pred_check_branch
      %34 = sbr.rel (0) target = $region13
    $region12: #{vae_forward.1} parent=1 // pred_region
      %s36 = ssub.s32 1024, 1024
      %37 = vsyncadd [#allocation3], %s36
      %s38 = sshll.u32 [#allocation2], 4
      %s39 = int_to_ptr.vmem [resolvable:$true] %s38
      %44 = dma.hbm_to_vmem [thread:$0]  %s2, 1024, %s39, [#allocation3], 512, 512, 32
    $region13: #{vae_forward.1} parent=1 // pred_fallthru
      _
    // Predicated region
    $region14: #{vae_forward.1} parent=1 // pred_check
      _
    $region15: #{vae_forward.1} parent=1 // pred_check_branch
      %46 = sbr.rel (0) target = $region17
    $region16: #{vae_forward.1} parent=1 // pred_region
      %s48 = ssub.s32 8192, 8192
      %49 = vsyncadd [#allocation6], %s48
      %s50 = sshll.u32 [#allocation5], 4
      %s51 = int_to_ptr.vmem [resolvable:$true] %s50
      %56 = dma.hbm_to_vmem [thread:$0]  %s3, 8192, %s51, [#allocation6], 256, 256, 16
    $region17: #{vae_forward.1} parent=1 // pred_fallthru
      _
    // Predicated region
    $region18: #{vae_forward.1} parent=1 // pred_check
      _
    $region19: #{vae_forward.1} parent=1 // pred_check_branch
      %58 = sbr.rel (0) target = $region21
    $region20: #{vae_forward.1} parent=1 // pred_region
      %s60 = ssub.s32 16384, 16384
      %61 = vsyncadd [#allocation6], %s60
      %s62 = sshll.u32 [#allocation7], 4
      %s63 = int_to_ptr.vmem [resolvable:$true] %s62
      %68 = dma.hbm_to_vmem [thread:$0]  %s4, 16384, %s63, [#allocation6], 256, 256, 16
    $region21: #{vae_forward.1} parent=1 // pred_fallthru
      _
    // Predicated region
    $region22: #{vae_forward.1} parent=1 // pred_check
      _
    $region23: #{vae_forward.1} parent=1 // pred_check_branch
      %70 = sbr.rel (0) target = $region25
    $region24: #{vae_forward.1} parent=1 // pred_region
      %s72 = ssub.s32 16384, 16384
      %73 = vsyncadd [#allocation9], %s72
      %s74 = sshll.u32 [#allocation8], 4
      %s75 = int_to_ptr.vmem [resolvable:$true] %s74
      %80 = dma.hbm_to_vmem [thread:$0]  %s5, 16384, %s75, [#allocation9], 256, 256, 16
    $region25: #{vae_forward.1} parent=1 // pred_fallthru
      _
    // Predicated region
    $region26: #{vae_forward.1} parent=1 // pred_check
      _
    $region27: #{vae_forward.1} parent=1 // pred_check_branch
      %82 = sbr.rel (0) target = $region29
    $region28: #{vae_forward.1} parent=1 // pred_region
      %s84 = ssub.s32 8192, 8192
      %85 = vsyncadd [#allocation9], %s84
      %s86 = sshll.u32 [#allocation10], 4
      %s87 = int_to_ptr.vmem [resolvable:$true] %s86
      %92 = dma.hbm_to_vmem [thread:$0]  %s6, 8192, %s87, [#allocation9], 128, 128, 8
    $region29: #{vae_forward.1} parent=1 // pred_fallthru
      _
    // Predicated region
    $region30: #{vae_forward.1} parent=1 // pred_check
      _
    $region31: #{vae_forward.1} parent=1 // pred_check_branch
      %94 = sbr.rel (0) target = $region33
    $region32: #{vae_forward.1} parent=1 // pred_region
      %s96 = ssub.s32 8192, 8192
      %97 = vsyncadd [#allocation12], %s96
      %s98 = sshll.u32 [#allocation11], 4
      %s99 = int_to_ptr.vmem [resolvable:$true] %s98
      %104 = dma.hbm_to_vmem [thread:$0]  %s7, 8192, %s99, [#allocation12], 256, 256, 16
    $region33: #{vae_forward.1} parent=1 // pred_fallthru
      _
    // Predicated region
    $region34: #{vae_forward.1} parent=1 // pred_check
      _
    $region35: #{vae_forward.1} parent=1 // pred_check_branch
      %106 = sbr.rel (0) target = $region37
    $region36: #{vae_forward.1} parent=1 // pred_region
      _
    $region37: #{vae_forward.1} parent=1 // pred_fallthru
      _
    // Predicated region
    $region38: #{vae_forward.1} parent=1 // pred_check
      _
    $region39: #{vae_forward.1} parent=1 // pred_check_branch
      %108 = sbr.rel (0) target = $region41
    $region40: #{vae_forward.1} parent=1 // pred_region
      %s110 = ssub.s32 8192, 8192
      %111 = vsyncadd [#allocation12], %s110
      %s112 = sshll.u32 [#allocation13], 4
      %s113 = int_to_ptr.vmem [resolvable:$true] %s112
      %118 = dma.hbm_to_vmem [thread:$0]  %s9, 8192, %s113, [#allocation12], 256, 256, 16
    $region41: #{vae_forward.1} parent=1 // pred_fallthru
      _
    // Predicated region
    $region42: #{vae_forward.1} parent=1 // pred_check
      _
    $region43: #{vae_forward.1} parent=1 // pred_check_branch
      %120 = sbr.rel (0) target = $region45
    $region44: #{vae_forward.1} parent=1 // pred_region
      %s122 = ssub.s32 16384, 16384
      %123 = vsyncadd [#allocation15], %s122
      %s124 = sshll.u32 [#allocation14], 4
      %s125 = int_to_ptr.vmem [resolvable:$true] %s124
      %130 = dma.hbm_to_vmem [thread:$0]  %s10, 16384, %s125, [#allocation15], 256, 256, 16
    $region45: #{vae_forward.1} parent=1 // pred_fallthru
      _
    // Predicated region
    $region46: #{vae_forward.1} parent=1 // pred_check
      _
    $region47: #{vae_forward.1} parent=1 // pred_check_branch
      %132 = sbr.rel (0) target = $region49
    $region48: #{vae_forward.1} parent=1 // pred_region
      %s134 = ssub.s32 16384, 16384
      %135 = vsyncadd [#allocation15], %s134
      %s136 = sshll.u32 [#allocation16], 4
      %s137 = int_to_ptr.vmem [resolvable:$true] %s136
      %142 = dma.hbm_to_vmem [thread:$0]  %s11, 16384, %s137, [#allocation15], 256, 256, 16
    $region49: #{vae_forward.1} parent=1 // pred_fallthru
      _
    // Predicated region
    $region50: #{vae_forward.1} parent=1 // pred_check
      _
    $region51: #{vae_forward.1} parent=1 // pred_check_branch
      %144 = sbr.rel (0) target = $region53
    $region52: #{vae_forward.1} parent=1 // pred_region
      %s146 = ssub.s32 8192, 8192
      %147 = vsyncadd [#allocation18], %s146
      %s148 = sshll.u32 [#allocation17], 4
      %s149 = int_to_ptr.vmem [resolvable:$true] %s148
      %154 = dma.hbm_to_vmem [thread:$0]  %s12, 8192, %s149, [#allocation18], 128, 128, 8
    $region53: #{vae_forward.1} parent=1 // pred_fallthru
      _
    // Predicated region
    $region54: #{vae_forward.1} parent=1 // pred_check
      _
    $region55: #{vae_forward.1} parent=1 // pred_check_branch
      %156 = sbr.rel (0) target = $region57
    $region56: #{vae_forward.1} parent=1 // pred_region
      %157 = dma.done [#allocation3], 1024
    $region57: #{vae_forward.1} parent=1 // pred_fallthru
      _
    // Predicated region
    $region58: #{vae_forward.1} parent=1 // pred_check
      _
    $region59: #{vae_forward.1} parent=1 // pred_check_branch
      %159 = sbr.rel (0) target = $region61
    $region60: #{vae_forward.1} parent=1 // pred_region
      %160 = dma.done [#allocation6], 8192
    $region61: #{vae_forward.1} parent=1 // pred_fallthru
      _
    // Predicated region
    $region62: #{vae_forward.1} parent=1 // pred_check
      _
    $region63: #{vae_forward.1} parent=1 // pred_check_branch
      %162 = sbr.rel (0) target = $region65
    $region64: #{vae_forward.1} parent=1 // pred_region
      %163 = dma.done [#allocation6], 16384
    $region65: #{vae_forward.1} parent=1 // pred_fallthru
      _
    // Predicated region
    $region66: #{vae_forward.1} parent=1 // pred_check
      _
    $region67: #{vae_forward.1} parent=1 // pred_check_branch
      %165 = sbr.rel (0) target = $region69
    $region68: #{vae_forward.1} parent=1 // pred_region
      %166 = dma.done [#allocation9], 16384
    $region69: #{vae_forward.1} parent=1 // pred_fallthru
      _
    // Predicated region
    $region70: #{vae_forward.1} parent=1 // pred_check
      _
    $region71: #{vae_forward.1} parent=1 // pred_check_branch
      %168 = sbr.rel (0) target = $region73
    $region72: #{vae_forward.1} parent=1 // pred_region
      %169 = dma.done [#allocation9], 8192
    $region73: #{vae_forward.1} parent=1 // pred_fallthru
      _
    // Predicated region
    $region74: #{vae_forward.1} parent=1 // pred_check
      _
    $region75: #{vae_forward.1} parent=1 // pred_check_branch
      %171 = sbr.rel (0) target = $region77
    $region76: #{vae_forward.1} parent=1 // pred_region
      %172 = dma.done [#allocation12], 8192
    $region77: #{vae_forward.1} parent=1 // pred_fallthru
      _
    // Predicated region
    $region78: #{vae_forward.1} parent=1 // pred_check
      _
    $region79: #{vae_forward.1} parent=1 // pred_check_branch
      %174 = sbr.rel (0) target = $region81
    $region80: #{vae_forward.1} parent=1 // pred_region
      %175 = dma.done [#allocation12], 8192
    $region81: #{vae_forward.1} parent=1 // pred_fallthru
      _
    // Predicated region
    $region82: #{vae_forward.1} parent=1 // pred_check
      _
    $region83: #{vae_forward.1} parent=1 // pred_check_branch
      %177 = sbr.rel (0) target = $region85
    $region84: #{vae_forward.1} parent=1 // pred_region
      %178 = dma.done [#allocation15], 16384
    $region85: #{vae_forward.1} parent=1 // pred_fallthru
      _
    // Predicated region
    $region86: #{vae_forward.1} parent=1 // pred_check
      _
    $region87: #{vae_forward.1} parent=1 // pred_check_branch
      %180 = sbr.rel (0) target = $region89
    $region88: #{vae_forward.1} parent=1 // pred_region
      %181 = dma.done [#allocation15], 16384
    $region89: #{vae_forward.1} parent=1 // pred_fallthru
      _
    // Predicated region
    $region90: #{vae_forward.1} parent=1 // pred_check
      _
    $region91: #{vae_forward.1} parent=1 // pred_check_branch
      %183 = sbr.rel (0) target = $region93
    $region92: #{vae_forward.1} parent=1 // pred_region
      %184 = dma.done [#allocation18], 8192
    $region93: #{vae_forward.1} parent=1 // pred_fallthru
      _
    %v185 = vld [vmem:[%s0] sm:$0xff]
    %v186 = vld [vmem:[#allocation5] sm:$0xff]
    %v187 = vld [vmem:[#allocation5 + $0x8] sm:$0xff]
    %v188 = vld [vmem:[#allocation5 + $0x10] sm:$0xff]
    %v189 = vld [vmem:[#allocation5 + $0x18] sm:$0xff]
    %v190 = vld [vmem:[#allocation5 + $0x20] sm:$0xff]
    %v191 = vld [vmem:[#allocation5 + $0x28] sm:$0xff]
    %v192 = vld [vmem:[#allocation5 + $0x30] sm:$0xff]
    %v193 = vld [vmem:[#allocation5 + $0x38] sm:$0xff]
    %v194 = vld [vmem:[#allocation5 + $0x40] sm:$0xff]
    %v195 = vld [vmem:[#allocation5 + $0x48] sm:$0xff]
    %v196 = vld [vmem:[#allocation5 + $0x50] sm:$0xff]
    %v197 = vld [vmem:[#allocation5 + $0x58] sm:$0xff]
    %v198 = vld [vmem:[#allocation5 + $0x60] sm:$0xff]
    %v199 = vld [vmem:[#allocation5 + $0x68] sm:$0xff]
    %v200 = vld [vmem:[#allocation5 + $0x70] sm:$0xff]
    %v201 = vld [vmem:[#allocation5 + $0x78] sm:$0xff]
    %v202 = vld [vmem:[#allocation5 + $0x80] sm:$0xff]
    %v203 = vld [vmem:[#allocation5 + $0x88] sm:$0xff]
    %v204 = vld [vmem:[#allocation5 + $0x90] sm:$0xff]
    %v205 = vld [vmem:[#allocation5 + $0x98] sm:$0xff]
    %v206 = vld [vmem:[#allocation5 + $0xa0] sm:$0xff]
    %v207 = vld [vmem:[#allocation5 + $0xa8] sm:$0xff]
    %v208 = vld [vmem:[#allocation5 + $0xb0] sm:$0xff]
    %v209 = vld [vmem:[#allocation5 + $0xb8] sm:$0xff]
    %v210 = vld [vmem:[#allocation5 + $0xc0] sm:$0xff]
    %v211 = vld [vmem:[#allocation5 + $0xc8] sm:$0xff]
    %v212 = vld [vmem:[#allocation5 + $0xd0] sm:$0xff]
    %v213 = vld [vmem:[#allocation5 + $0xd8] sm:$0xff]
    %v214 = vld [vmem:[#allocation5 + $0xe0] sm:$0xff]
    %v215 = vld [vmem:[#allocation5 + $0xe8] sm:$0xff]
    %v216 = vld [vmem:[#allocation5 + $0xf0] sm:$0xff]
    %v217 = vld [vmem:[#allocation5 + $0xf8] sm:$0xff]
    %v218 = vld [vmem:[#allocation5 + $0x100] sm:$0xff]
    %v219 = vld [vmem:[#allocation5 + $0x108] sm:$0xff]
    %v220 = vld [vmem:[#allocation5 + $0x110] sm:$0xff]
    %v221 = vld [vmem:[#allocation5 + $0x118] sm:$0xff]
    %v222 = vld [vmem:[#allocation5 + $0x120] sm:$0xff]
    %v223 = vld [vmem:[#allocation5 + $0x128] sm:$0xff]
    %v224 = vld [vmem:[#allocation5 + $0x130] sm:$0xff]
    %v225 = vld [vmem:[#allocation5 + $0x138] sm:$0xff]
    %v226 = vld [vmem:[#allocation5 + $0x140] sm:$0xff]
    %v227 = vld [vmem:[#allocation5 + $0x148] sm:$0xff]
    %v228 = vld [vmem:[#allocation5 + $0x150] sm:$0xff]
    %v229 = vld [vmem:[#allocation5 + $0x158] sm:$0xff]
    %v230 = vld [vmem:[#allocation5 + $0x160] sm:$0xff]
    %v231 = vld [vmem:[#allocation5 + $0x168] sm:$0xff]
    %v232 = vld [vmem:[#allocation5 + $0x170] sm:$0xff]
    %v233 = vld [vmem:[#allocation5 + $0x178] sm:$0xff]
    %v234 = vld [vmem:[#allocation5 + $0x180] sm:$0xff]
    %v235 = vld [vmem:[#allocation5 + $0x188] sm:$0xff]
    %v236 = vld [vmem:[#allocation5 + $0x190] sm:$0xff]
    %v237 = vld [vmem:[#allocation5 + $0x198] sm:$0xff]
    %v238 = vld [vmem:[#allocation5 + $0x1a0] sm:$0xff]
    %v239 = vld [vmem:[#allocation5 + $0x1a8] sm:$0xff]
    %v240 = vld [vmem:[#allocation5 + $0x1b0] sm:$0xff]
    %v241 = vld [vmem:[#allocation5 + $0x1b8] sm:$0xff]
    %v242 = vld [vmem:[#allocation5 + $0x1c0] sm:$0xff]
    %v243 = vld [vmem:[#allocation5 + $0x1c8] sm:$0xff]
    %v244 = vld [vmem:[#allocation5 + $0x1d0] sm:$0xff]
    %v245 = vld [vmem:[#allocation5 + $0x1d8] sm:$0xff]
    %v246 = vld [vmem:[#allocation5 + $0x1e0] sm:$0xff]
    %v247 = vld [vmem:[#allocation5 + $0x1e8] sm:$0xff]
    %v248 = vld [vmem:[#allocation5 + $0x1f0] sm:$0xff]
    %v249 = vld [vmem:[#allocation5 + $0x1f8] sm:$0xff]
    %v250 = vld [vmem:[#allocation2] ss:$8 sm:$0xf]
    %v252 = vlaneseq
    %v253 = vshrl.u32 %v252, 7
    %v254 = vsub.s32 0, %v253
    %v255 = vrot.slane %v250, %v254
    %v256 = vlaneseq
    %v257 = vshrl.u32 %v256, 7
    %v258 = vsub.s32 1, %v257
    %v259 = vrot.slane %v250, %v258
    %v260 = vlaneseq
    %v261 = vshrl.u32 %v260, 7
    %v262 = vsub.s32 2, %v261
    %v263 = vrot.slane %v250, %v262
    %v264 = vlaneseq
    %v265 = vshrl.u32 %v264, 7
    %v266 = vsub.s32 3, %v265
    %v267 = vrot.slane %v250, %v266
    %v273 = vunpack.c.l.b16 %v185
    %v274 = vunpack.c.h.b16 %v185
    %v275 = vpack.c.b16 %v273, %v273
    %v276 = vpack.c.b16 %v274, %v274
    %v343 = vunpack.c.l.b16 %v186
    %v344 = vunpack.c.h.b16 %v186
    %v345 = vunpack.c.l.b16 %v187
    %v346 = vunpack.c.h.b16 %v187
    %v347 = vunpack.c.l.b16 %v188
    %v348 = vunpack.c.h.b16 %v188
    %v349 = vunpack.c.l.b16 %v189
    %v350 = vunpack.c.h.b16 %v189
    %v351 = vunpack.c.l.b16 %v190
    %v352 = vunpack.c.h.b16 %v190
    %v353 = vunpack.c.l.b16 %v191
    %v354 = vunpack.c.h.b16 %v191
    %v355 = vunpack.c.l.b16 %v192
    %v356 = vunpack.c.h.b16 %v192
    %v357 = vunpack.c.l.b16 %v193
    %v358 = vunpack.c.h.b16 %v193
    %v359 = vunpack.c.l.b16 %v194
    %v360 = vunpack.c.h.b16 %v194
    %v361 = vunpack.c.l.b16 %v195
    %v362 = vunpack.c.h.b16 %v195
    %v363 = vunpack.c.l.b16 %v196
    %v364 = vunpack.c.h.b16 %v196
    %v365 = vunpack.c.l.b16 %v197
    %v366 = vunpack.c.h.b16 %v197
    %v367 = vunpack.c.l.b16 %v198
    %v368 = vunpack.c.h.b16 %v198
    %v369 = vunpack.c.l.b16 %v199
    %v370 = vunpack.c.h.b16 %v199
    %v371 = vunpack.c.l.b16 %v200
    %v372 = vunpack.c.h.b16 %v200
    %v373 = vunpack.c.l.b16 %v201
    %v374 = vunpack.c.h.b16 %v201
    %v375 = vunpack.c.l.b16 %v202
    %v376 = vunpack.c.h.b16 %v202
    %v377 = vunpack.c.l.b16 %v203
    %v378 = vunpack.c.h.b16 %v203
    %v379 = vunpack.c.l.b16 %v204
    %v380 = vunpack.c.h.b16 %v204
    %v381 = vunpack.c.l.b16 %v205
    %v382 = vunpack.c.h.b16 %v205
    %v383 = vunpack.c.l.b16 %v206
    %v384 = vunpack.c.h.b16 %v206
    %v385 = vunpack.c.l.b16 %v207
    %v386 = vunpack.c.h.b16 %v207
    %v387 = vunpack.c.l.b16 %v208
    %v388 = vunpack.c.h.b16 %v208
    %v389 = vunpack.c.l.b16 %v209
    %v390 = vunpack.c.h.b16 %v209
    %v391 = vunpack.c.l.b16 %v210
    %v392 = vunpack.c.h.b16 %v210
    %v393 = vunpack.c.l.b16 %v211
    %v394 = vunpack.c.h.b16 %v211
    %v395 = vunpack.c.l.b16 %v212
    %v396 = vunpack.c.h.b16 %v212
    %v397 = vunpack.c.l.b16 %v213
    %v398 = vunpack.c.h.b16 %v213
    %v399 = vunpack.c.l.b16 %v214
    %v400 = vunpack.c.h.b16 %v214
    %v401 = vunpack.c.l.b16 %v215
    %v402 = vunpack.c.h.b16 %v215
    %v403 = vunpack.c.l.b16 %v216
    %v404 = vunpack.c.h.b16 %v216
    %v405 = vunpack.c.l.b16 %v217
    %v406 = vunpack.c.h.b16 %v217
    %v407 = vunpack.c.l.b16 %v218
    %v408 = vunpack.c.h.b16 %v218
    %v409 = vunpack.c.l.b16 %v219
    %v410 = vunpack.c.h.b16 %v219
    %v411 = vunpack.c.l.b16 %v220
    %v412 = vunpack.c.h.b16 %v220
    %v413 = vunpack.c.l.b16 %v221
    %v414 = vunpack.c.h.b16 %v221
    %v415 = vunpack.c.l.b16 %v222
    %v416 = vunpack.c.h.b16 %v222
    %v417 = vunpack.c.l.b16 %v223
    %v418 = vunpack.c.h.b16 %v223
    %v419 = vunpack.c.l.b16 %v224
    %v420 = vunpack.c.h.b16 %v224
    %v421 = vunpack.c.l.b16 %v225
    %v422 = vunpack.c.h.b16 %v225
    %v423 = vunpack.c.l.b16 %v226
    %v424 = vunpack.c.h.b16 %v226
    %v425 = vunpack.c.l.b16 %v227
    %v426 = vunpack.c.h.b16 %v227
    %v427 = vunpack.c.l.b16 %v228
    %v428 = vunpack.c.h.b16 %v228
    %v429 = vunpack.c.l.b16 %v229
    %v430 = vunpack.c.h.b16 %v229
    %v431 = vunpack.c.l.b16 %v230
    %v432 = vunpack.c.h.b16 %v230
    %v433 = vunpack.c.l.b16 %v231
    %v434 = vunpack.c.h.b16 %v231
    %v435 = vunpack.c.l.b16 %v232
    %v436 = vunpack.c.h.b16 %v232
    %v437 = vunpack.c.l.b16 %v233
    %v438 = vunpack.c.h.b16 %v233
    %v439 = vunpack.c.l.b16 %v234
    %v440 = vunpack.c.h.b16 %v234
    %v441 = vunpack.c.l.b16 %v235
    %v442 = vunpack.c.h.b16 %v235
    %v443 = vunpack.c.l.b16 %v236
    %v444 = vunpack.c.h.b16 %v236
    %v445 = vunpack.c.l.b16 %v237
    %v446 = vunpack.c.h.b16 %v237
    %v447 = vunpack.c.l.b16 %v238
    %v448 = vunpack.c.h.b16 %v238
    %v449 = vunpack.c.l.b16 %v239
    %v450 = vunpack.c.h.b16 %v239
    %v451 = vunpack.c.l.b16 %v240
    %v452 = vunpack.c.h.b16 %v240
    %v453 = vunpack.c.l.b16 %v241
    %v454 = vunpack.c.h.b16 %v241
    %v455 = vunpack.c.l.b16 %v242
    %v456 = vunpack.c.h.b16 %v242
    %v457 = vunpack.c.l.b16 %v243
    %v458 = vunpack.c.h.b16 %v243
    %v459 = vunpack.c.l.b16 %v244
    %v460 = vunpack.c.h.b16 %v244
    %v461 = vunpack.c.l.b16 %v245
    %v462 = vunpack.c.h.b16 %v245
    %v463 = vunpack.c.l.b16 %v246
    %v464 = vunpack.c.h.b16 %v246
    %v465 = vunpack.c.l.b16 %v247
    %v466 = vunpack.c.h.b16 %v247
    %v467 = vunpack.c.l.b16 %v248
    %v468 = vunpack.c.h.b16 %v248
    %v469 = vunpack.c.l.b16 %v249
    %v470 = vunpack.c.h.b16 %v249
    %v471 = vpack.c.b16 %v347, %v343
    %v472 = vpack.c.b16 %v348, %v344
    %v473 = vpack.c.b16 %v349, %v345
    %v474 = vpack.c.b16 %v350, %v346
    %v475 = vpack.c.b16 %v355, %v351
    %v476 = vpack.c.b16 %v356, %v352
    %v477 = vpack.c.b16 %v357, %v353
    %v478 = vpack.c.b16 %v358, %v354
    %v479 = vpack.c.b16 %v363, %v359
    %v480 = vpack.c.b16 %v364, %v360
    %v481 = vpack.c.b16 %v365, %v361
    %v482 = vpack.c.b16 %v366, %v362
    %v483 = vpack.c.b16 %v371, %v367
    %v484 = vpack.c.b16 %v372, %v368
    %v485 = vpack.c.b16 %v373, %v369
    %v486 = vpack.c.b16 %v374, %v370
    %v487 = vpack.c.b16 %v379, %v375
    %v488 = vpack.c.b16 %v380, %v376
    %v489 = vpack.c.b16 %v381, %v377
    %v490 = vpack.c.b16 %v382, %v378
    %v491 = vpack.c.b16 %v387, %v383
    %v492 = vpack.c.b16 %v388, %v384
    %v493 = vpack.c.b16 %v389, %v385
    %v494 = vpack.c.b16 %v390, %v386
    %v495 = vpack.c.b16 %v395, %v391
    %v496 = vpack.c.b16 %v396, %v392
    %v497 = vpack.c.b16 %v397, %v393
    %v498 = vpack.c.b16 %v398, %v394
    %v499 = vpack.c.b16 %v403, %v399
    %v500 = vpack.c.b16 %v404, %v400
    %v501 = vpack.c.b16 %v405, %v401
    %v502 = vpack.c.b16 %v406, %v402
    %v503 = vpack.c.b16 %v411, %v407
    %v504 = vpack.c.b16 %v412, %v408
    %v505 = vpack.c.b16 %v413, %v409
    %v506 = vpack.c.b16 %v414, %v410
    %v507 = vpack.c.b16 %v419, %v415
    %v508 = vpack.c.b16 %v420, %v416
    %v509 = vpack.c.b16 %v421, %v417
    %v510 = vpack.c.b16 %v422, %v418
    %v511 = vpack.c.b16 %v427, %v423
    %v512 = vpack.c.b16 %v428, %v424
    %v513 = vpack.c.b16 %v429, %v425
    %v514 = vpack.c.b16 %v430, %v426
    %v515 = vpack.c.b16 %v435, %v431
    %v516 = vpack.c.b16 %v436, %v432
    %v517 = vpack.c.b16 %v437, %v433
    %v518 = vpack.c.b16 %v438, %v434
    %v519 = vpack.c.b16 %v443, %v439
    %v520 = vpack.c.b16 %v444, %v440
    %v521 = vpack.c.b16 %v445, %v441
    %v522 = vpack.c.b16 %v446, %v442
    %v523 = vpack.c.b16 %v451, %v447
    %v524 = vpack.c.b16 %v452, %v448
    %v525 = vpack.c.b16 %v453, %v449
    %v526 = vpack.c.b16 %v454, %v450
    %v527 = vpack.c.b16 %v459, %v455
    %v528 = vpack.c.b16 %v460, %v456
    %v529 = vpack.c.b16 %v461, %v457
    %v530 = vpack.c.b16 %v462, %v458
    %v531 = vpack.c.b16 %v467, %v463
    %v532 = vpack.c.b16 %v468, %v464
    %v533 = vpack.c.b16 %v469, %v465
    %v534 = vpack.c.b16 %v470, %v466
    %599 = vmatprep.subr.bf16.mxu0 %v500
    %600 = vmatpush1.bf16.msra.mxu0 %v499
    %601 = vmatprep.subr.bf16.mxu0 %v496
    %602 = vmatpush1.bf16.msra.mxu0 %v495
    %603 = vmatprep.subr.bf16.mxu0 %v492
    %604 = vmatpush1.bf16.msra.mxu0 %v491
    %605 = vmatprep.subr.bf16.mxu0 %v488
    %606 = vmatpush1.bf16.msra.mxu0 %v487
    %607 = vmatprep.subr.bf16.mxu0 %v484
    %608 = vmatpush1.bf16.msra.mxu0 %v483
    %609 = vmatprep.subr.bf16.mxu0 %v480
    %610 = vmatpush1.bf16.msra.mxu0 %v479
    %611 = vmatprep.subr.bf16.mxu0 %v476
    %612 = vmatpush1.bf16.msra.mxu0 %v475
    %613 = vmatprep.subr.bf16.mxu0 %v472
    %614 = vmatpush1.bf16.msra.mxu0 %v471
    %615 = vmatprep.subr.bf16.mxu0 %v532
    %616 = vmatpush2.bf16.msra.mxu0 %v531
    %617 = vmatprep.subr.bf16.mxu0 %v528
    %618 = vmatpush2.bf16.msra.mxu0 %v527
    %619 = vmatprep.subr.bf16.mxu0 %v524
    %620 = vmatpush2.bf16.msra.mxu0 %v523
    %621 = vmatprep.subr.bf16.mxu0 %v520
    %622 = vmatpush2.bf16.msra.mxu0 %v519
    %623 = vmatprep.subr.bf16.mxu0 %v516
    %624 = vmatpush2.bf16.msra.mxu0 %v515
    %625 = vmatprep.subr.bf16.mxu0 %v512
    %626 = vmatpush2.bf16.msra.mxu0 %v511
    %627 = vmatprep.subr.bf16.mxu0 %v508
    %628 = vmatpush2.bf16.msra.mxu0 %v507
    %629 = vmatprep.subr.bf16.mxu0 %v504
    %630 = vmatpush2.bf16.msra.mxu0 %v503
    %631 = vmatprep.mubr.bf16.mxu0 %v276
    %632 = vmatmul.mubr.bf16.gmra.mxu0 %v275
    %v633 = vpop.f32.mrf.mxu0
    %v634 = vadd.f32 %v255, %v633
    %v635 = vpop.f32.mrf.mxu0
    %v636 = vadd.f32 %v259, %v635
    %v637 = vpop.f32.mrf.mxu0
    %v638 = vpop.f32.mrf.mxu0
    %639 = vdwg.mxu0
    %640 = vmatprep.subr.bf16.mxu0 %v502
    %641 = vmatpush1.bf16.msra.mxu0 %v501
    %642 = vmatprep.subr.bf16.mxu0 %v498
    %643 = vmatpush1.bf16.msra.mxu0 %v497
    %644 = vmatprep.subr.bf16.mxu0 %v494
    %645 = vmatpush1.bf16.msra.mxu0 %v493
    %646 = vmatprep.subr.bf16.mxu0 %v490
    %647 = vmatpush1.bf16.msra.mxu0 %v489
    %648 = vmatprep.subr.bf16.mxu0 %v486
    %649 = vmatpush1.bf16.msra.mxu0 %v485
    %650 = vmatprep.subr.bf16.mxu0 %v482
    %651 = vmatpush1.bf16.msra.mxu0 %v481
    %652 = vmatprep.subr.bf16.mxu0 %v478
    %653 = vmatpush1.bf16.msra.mxu0 %v477
    %654 = vmatprep.subr.bf16.mxu0 %v474
    %655 = vmatpush1.bf16.msra.mxu0 %v473
    %656 = vmatprep.subr.bf16.mxu0 %v534
    %657 = vmatpush2.bf16.msra.mxu0 %v533
    %658 = vmatprep.subr.bf16.mxu0 %v530
    %659 = vmatpush2.bf16.msra.mxu0 %v529
    %660 = vmatprep.subr.bf16.mxu0 %v526
    %661 = vmatpush2.bf16.msra.mxu0 %v525
    %662 = vmatprep.subr.bf16.mxu0 %v522
    %663 = vmatpush2.bf16.msra.mxu0 %v521
    %664 = vmatprep.subr.bf16.mxu0 %v518
    %665 = vmatpush2.bf16.msra.mxu0 %v517
    %666 = vmatprep.subr.bf16.mxu0 %v514
    %667 = vmatpush2.bf16.msra.mxu0 %v513
    %668 = vmatprep.subr.bf16.mxu0 %v510
    %669 = vmatpush2.bf16.msra.mxu0 %v509
    %670 = vmatprep.subr.bf16.mxu0 %v506
    %671 = vmatpush2.bf16.msra.mxu0 %v505
    %672 = vmatprep.mubr.bf16.mxu0 %v276
    %673 = vmatmul.mubr.bf16.gmra.mxu0 %v275
    %v674 = vpop.f32.mrf.mxu0
    %v675 = vadd.f32 %v263, %v674
    %v676 = vpop.f32.mrf.mxu0
    %v677 = vadd.f32 %v267, %v676
    %v678 = vpop.f32.mrf.mxu0
    %v679 = vpop.f32.mrf.mxu0
    %680 = vdwg.mxu0
    %v681 = vmax.f32 %v634, 0.0
    %v682 = vmax.f32 %v636, 0.0
    %v683 = vmax.f32 %v675, 0.0
    %v684 = vmax.f32 %v677, 0.0
    %v685 = vpack.c.bf16 %v681, %v681
    %v686 = vpack.c.bf16 %v682, %v682
    %v687 = vpack.c.bf16 %v683, %v683
    %v688 = vpack.c.bf16 %v684, %v684
    %v689 = vld [vmem:[#allocation7] sm:$0xff]
    %v690 = vld [vmem:[#allocation7 + $0x8] sm:$0xff]
    %v691 = vld [vmem:[#allocation7 + $0x10] sm:$0xff]
    %v692 = vld [vmem:[#allocation7 + $0x18] sm:$0xff]
    %v693 = vld [vmem:[#allocation7 + $0x20] sm:$0xff]
    %v694 = vld [vmem:[#allocation7 + $0x28] sm:$0xff]
    %v695 = vld [vmem:[#allocation7 + $0x30] sm:$0xff]
    %v696 = vld [vmem:[#allocation7 + $0x38] sm:$0xff]
    %v697 = vld [vmem:[#allocation7 + $0x40] sm:$0xff]
    %v698 = vld [vmem:[#allocation7 + $0x48] sm:$0xff]
    %v699 = vld [vmem:[#allocation7 + $0x50] sm:$0xff]
    %v700 = vld [vmem:[#allocation7 + $0x58] sm:$0xff]
    %v701 = vld [vmem:[#allocation7 + $0x60] sm:$0xff]
    %v702 = vld [vmem:[#allocation7 + $0x68] sm:$0xff]
    %v703 = vld [vmem:[#allocation7 + $0x70] sm:$0xff]
    %v704 = vld [vmem:[#allocation7 + $0x78] sm:$0xff]
    %v705 = vld [vmem:[#allocation7 + $0x80] sm:$0xff]
    %v706 = vld [vmem:[#allocation7 + $0x88] sm:$0xff]
    %v707 = vld [vmem:[#allocation7 + $0x90] sm:$0xff]
    %v708 = vld [vmem:[#allocation7 + $0x98] sm:$0xff]
    %v709 = vld [vmem:[#allocation7 + $0xa0] sm:$0xff]
    %v710 = vld [vmem:[#allocation7 + $0xa8] sm:$0xff]
    %v711 = vld [vmem:[#allocation7 + $0xb0] sm:$0xff]
    %v712 = vld [vmem:[#allocation7 + $0xb8] sm:$0xff]
    %v713 = vld [vmem:[#allocation7 + $0xc0] sm:$0xff]
    %v714 = vld [vmem:[#allocation7 + $0xc8] sm:$0xff]
    %v715 = vld [vmem:[#allocation7 + $0xd0] sm:$0xff]
    %v716 = vld [vmem:[#allocation7 + $0xd8] sm:$0xff]
    %v717 = vld [vmem:[#allocation7 + $0xe0] sm:$0xff]
    %v718 = vld [vmem:[#allocation7 + $0xe8] sm:$0xff]
    %v719 = vld [vmem:[#allocation7 + $0xf0] sm:$0xff]
    %v720 = vld [vmem:[#allocation7 + $0xf8] sm:$0xff]
    %v721 = vld [vmem:[#allocation7 + $0x100] sm:$0xff]
    %v722 = vld [vmem:[#allocation7 + $0x108] sm:$0xff]
    %v723 = vld [vmem:[#allocation7 + $0x110] sm:$0xff]
    %v724 = vld [vmem:[#allocation7 + $0x118] sm:$0xff]
    %v725 = vld [vmem:[#allocation7 + $0x120] sm:$0xff]
    %v726 = vld [vmem:[#allocation7 + $0x128] sm:$0xff]
    %v727 = vld [vmem:[#allocation7 + $0x130] sm:$0xff]
    %v728 = vld [vmem:[#allocation7 + $0x138] sm:$0xff]
    %v729 = vld [vmem:[#allocation7 + $0x140] sm:$0xff]
    %v730 = vld [vmem:[#allocation7 + $0x148] sm:$0xff]
    %v731 = vld [vmem:[#allocation7 + $0x150] sm:$0xff]
    %v732 = vld [vmem:[#allocation7 + $0x158] sm:$0xff]
    %v733 = vld [vmem:[#allocation7 + $0x160] sm:$0xff]
    %v734 = vld [vmem:[#allocation7 + $0x168] sm:$0xff]
    %v735 = vld [vmem:[#allocation7 + $0x170] sm:$0xff]
    %v736 = vld [vmem:[#allocation7 + $0x178] sm:$0xff]
    %v737 = vld [vmem:[#allocation7 + $0x180] sm:$0xff]
    %v738 = vld [vmem:[#allocation7 + $0x188] sm:$0xff]
    %v739 = vld [vmem:[#allocation7 + $0x190] sm:$0xff]
    %v740 = vld [vmem:[#allocation7 + $0x198] sm:$0xff]
    %v741 = vld [vmem:[#allocation7 + $0x1a0] sm:$0xff]
    %v742 = vld [vmem:[#allocation7 + $0x1a8] sm:$0xff]
    %v743 = vld [vmem:[#allocation7 + $0x1b0] sm:$0xff]
    %v744 = vld [vmem:[#allocation7 + $0x1b8] sm:$0xff]
    %v745 = vld [vmem:[#allocation7 + $0x1c0] sm:$0xff]
    %v746 = vld [vmem:[#allocation7 + $0x1c8] sm:$0xff]
    %v747 = vld [vmem:[#allocation7 + $0x1d0] sm:$0xff]
    %v748 = vld [vmem:[#allocation7 + $0x1d8] sm:$0xff]
    %v749 = vld [vmem:[#allocation7 + $0x1e0] sm:$0xff]
    %v750 = vld [vmem:[#allocation7 + $0x1e8] sm:$0xff]
    %v751 = vld [vmem:[#allocation7 + $0x1f0] sm:$0xff]
    %v752 = vld [vmem:[#allocation7 + $0x1f8] sm:$0xff]
    %v753 = vld [vmem:[#allocation7 + $0x200] sm:$0xff]
    %v754 = vld [vmem:[#allocation7 + $0x208] sm:$0xff]
    %v755 = vld [vmem:[#allocation7 + $0x210] sm:$0xff]
    %v756 = vld [vmem:[#allocation7 + $0x218] sm:$0xff]
    %v757 = vld [vmem:[#allocation7 + $0x220] sm:$0xff]
    %v758 = vld [vmem:[#allocation7 + $0x228] sm:$0xff]
    %v759 = vld [vmem:[#allocation7 + $0x230] sm:$0xff]
    %v760 = vld [vmem:[#allocation7 + $0x238] sm:$0xff]
    %v761 = vld [vmem:[#allocation7 + $0x240] sm:$0xff]
    %v762 = vld [vmem:[#allocation7 + $0x248] sm:$0xff]
    %v763 = vld [vmem:[#allocation7 + $0x250] sm:$0xff]
    %v764 = vld [vmem:[#allocation7 + $0x258] sm:$0xff]
    %v765 = vld [vmem:[#allocation7 + $0x260] sm:$0xff]
    %v766 = vld [vmem:[#allocation7 + $0x268] sm:$0xff]
    %v767 = vld [vmem:[#allocation7 + $0x270] sm:$0xff]
    %v768 = vld [vmem:[#allocation7 + $0x278] sm:$0xff]
    %v769 = vld [vmem:[#allocation7 + $0x280] sm:$0xff]
    %v770 = vld [vmem:[#allocation7 + $0x288] sm:$0xff]
    %v771 = vld [vmem:[#allocation7 + $0x290] sm:$0xff]
    %v772 = vld [vmem:[#allocation7 + $0x298] sm:$0xff]
    %v773 = vld [vmem:[#allocation7 + $0x2a0] sm:$0xff]
    %v774 = vld [vmem:[#allocation7 + $0x2a8] sm:$0xff]
    %v775 = vld [vmem:[#allocation7 + $0x2b0] sm:$0xff]
    %v776 = vld [vmem:[#allocation7 + $0x2b8] sm:$0xff]
    %v777 = vld [vmem:[#allocation7 + $0x2c0] sm:$0xff]
    %v778 = vld [vmem:[#allocation7 + $0x2c8] sm:$0xff]
    %v779 = vld [vmem:[#allocation7 + $0x2d0] sm:$0xff]
    %v780 = vld [vmem:[#allocation7 + $0x2d8] sm:$0xff]
    %v781 = vld [vmem:[#allocation7 + $0x2e0] sm:$0xff]
    %v782 = vld [vmem:[#allocation7 + $0x2e8] sm:$0xff]
    %v783 = vld [vmem:[#allocation7 + $0x2f0] sm:$0xff]
    %v784 = vld [vmem:[#allocation7 + $0x2f8] sm:$0xff]
    %v785 = vld [vmem:[#allocation7 + $0x300] sm:$0xff]
    %v786 = vld [vmem:[#allocation7 + $0x308] sm:$0xff]
    %v787 = vld [vmem:[#allocation7 + $0x310] sm:$0xff]
    %v788 = vld [vmem:[#allocation7 + $0x318] sm:$0xff]
    %v789 = vld [vmem:[#allocation7 + $0x320] sm:$0xff]
    %v790 = vld [vmem:[#allocation7 + $0x328] sm:$0xff]
    %v791 = vld [vmem:[#allocation7 + $0x330] sm:$0xff]
    %v792 = vld [vmem:[#allocation7 + $0x338] sm:$0xff]
    %v793 = vld [vmem:[#allocation7 + $0x340] sm:$0xff]
    %v794 = vld [vmem:[#allocation7 + $0x348] sm:$0xff]
    %v795 = vld [vmem:[#allocation7 + $0x350] sm:$0xff]
    %v796 = vld [vmem:[#allocation7 + $0x358] sm:$0xff]
    %v797 = vld [vmem:[#allocation7 + $0x360] sm:$0xff]
    %v798 = vld [vmem:[#allocation7 + $0x368] sm:$0xff]
    %v799 = vld [vmem:[#allocation7 + $0x370] sm:$0xff]
    %v800 = vld [vmem:[#allocation7 + $0x378] sm:$0xff]
    %v801 = vld [vmem:[#allocation7 + $0x380] sm:$0xff]
    %v802 = vld [vmem:[#allocation7 + $0x388] sm:$0xff]
    %v803 = vld [vmem:[#allocation7 + $0x390] sm:$0xff]
    %v804 = vld [vmem:[#allocation7 + $0x398] sm:$0xff]
    %v805 = vld [vmem:[#allocation7 + $0x3a0] sm:$0xff]
    %v806 = vld [vmem:[#allocation7 + $0x3a8] sm:$0xff]
    %v807 = vld [vmem:[#allocation7 + $0x3b0] sm:$0xff]
    %v808 = vld [vmem:[#allocation7 + $0x3b8] sm:$0xff]
    %v809 = vld [vmem:[#allocation7 + $0x3c0] sm:$0xff]
    %v810 = vld [vmem:[#allocation7 + $0x3c8] sm:$0xff]
    %v811 = vld [vmem:[#allocation7 + $0x3d0] sm:$0xff]
    %v812 = vld [vmem:[#allocation7 + $0x3d8] sm:$0xff]
    %v813 = vld [vmem:[#allocation7 + $0x3e0] sm:$0xff]
    %v814 = vld [vmem:[#allocation7 + $0x3e8] sm:$0xff]
    %v815 = vld [vmem:[#allocation7 + $0x3f0] sm:$0xff]
    %v816 = vld [vmem:[#allocation7 + $0x3f8] sm:$0xff]
    %s817 = scalar_lea.vmem [#allocation2], 1
    %v818 = vld [vmem:[%s817] ss:$8 sm:$0xf]
    %v820 = vlaneseq
    %v821 = vshrl.u32 %v820, 7
    %v822 = vsub.s32 0, %v821
    %v823 = vrot.slane %v818, %v822
    %v824 = vlaneseq
    %v825 = vshrl.u32 %v824, 7
    %v826 = vsub.s32 1, %v825
    %v827 = vrot.slane %v818, %v826
    %v828 = vlaneseq
    %v829 = vshrl.u32 %v828, 7
    %v830 = vsub.s32 2, %v829
    %v831 = vrot.slane %v818, %v830
    %v832 = vlaneseq
    %v833 = vshrl.u32 %v832, 7
    %v834 = vsub.s32 3, %v833
    %v835 = vrot.slane %v818, %v834
    %v968 = vunpack.c.l.b16 %v689
    %v969 = vunpack.c.h.b16 %v689
    %v970 = vunpack.c.l.b16 %v690
    %v971 = vunpack.c.h.b16 %v690
    %v972 = vunpack.c.l.b16 %v691
    %v973 = vunpack.c.h.b16 %v691
    %v974 = vunpack.c.l.b16 %v692
    %v975 = vunpack.c.h.b16 %v692
    %v976 = vunpack.c.l.b16 %v693
    %v977 = vunpack.c.h.b16 %v693
    %v978 = vunpack.c.l.b16 %v694
    %v979 = vunpack.c.h.b16 %v694
    %v980 = vunpack.c.l.b16 %v695
    %v981 = vunpack.c.h.b16 %v695
    %v982 = vunpack.c.l.b16 %v696
    %v983 = vunpack.c.h.b16 %v696
    %v984 = vunpack.c.l.b16 %v697
    %v985 = vunpack.c.h.b16 %v697
    %v986 = vunpack.c.l.b16 %v698
    %v987 = vunpack.c.h.b16 %v698
    %v988 = vunpack.c.l.b16 %v699
    %v989 = vunpack.c.h.b16 %v699
    %v990 = vunpack.c.l.b16 %v700
    %v991 = vunpack.c.h.b16 %v700
    %v992 = vunpack.c.l.b16 %v701
    %v993 = vunpack.c.h.b16 %v701
    %v994 = vunpack.c.l.b16 %v702
    %v995 = vunpack.c.h.b16 %v702
    %v996 = vunpack.c.l.b16 %v703
    %v997 = vunpack.c.h.b16 %v703
    %v998 = vunpack.c.l.b16 %v704
    %v999 = vunpack.c.h.b16 %v704
    %v1000 = vunpack.c.l.b16 %v705
    %v1001 = vunpack.c.h.b16 %v705
    %v1002 = vunpack.c.l.b16 %v706
    %v1003 = vunpack.c.h.b16 %v706
    %v1004 = vunpack.c.l.b16 %v707
    %v1005 = vunpack.c.h.b16 %v707
    %v1006 = vunpack.c.l.b16 %v708
    %v1007 = vunpack.c.h.b16 %v708
    %v1008 = vunpack.c.l.b16 %v709
    %v1009 = vunpack.c.h.b16 %v709
    %v1010 = vunpack.c.l.b16 %v710
    %v1011 = vunpack.c.h.b16 %v710
    %v1012 = vunpack.c.l.b16 %v711
    %v1013 = vunpack.c.h.b16 %v711
    %v1014 = vunpack.c.l.b16 %v712
    %v1015 = vunpack.c.h.b16 %v712
    %v1016 = vunpack.c.l.b16 %v713
    %v1017 = vunpack.c.h.b16 %v713
    %v1018 = vunpack.c.l.b16 %v714
    %v1019 = vunpack.c.h.b16 %v714
    %v1020 = vunpack.c.l.b16 %v715
    %v1021 = vunpack.c.h.b16 %v715
    %v1022 = vunpack.c.l.b16 %v716
    %v1023 = vunpack.c.h.b16 %v716
    %v1024 = vunpack.c.l.b16 %v717
    %v1025 = vunpack.c.h.b16 %v717
    %v1026 = vunpack.c.l.b16 %v718
    %v1027 = vunpack.c.h.b16 %v718
    %v1028 = vunpack.c.l.b16 %v719
    %v1029 = vunpack.c.h.b16 %v719
    %v1030 = vunpack.c.l.b16 %v720
    %v1031 = vunpack.c.h.b16 %v720
    %v1032 = vunpack.c.l.b16 %v721
    %v1033 = vunpack.c.h.b16 %v721
    %v1034 = vunpack.c.l.b16 %v722
    %v1035 = vunpack.c.h.b16 %v722
    %v1036 = vunpack.c.l.b16 %v723
    %v1037 = vunpack.c.h.b16 %v723
    %v1038 = vunpack.c.l.b16 %v724
    %v1039 = vunpack.c.h.b16 %v724
    %v1040 = vunpack.c.l.b16 %v725
    %v1041 = vunpack.c.h.b16 %v725
    %v1042 = vunpack.c.l.b16 %v726
    %v1043 = vunpack.c.h.b16 %v726
    %v1044 = vunpack.c.l.b16 %v727
    %v1045 = vunpack.c.h.b16 %v727
    %v1046 = vunpack.c.l.b16 %v728
    %v1047 = vunpack.c.h.b16 %v728
    %v1048 = vunpack.c.l.b16 %v729
    %v1049 = vunpack.c.h.b16 %v729
    %v1050 = vunpack.c.l.b16 %v730
    %v1051 = vunpack.c.h.b16 %v730
    %v1052 = vunpack.c.l.b16 %v731
    %v1053 = vunpack.c.h.b16 %v731
    %v1054 = vunpack.c.l.b16 %v732
    %v1055 = vunpack.c.h.b16 %v732
    %v1056 = vunpack.c.l.b16 %v733
    %v1057 = vunpack.c.h.b16 %v733
    %v1058 = vunpack.c.l.b16 %v734
    %v1059 = vunpack.c.h.b16 %v734
    %v1060 = vunpack.c.l.b16 %v735
    %v1061 = vunpack.c.h.b16 %v735
    %v1062 = vunpack.c.l.b16 %v736
    %v1063 = vunpack.c.h.b16 %v736
    %v1064 = vunpack.c.l.b16 %v737
    %v1065 = vunpack.c.h.b16 %v737
    %v1066 = vunpack.c.l.b16 %v738
    %v1067 = vunpack.c.h.b16 %v738
    %v1068 = vunpack.c.l.b16 %v739
    %v1069 = vunpack.c.h.b16 %v739
    %v1070 = vunpack.c.l.b16 %v740
    %v1071 = vunpack.c.h.b16 %v740
    %v1072 = vunpack.c.l.b16 %v741
    %v1073 = vunpack.c.h.b16 %v741
    %v1074 = vunpack.c.l.b16 %v742
    %v1075 = vunpack.c.h.b16 %v742
    %v1076 = vunpack.c.l.b16 %v743
    %v1077 = vunpack.c.h.b16 %v743
    %v1078 = vunpack.c.l.b16 %v744
    %v1079 = vunpack.c.h.b16 %v744
    %v1080 = vunpack.c.l.b16 %v745
    %v1081 = vunpack.c.h.b16 %v745
    %v1082 = vunpack.c.l.b16 %v746
    %v1083 = vunpack.c.h.b16 %v746
    %v1084 = vunpack.c.l.b16 %v747
    %v1085 = vunpack.c.h.b16 %v747
    %v1086 = vunpack.c.l.b16 %v748
    %v1087 = vunpack.c.h.b16 %v748
    %v1088 = vunpack.c.l.b16 %v749
    %v1089 = vunpack.c.h.b16 %v749
    %v1090 = vunpack.c.l.b16 %v750
    %v1091 = vunpack.c.h.b16 %v750
    %v1092 = vunpack.c.l.b16 %v751
    %v1093 = vunpack.c.h.b16 %v751
    %v1094 = vunpack.c.l.b16 %v752
    %v1095 = vunpack.c.h.b16 %v752
    %v1096 = vunpack.c.l.b16 %v753
    %v1097 = vunpack.c.h.b16 %v753
    %v1098 = vunpack.c.l.b16 %v754
    %v1099 = vunpack.c.h.b16 %v754
    %v1100 = vunpack.c.l.b16 %v755
    %v1101 = vunpack.c.h.b16 %v755
    %v1102 = vunpack.c.l.b16 %v756
    %v1103 = vunpack.c.h.b16 %v756
    %v1104 = vunpack.c.l.b16 %v757
    %v1105 = vunpack.c.h.b16 %v757
    %v1106 = vunpack.c.l.b16 %v758
    %v1107 = vunpack.c.h.b16 %v758
    %v1108 = vunpack.c.l.b16 %v759
    %v1109 = vunpack.c.h.b16 %v759
    %v1110 = vunpack.c.l.b16 %v760
    %v1111 = vunpack.c.h.b16 %v760
    %v1112 = vunpack.c.l.b16 %v761
    %v1113 = vunpack.c.h.b16 %v761
    %v1114 = vunpack.c.l.b16 %v762
    %v1115 = vunpack.c.h.b16 %v762
    %v1116 = vunpack.c.l.b16 %v763
    %v1117 = vunpack.c.h.b16 %v763
    %v1118 = vunpack.c.l.b16 %v764
    %v1119 = vunpack.c.h.b16 %v764
    %v1120 = vunpack.c.l.b16 %v765
    %v1121 = vunpack.c.h.b16 %v765
    %v1122 = vunpack.c.l.b16 %v766
    %v1123 = vunpack.c.h.b16 %v766
    %v1124 = vunpack.c.l.b16 %v767
    %v1125 = vunpack.c.h.b16 %v767
    %v1126 = vunpack.c.l.b16 %v768
    %v1127 = vunpack.c.h.b16 %v768
    %v1128 = vunpack.c.l.b16 %v769
    %v1129 = vunpack.c.h.b16 %v769
    %v1130 = vunpack.c.l.b16 %v770
    %v1131 = vunpack.c.h.b16 %v770
    %v1132 = vunpack.c.l.b16 %v771
    %v1133 = vunpack.c.h.b16 %v771
    %v1134 = vunpack.c.l.b16 %v772
    %v1135 = vunpack.c.h.b16 %v772
    %v1136 = vunpack.c.l.b16 %v773
    %v1137 = vunpack.c.h.b16 %v773
    %v1138 = vunpack.c.l.b16 %v774
    %v1139 = vunpack.c.h.b16 %v774
    %v1140 = vunpack.c.l.b16 %v775
    %v1141 = vunpack.c.h.b16 %v775
    %v1142 = vunpack.c.l.b16 %v776
    %v1143 = vunpack.c.h.b16 %v776
    %v1144 = vunpack.c.l.b16 %v777
    %v1145 = vunpack.c.h.b16 %v777
    %v1146 = vunpack.c.l.b16 %v778
    %v1147 = vunpack.c.h.b16 %v778
    %v1148 = vunpack.c.l.b16 %v779
    %v1149 = vunpack.c.h.b16 %v779
    %v1150 = vunpack.c.l.b16 %v780
    %v1151 = vunpack.c.h.b16 %v780
    %v1152 = vunpack.c.l.b16 %v781
    %v1153 = vunpack.c.h.b16 %v781
    %v1154 = vunpack.c.l.b16 %v782
    %v1155 = vunpack.c.h.b16 %v782
    %v1156 = vunpack.c.l.b16 %v783
    %v1157 = vunpack.c.h.b16 %v783
    %v1158 = vunpack.c.l.b16 %v784
    %v1159 = vunpack.c.h.b16 %v784
    %v1160 = vunpack.c.l.b16 %v785
    %v1161 = vunpack.c.h.b16 %v785
    %v1162 = vunpack.c.l.b16 %v786
    %v1163 = vunpack.c.h.b16 %v786
    %v1164 = vunpack.c.l.b16 %v787
    %v1165 = vunpack.c.h.b16 %v787
    %v1166 = vunpack.c.l.b16 %v788
    %v1167 = vunpack.c.h.b16 %v788
    %v1168 = vunpack.c.l.b16 %v789
    %v1169 = vunpack.c.h.b16 %v789
    %v1170 = vunpack.c.l.b16 %v790
    %v1171 = vunpack.c.h.b16 %v790
    %v1172 = vunpack.c.l.b16 %v791
    %v1173 = vunpack.c.h.b16 %v791
    %v1174 = vunpack.c.l.b16 %v792
    %v1175 = vunpack.c.h.b16 %v792
    %v1176 = vunpack.c.l.b16 %v793
    %v1177 = vunpack.c.h.b16 %v793
    %v1178 = vunpack.c.l.b16 %v794
    %v1179 = vunpack.c.h.b16 %v794
    %v1180 = vunpack.c.l.b16 %v795
    %v1181 = vunpack.c.h.b16 %v795
    %v1182 = vunpack.c.l.b16 %v796
    %v1183 = vunpack.c.h.b16 %v796
    %v1184 = vunpack.c.l.b16 %v797
    %v1185 = vunpack.c.h.b16 %v797
    %v1186 = vunpack.c.l.b16 %v798
    %v1187 = vunpack.c.h.b16 %v798
    %v1188 = vunpack.c.l.b16 %v799
    %v1189 = vunpack.c.h.b16 %v799
    %v1190 = vunpack.c.l.b16 %v800
    %v1191 = vunpack.c.h.b16 %v800
    %v1192 = vunpack.c.l.b16 %v801
    %v1193 = vunpack.c.h.b16 %v801
    %v1194 = vunpack.c.l.b16 %v802
    %v1195 = vunpack.c.h.b16 %v802
    %v1196 = vunpack.c.l.b16 %v803
    %v1197 = vunpack.c.h.b16 %v803
    %v1198 = vunpack.c.l.b16 %v804
    %v1199 = vunpack.c.h.b16 %v804
    %v1200 = vunpack.c.l.b16 %v805
    %v1201 = vunpack.c.h.b16 %v805
    %v1202 = vunpack.c.l.b16 %v806
    %v1203 = vunpack.c.h.b16 %v806
    %v1204 = vunpack.c.l.b16 %v807
    %v1205 = vunpack.c.h.b16 %v807
    %v1206 = vunpack.c.l.b16 %v808
    %v1207 = vunpack.c.h.b16 %v808
    %v1208 = vunpack.c.l.b16 %v809
    %v1209 = vunpack.c.h.b16 %v809
    %v1210 = vunpack.c.l.b16 %v810
    %v1211 = vunpack.c.h.b16 %v810
    %v1212 = vunpack.c.l.b16 %v811
    %v1213 = vunpack.c.h.b16 %v811
    %v1214 = vunpack.c.l.b16 %v812
    %v1215 = vunpack.c.h.b16 %v812
    %v1216 = vunpack.c.l.b16 %v813
    %v1217 = vunpack.c.h.b16 %v813
    %v1218 = vunpack.c.l.b16 %v814
    %v1219 = vunpack.c.h.b16 %v814
    %v1220 = vunpack.c.l.b16 %v815
    %v1221 = vunpack.c.h.b16 %v815
    %v1222 = vunpack.c.l.b16 %v816
    %v1223 = vunpack.c.h.b16 %v816
    %v1224 = vpack.c.b16 %v972, %v968
    %v1225 = vpack.c.b16 %v973, %v969
    %v1226 = vpack.c.b16 %v974, %v970
    %v1227 = vpack.c.b16 %v975, %v971
    %v1228 = vpack.c.b16 %v980, %v976
    %v1229 = vpack.c.b16 %v981, %v977
    %v1230 = vpack.c.b16 %v982, %v978
    %v1231 = vpack.c.b16 %v983, %v979
    %v1232 = vpack.c.b16 %v988, %v984
    %v1233 = vpack.c.b16 %v989, %v985
    %v1234 = vpack.c.b16 %v990, %v986
    %v1235 = vpack.c.b16 %v991, %v987
    %v1236 = vpack.c.b16 %v996, %v992
    %v1237 = vpack.c.b16 %v997, %v993
    %v1238 = vpack.c.b16 %v998, %v994
    %v1239 = vpack.c.b16 %v999, %v995
    %v1240 = vpack.c.b16 %v1004, %v1000
    %v1241 = vpack.c.b16 %v1005, %v1001
    %v1242 = vpack.c.b16 %v1006, %v1002
    %v1243 = vpack.c.b16 %v1007, %v1003
    %v1244 = vpack.c.b16 %v1012, %v1008
    %v1245 = vpack.c.b16 %v1013, %v1009
    %v1246 = vpack.c.b16 %v1014, %v1010
    %v1247 = vpack.c.b16 %v1015, %v1011
    %v1248 = vpack.c.b16 %v1020, %v1016
    %v1249 = vpack.c.b16 %v1021, %v1017
    %v1250 = vpack.c.b16 %v1022, %v1018
    %v1251 = vpack.c.b16 %v1023, %v1019
    %v1252 = vpack.c.b16 %v1028, %v1024
    %v1253 = vpack.c.b16 %v1029, %v1025
    %v1254 = vpack.c.b16 %v1030, %v1026
    %v1255 = vpack.c.b16 %v1031, %v1027
    %v1256 = vpack.c.b16 %v1036, %v1032
    %v1257 = vpack.c.b16 %v1037, %v1033
    %v1258 = vpack.c.b16 %v1038, %v1034
    %v1259 = vpack.c.b16 %v1039, %v1035
    %v1260 = vpack.c.b16 %v1044, %v1040
    %v1261 = vpack.c.b16 %v1045, %v1041
    %v1262 = vpack.c.b16 %v1046, %v1042
    %v1263 = vpack.c.b16 %v1047, %v1043
    %v1264 = vpack.c.b16 %v1052, %v1048
    %v1265 = vpack.c.b16 %v1053, %v1049
    %v1266 = vpack.c.b16 %v1054, %v1050
    %v1267 = vpack.c.b16 %v1055, %v1051
    %v1268 = vpack.c.b16 %v1060, %v1056
    %v1269 = vpack.c.b16 %v1061, %v1057
    %v1270 = vpack.c.b16 %v1062, %v1058
    %v1271 = vpack.c.b16 %v1063, %v1059
    %v1272 = vpack.c.b16 %v1068, %v1064
    %v1273 = vpack.c.b16 %v1069, %v1065
    %v1274 = vpack.c.b16 %v1070, %v1066
    %v1275 = vpack.c.b16 %v1071, %v1067
    %v1276 = vpack.c.b16 %v1076, %v1072
    %v1277 = vpack.c.b16 %v1077, %v1073
    %v1278 = vpack.c.b16 %v1078, %v1074
    %v1279 = vpack.c.b16 %v1079, %v1075
    %v1280 = vpack.c.b16 %v1084, %v1080
    %v1281 = vpack.c.b16 %v1085, %v1081
    %v1282 = vpack.c.b16 %v1086, %v1082
    %v1283 = vpack.c.b16 %v1087, %v1083
    %v1284 = vpack.c.b16 %v1092, %v1088
    %v1285 = vpack.c.b16 %v1093, %v1089
    %v1286 = vpack.c.b16 %v1094, %v1090
    %v1287 = vpack.c.b16 %v1095, %v1091
    %v1288 = vpack.c.b16 %v1100, %v1096
    %v1289 = vpack.c.b16 %v1101, %v1097
    %v1290 = vpack.c.b16 %v1102, %v1098
    %v1291 = vpack.c.b16 %v1103, %v1099
    %v1292 = vpack.c.b16 %v1108, %v1104
    %v1293 = vpack.c.b16 %v1109, %v1105
    %v1294 = vpack.c.b16 %v1110, %v1106
    %v1295 = vpack.c.b16 %v1111, %v1107
    %v1296 = vpack.c.b16 %v1116, %v1112
    %v1297 = vpack.c.b16 %v1117, %v1113
    %v1298 = vpack.c.b16 %v1118, %v1114
    %v1299 = vpack.c.b16 %v1119, %v1115
    %v1300 = vpack.c.b16 %v1124, %v1120
    %v1301 = vpack.c.b16 %v1125, %v1121
    %v1302 = vpack.c.b16 %v1126, %v1122
    %v1303 = vpack.c.b16 %v1127, %v1123
    %v1304 = vpack.c.b16 %v1132, %v1128
    %v1305 = vpack.c.b16 %v1133, %v1129
    %v1306 = vpack.c.b16 %v1134, %v1130
    %v1307 = vpack.c.b16 %v1135, %v1131
    %v1308 = vpack.c.b16 %v1140, %v1136
    %v1309 = vpack.c.b16 %v1141, %v1137
    %v1310 = vpack.c.b16 %v1142, %v1138
    %v1311 = vpack.c.b16 %v1143, %v1139
    %v1312 = vpack.c.b16 %v1148, %v1144
    %v1313 = vpack.c.b16 %v1149, %v1145
    %v1314 = vpack.c.b16 %v1150, %v1146
    %v1315 = vpack.c.b16 %v1151, %v1147
    %v1316 = vpack.c.b16 %v1156, %v1152
    %v1317 = vpack.c.b16 %v1157, %v1153
    %v1318 = vpack.c.b16 %v1158, %v1154
    %v1319 = vpack.c.b16 %v1159, %v1155
    %v1320 = vpack.c.b16 %v1164, %v1160
    %v1321 = vpack.c.b16 %v1165, %v1161
    %v1322 = vpack.c.b16 %v1166, %v1162
    %v1323 = vpack.c.b16 %v1167, %v1163
    %v1324 = vpack.c.b16 %v1172, %v1168
    %v1325 = vpack.c.b16 %v1173, %v1169
    %v1326 = vpack.c.b16 %v1174, %v1170
    %v1327 = vpack.c.b16 %v1175, %v1171
    %v1328 = vpack.c.b16 %v1180, %v1176
    %v1329 = vpack.c.b16 %v1181, %v1177
    %v1330 = vpack.c.b16 %v1182, %v1178
    %v1331 = vpack.c.b16 %v1183, %v1179
    %v1332 = vpack.c.b16 %v1188, %v1184
    %v1333 = vpack.c.b16 %v1189, %v1185
    %v1334 = vpack.c.b16 %v1190, %v1186
    %v1335 = vpack.c.b16 %v1191, %v1187
    %v1336 = vpack.c.b16 %v1196, %v1192
    %v1337 = vpack.c.b16 %v1197, %v1193
    %v1338 = vpack.c.b16 %v1198, %v1194
    %v1339 = vpack.c.b16 %v1199, %v1195
    %v1340 = vpack.c.b16 %v1204, %v1200
    %v1341 = vpack.c.b16 %v1205, %v1201
    %v1342 = vpack.c.b16 %v1206, %v1202
    %v1343 = vpack.c.b16 %v1207, %v1203
    %v1344 = vpack.c.b16 %v1212, %v1208
    %v1345 = vpack.c.b16 %v1213, %v1209
    %v1346 = vpack.c.b16 %v1214, %v1210
    %v1347 = vpack.c.b16 %v1215, %v1211
    %v1348 = vpack.c.b16 %v1220, %v1216
    %v1349 = vpack.c.b16 %v1221, %v1217
    %v1350 = vpack.c.b16 %v1222, %v1218
    %v1351 = vpack.c.b16 %v1223, %v1219
    %1480 = vmatprep.subr.bf16.mxu0 %v1253
    %1481 = vmatpush1.bf16.msra.mxu0 %v1252
    %1482 = vmatprep.subr.bf16.mxu0 %v1249
    %1483 = vmatpush1.bf16.msra.mxu0 %v1248
    %1484 = vmatprep.subr.bf16.mxu0 %v1245
    %1485 = vmatpush1.bf16.msra.mxu0 %v1244
    %1486 = vmatprep.subr.bf16.mxu0 %v1241
    %1487 = vmatpush1.bf16.msra.mxu0 %v1240
    %1488 = vmatprep.subr.bf16.mxu0 %v1237
    %1489 = vmatpush1.bf16.msra.mxu0 %v1236
    %1490 = vmatprep.subr.bf16.mxu0 %v1233
    %1491 = vmatpush1.bf16.msra.mxu0 %v1232
    %1492 = vmatprep.subr.bf16.mxu0 %v1229
    %1493 = vmatpush1.bf16.msra.mxu0 %v1228
    %1494 = vmatprep.subr.bf16.mxu0 %v1225
    %1495 = vmatpush1.bf16.msra.mxu0 %v1224
    %1496 = vmatprep.subr.bf16.mxu0 %v1285
    %1497 = vmatpush2.bf16.msra.mxu0 %v1284
    %1498 = vmatprep.subr.bf16.mxu0 %v1281
    %1499 = vmatpush2.bf16.msra.mxu0 %v1280
    %1500 = vmatprep.subr.bf16.mxu0 %v1277
    %1501 = vmatpush2.bf16.msra.mxu0 %v1276
    %1502 = vmatprep.subr.bf16.mxu0 %v1273
    %1503 = vmatpush2.bf16.msra.mxu0 %v1272
    %1504 = vmatprep.subr.bf16.mxu0 %v1269
    %1505 = vmatpush2.bf16.msra.mxu0 %v1268
    %1506 = vmatprep.subr.bf16.mxu0 %v1265
    %1507 = vmatpush2.bf16.msra.mxu0 %v1264
    %1508 = vmatprep.subr.bf16.mxu0 %v1261
    %1509 = vmatpush2.bf16.msra.mxu0 %v1260
    %1510 = vmatprep.subr.bf16.mxu0 %v1257
    %1511 = vmatpush2.bf16.msra.mxu0 %v1256
    %1512 = vmatprep.mubr.bf16.mxu0 %v686
    %1513 = vmatmul.mubr.bf16.gmra.mxu0 %v685
    %v1514 = vpop.f32.mrf.mxu0
    %v1515 = vadd.f32 %v823, %v1514
    %v1516 = vpop.f32.mrf.mxu0
    %v1517 = vadd.f32 %v827, %v1516
    %v1518 = vpop.f32.mrf.mxu0
    %v1519 = vpop.f32.mrf.mxu0
    %1520 = vdwg.mxu0
    %1521 = vmatprep.subr.bf16.mxu0 %v1317
    %1522 = vmatpush1.bf16.msra.mxu0 %v1316
    %1523 = vmatprep.subr.bf16.mxu0 %v1313
    %1524 = vmatpush1.bf16.msra.mxu0 %v1312
    %1525 = vmatprep.subr.bf16.mxu0 %v1309
    %1526 = vmatpush1.bf16.msra.mxu0 %v1308
    %1527 = vmatprep.subr.bf16.mxu0 %v1305
    %1528 = vmatpush1.bf16.msra.mxu0 %v1304
    %1529 = vmatprep.subr.bf16.mxu0 %v1301
    %1530 = vmatpush1.bf16.msra.mxu0 %v1300
    %1531 = vmatprep.subr.bf16.mxu0 %v1297
    %1532 = vmatpush1.bf16.msra.mxu0 %v1296
    %1533 = vmatprep.subr.bf16.mxu0 %v1293
    %1534 = vmatpush1.bf16.msra.mxu0 %v1292
    %1535 = vmatprep.subr.bf16.mxu0 %v1289
    %1536 = vmatpush1.bf16.msra.mxu0 %v1288
    %1537 = vmatprep.subr.bf16.mxu0 %v1349
    %1538 = vmatpush2.bf16.msra.mxu0 %v1348
    %1539 = vmatprep.subr.bf16.mxu0 %v1345
    %1540 = vmatpush2.bf16.msra.mxu0 %v1344
    %1541 = vmatprep.subr.bf16.mxu0 %v1341
    %1542 = vmatpush2.bf16.msra.mxu0 %v1340
    %1543 = vmatprep.subr.bf16.mxu0 %v1337
    %1544 = vmatpush2.bf16.msra.mxu0 %v1336
    %1545 = vmatprep.subr.bf16.mxu0 %v1333
    %1546 = vmatpush2.bf16.msra.mxu0 %v1332
    %1547 = vmatprep.subr.bf16.mxu0 %v1329
    %1548 = vmatpush2.bf16.msra.mxu0 %v1328
    %1549 = vmatprep.subr.bf16.mxu0 %v1325
    %1550 = vmatpush2.bf16.msra.mxu0 %v1324
    %1551 = vmatprep.subr.bf16.mxu0 %v1321
    %1552 = vmatpush2.bf16.msra.mxu0 %v1320
    %1553 = vmatprep.mubr.bf16.mxu0 %v688
    %1554 = vmatmul.mubr.bf16.gmra.mxu0 %v687
    %v1555 = vpop.f32.mrf.mxu0
    %v1556 = vadd.f32 %v1515, %v1555
    %v1557 = vpop.f32.mrf.mxu0
    %v1558 = vadd.f32 %v1517, %v1557
    %v1559 = vpop.f32.mrf.mxu0
    %v1560 = vpop.f32.mrf.mxu0
    %1561 = vdwg.mxu0
    %1562 = vmatprep.subr.bf16.mxu0 %v1255
    %1563 = vmatpush1.bf16.msra.mxu0 %v1254
    %1564 = vmatprep.subr.bf16.mxu0 %v1251
    %1565 = vmatpush1.bf16.msra.mxu0 %v1250
    %1566 = vmatprep.subr.bf16.mxu0 %v1247
    %1567 = vmatpush1.bf16.msra.mxu0 %v1246
    %1568 = vmatprep.subr.bf16.mxu0 %v1243
    %1569 = vmatpush1.bf16.msra.mxu0 %v1242
    %1570 = vmatprep.subr.bf16.mxu0 %v1239
    %1571 = vmatpush1.bf16.msra.mxu0 %v1238
    %1572 = vmatprep.subr.bf16.mxu0 %v1235
    %1573 = vmatpush1.bf16.msra.mxu0 %v1234
    %1574 = vmatprep.subr.bf16.mxu0 %v1231
    %1575 = vmatpush1.bf16.msra.mxu0 %v1230
    %1576 = vmatprep.subr.bf16.mxu0 %v1227
    %1577 = vmatpush1.bf16.msra.mxu0 %v1226
    %1578 = vmatprep.subr.bf16.mxu0 %v1287
    %1579 = vmatpush2.bf16.msra.mxu0 %v1286
    %1580 = vmatprep.subr.bf16.mxu0 %v1283
    %1581 = vmatpush2.bf16.msra.mxu0 %v1282
    %1582 = vmatprep.subr.bf16.mxu0 %v1279
    %1583 = vmatpush2.bf16.msra.mxu0 %v1278
    %1584 = vmatprep.subr.bf16.mxu0 %v1275
    %1585 = vmatpush2.bf16.msra.mxu0 %v1274
    %1586 = vmatprep.subr.bf16.mxu0 %v1271
    %1587 = vmatpush2.bf16.msra.mxu0 %v1270
    %1588 = vmatprep.subr.bf16.mxu0 %v1267
    %1589 = vmatpush2.bf16.msra.mxu0 %v1266
    %1590 = vmatprep.subr.bf16.mxu0 %v1263
    %1591 = vmatpush2.bf16.msra.mxu0 %v1262
    %1592 = vmatprep.subr.bf16.mxu0 %v1259
    %1593 = vmatpush2.bf16.msra.mxu0 %v1258
    %1594 = vmatprep.mubr.bf16.mxu0 %v686
    %1595 = vmatmul.mubr.bf16.gmra.mxu0 %v685
    %v1596 = vpop.f32.mrf.mxu0
    %v1597 = vadd.f32 %v831, %v1596
    %v1598 = vpop.f32.mrf.mxu0
    %v1599 = vadd.f32 %v835, %v1598
    %v1600 = vpop.f32.mrf.mxu0
    %v1601 = vpop.f32.mrf.mxu0
    %1602 = vdwg.mxu0
    %1603 = vmatprep.subr.bf16.mxu0 %v1319
    %1604 = vmatpush1.bf16.msra.mxu0 %v1318
    %1605 = vmatprep.subr.bf16.mxu0 %v1315
    %1606 = vmatpush1.bf16.msra.mxu0 %v1314
    %1607 = vmatprep.subr.bf16.mxu0 %v1311
    %1608 = vmatpush1.bf16.msra.mxu0 %v1310
    %1609 = vmatprep.subr.bf16.mxu0 %v1307
    %1610 = vmatpush1.bf16.msra.mxu0 %v1306
    %1611 = vmatprep.subr.bf16.mxu0 %v1303
    %1612 = vmatpush1.bf16.msra.mxu0 %v1302
    %1613 = vmatprep.subr.bf16.mxu0 %v1299
    %1614 = vmatpush1.bf16.msra.mxu0 %v1298
    %1615 = vmatprep.subr.bf16.mxu0 %v1295
    %1616 = vmatpush1.bf16.msra.mxu0 %v1294
    %1617 = vmatprep.subr.bf16.mxu0 %v1291
    %1618 = vmatpush1.bf16.msra.mxu0 %v1290
    %1619 = vmatprep.subr.bf16.mxu0 %v1351
    %1620 = vmatpush2.bf16.msra.mxu0 %v1350
    %1621 = vmatprep.subr.bf16.mxu0 %v1347
    %1622 = vmatpush2.bf16.msra.mxu0 %v1346
    %1623 = vmatprep.subr.bf16.mxu0 %v1343
    %1624 = vmatpush2.bf16.msra.mxu0 %v1342
    %1625 = vmatprep.subr.bf16.mxu0 %v1339
    %1626 = vmatpush2.bf16.msra.mxu0 %v1338
    %1627 = vmatprep.subr.bf16.mxu0 %v1335
    %1628 = vmatpush2.bf16.msra.mxu0 %v1334
    %1629 = vmatprep.subr.bf16.mxu0 %v1331
    %1630 = vmatpush2.bf16.msra.mxu0 %v1330
    %1631 = vmatprep.subr.bf16.mxu0 %v1327
    %1632 = vmatpush2.bf16.msra.mxu0 %v1326
    %1633 = vmatprep.subr.bf16.mxu0 %v1323
    %1634 = vmatpush2.bf16.msra.mxu0 %v1322
    %1635 = vmatprep.mubr.bf16.mxu0 %v688
    %1636 = vmatmul.mubr.bf16.gmra.mxu0 %v687
    %v1637 = vpop.f32.mrf.mxu0
    %v1638 = vadd.f32 %v1597, %v1637
    %v1639 = vpop.f32.mrf.mxu0
    %v1640 = vadd.f32 %v1599, %v1639
    %v1641 = vpop.f32.mrf.mxu0
    %v1642 = vpop.f32.mrf.mxu0
    %1643 = vdwg.mxu0
    %v1644 = vmax.f32 %v1556, 0.0
    %v1645 = vmax.f32 %v1558, 0.0
    %v1646 = vmax.f32 %v1638, 0.0
    %v1647 = vmax.f32 %v1640, 0.0
    %v1648 = vpack.c.bf16 %v1644, %v1644
    %v1649 = vpack.c.bf16 %v1645, %v1645
    %v1650 = vpack.c.bf16 %v1646, %v1646
    %v1651 = vpack.c.bf16 %v1647, %v1647
    %v1652 = vld [vmem:[#allocation8] sm:$0xff]
    %v1653 = vld [vmem:[#allocation8 + $0x8] sm:$0xff]
    %v1654 = vld [vmem:[#allocation8 + $0x10] sm:$0xff]
    %v1655 = vld [vmem:[#allocation8 + $0x18] sm:$0xff]
    %v1656 = vld [vmem:[#allocation8 + $0x20] sm:$0xff]
    %v1657 = vld [vmem:[#allocation8 + $0x28] sm:$0xff]
    %v1658 = vld [vmem:[#allocation8 + $0x30] sm:$0xff]
    %v1659 = vld [vmem:[#allocation8 + $0x38] sm:$0xff]
    %v1660 = vld [vmem:[#allocation8 + $0x40] sm:$0xff]
    %v1661 = vld [vmem:[#allocation8 + $0x48] sm:$0xff]
    %v1662 = vld [vmem:[#allocation8 + $0x50] sm:$0xff]
    %v1663 = vld [vmem:[#allocation8 + $0x58] sm:$0xff]
    %v1664 = vld [vmem:[#allocation8 + $0x60] sm:$0xff]
    %v1665 = vld [vmem:[#allocation8 + $0x68] sm:$0xff]
    %v1666 = vld [vmem:[#allocation8 + $0x70] sm:$0xff]
    %v1667 = vld [vmem:[#allocation8 + $0x78] sm:$0xff]
    %v1668 = vld [vmem:[#allocation8 + $0x80] sm:$0xff]
    %v1669 = vld [vmem:[#allocation8 + $0x88] sm:$0xff]
    %v1670 = vld [vmem:[#allocation8 + $0x90] sm:$0xff]
    %v1671 = vld [vmem:[#allocation8 + $0x98] sm:$0xff]
    %v1672 = vld [vmem:[#allocation8 + $0xa0] sm:$0xff]
    %v1673 = vld [vmem:[#allocation8 + $0xa8] sm:$0xff]
    %v1674 = vld [vmem:[#allocation8 + $0xb0] sm:$0xff]
    %v1675 = vld [vmem:[#allocation8 + $0xb8] sm:$0xff]
    %v1676 = vld [vmem:[#allocation8 + $0xc0] sm:$0xff]
    %v1677 = vld [vmem:[#allocation8 + $0xc8] sm:$0xff]
    %v1678 = vld [vmem:[#allocation8 + $0xd0] sm:$0xff]
    %v1679 = vld [vmem:[#allocation8 + $0xd8] sm:$0xff]
    %v1680 = vld [vmem:[#allocation8 + $0xe0] sm:$0xff]
    %v1681 = vld [vmem:[#allocation8 + $0xe8] sm:$0xff]
    %v1682 = vld [vmem:[#allocation8 + $0xf0] sm:$0xff]
    %v1683 = vld [vmem:[#allocation8 + $0xf8] sm:$0xff]
    %v1684 = vld [vmem:[#allocation8 + $0x100] sm:$0xff]
    %v1685 = vld [vmem:[#allocation8 + $0x108] sm:$0xff]
    %v1686 = vld [vmem:[#allocation8 + $0x110] sm:$0xff]
    %v1687 = vld [vmem:[#allocation8 + $0x118] sm:$0xff]
    %v1688 = vld [vmem:[#allocation8 + $0x120] sm:$0xff]
    %v1689 = vld [vmem:[#allocation8 + $0x128] sm:$0xff]
    %v1690 = vld [vmem:[#allocation8 + $0x130] sm:$0xff]
    %v1691 = vld [vmem:[#allocation8 + $0x138] sm:$0xff]
    %v1692 = vld [vmem:[#allocation8 + $0x140] sm:$0xff]
    %v1693 = vld [vmem:[#allocation8 + $0x148] sm:$0xff]
    %v1694 = vld [vmem:[#allocation8 + $0x150] sm:$0xff]
    %v1695 = vld [vmem:[#allocation8 + $0x158] sm:$0xff]
    %v1696 = vld [vmem:[#allocation8 + $0x160] sm:$0xff]
    %v1697 = vld [vmem:[#allocation8 + $0x168] sm:$0xff]
    %v1698 = vld [vmem:[#allocation8 + $0x170] sm:$0xff]
    %v1699 = vld [vmem:[#allocation8 + $0x178] sm:$0xff]
    %v1700 = vld [vmem:[#allocation8 + $0x180] sm:$0xff]
    %v1701 = vld [vmem:[#allocation8 + $0x188] sm:$0xff]
    %v1702 = vld [vmem:[#allocation8 + $0x190] sm:$0xff]
    %v1703 = vld [vmem:[#allocation8 + $0x198] sm:$0xff]
    %v1704 = vld [vmem:[#allocation8 + $0x1a0] sm:$0xff]
    %v1705 = vld [vmem:[#allocation8 + $0x1a8] sm:$0xff]
    %v1706 = vld [vmem:[#allocation8 + $0x1b0] sm:$0xff]
    %v1707 = vld [vmem:[#allocation8 + $0x1b8] sm:$0xff]
    %v1708 = vld [vmem:[#allocation8 + $0x1c0] sm:$0xff]
    %v1709 = vld [vmem:[#allocation8 + $0x1c8] sm:$0xff]
    %v1710 = vld [vmem:[#allocation8 + $0x1d0] sm:$0xff]
    %v1711 = vld [vmem:[#allocation8 + $0x1d8] sm:$0xff]
    %v1712 = vld [vmem:[#allocation8 + $0x1e0] sm:$0xff]
    %v1713 = vld [vmem:[#allocation8 + $0x1e8] sm:$0xff]
    %v1714 = vld [vmem:[#allocation8 + $0x1f0] sm:$0xff]
    %v1715 = vld [vmem:[#allocation8 + $0x1f8] sm:$0xff]
    %v1716 = vld [vmem:[#allocation8 + $0x200] sm:$0xff]
    %v1717 = vld [vmem:[#allocation8 + $0x208] sm:$0xff]
    %v1718 = vld [vmem:[#allocation8 + $0x210] sm:$0xff]
    %v1719 = vld [vmem:[#allocation8 + $0x218] sm:$0xff]
    %v1720 = vld [vmem:[#allocation8 + $0x220] sm:$0xff]
    %v1721 = vld [vmem:[#allocation8 + $0x228] sm:$0xff]
    %v1722 = vld [vmem:[#allocation8 + $0x230] sm:$0xff]
    %v1723 = vld [vmem:[#allocation8 + $0x238] sm:$0xff]
    %v1724 = vld [vmem:[#allocation8 + $0x240] sm:$0xff]
    %v1725 = vld [vmem:[#allocation8 + $0x248] sm:$0xff]
    %v1726 = vld [vmem:[#allocation8 + $0x250] sm:$0xff]
    %v1727 = vld [vmem:[#allocation8 + $0x258] sm:$0xff]
    %v1728 = vld [vmem:[#allocation8 + $0x260] sm:$0xff]
    %v1729 = vld [vmem:[#allocation8 + $0x268] sm:$0xff]
    %v1730 = vld [vmem:[#allocation8 + $0x270] sm:$0xff]
    %v1731 = vld [vmem:[#allocation8 + $0x278] sm:$0xff]
    %v1732 = vld [vmem:[#allocation8 + $0x280] sm:$0xff]
    %v1733 = vld [vmem:[#allocation8 + $0x288] sm:$0xff]
    %v1734 = vld [vmem:[#allocation8 + $0x290] sm:$0xff]
    %v1735 = vld [vmem:[#allocation8 + $0x298] sm:$0xff]
    %v1736 = vld [vmem:[#allocation8 + $0x2a0] sm:$0xff]
    %v1737 = vld [vmem:[#allocation8 + $0x2a8] sm:$0xff]
    %v1738 = vld [vmem:[#allocation8 + $0x2b0] sm:$0xff]
    %v1739 = vld [vmem:[#allocation8 + $0x2b8] sm:$0xff]
    %v1740 = vld [vmem:[#allocation8 + $0x2c0] sm:$0xff]
    %v1741 = vld [vmem:[#allocation8 + $0x2c8] sm:$0xff]
    %v1742 = vld [vmem:[#allocation8 + $0x2d0] sm:$0xff]
    %v1743 = vld [vmem:[#allocation8 + $0x2d8] sm:$0xff]
    %v1744 = vld [vmem:[#allocation8 + $0x2e0] sm:$0xff]
    %v1745 = vld [vmem:[#allocation8 + $0x2e8] sm:$0xff]
    %v1746 = vld [vmem:[#allocation8 + $0x2f0] sm:$0xff]
    %v1747 = vld [vmem:[#allocation8 + $0x2f8] sm:$0xff]
    %v1748 = vld [vmem:[#allocation8 + $0x300] sm:$0xff]
    %v1749 = vld [vmem:[#allocation8 + $0x308] sm:$0xff]
    %v1750 = vld [vmem:[#allocation8 + $0x310] sm:$0xff]
    %v1751 = vld [vmem:[#allocation8 + $0x318] sm:$0xff]
    %v1752 = vld [vmem:[#allocation8 + $0x320] sm:$0xff]
    %v1753 = vld [vmem:[#allocation8 + $0x328] sm:$0xff]
    %v1754 = vld [vmem:[#allocation8 + $0x330] sm:$0xff]
    %v1755 = vld [vmem:[#allocation8 + $0x338] sm:$0xff]
    %v1756 = vld [vmem:[#allocation8 + $0x340] sm:$0xff]
    %v1757 = vld [vmem:[#allocation8 + $0x348] sm:$0xff]
    %v1758 = vld [vmem:[#allocation8 + $0x350] sm:$0xff]
    %v1759 = vld [vmem:[#allocation8 + $0x358] sm:$0xff]
    %v1760 = vld [vmem:[#allocation8 + $0x360] sm:$0xff]
    %v1761 = vld [vmem:[#allocation8 + $0x368] sm:$0xff]
    %v1762 = vld [vmem:[#allocation8 + $0x370] sm:$0xff]
    %v1763 = vld [vmem:[#allocation8 + $0x378] sm:$0xff]
    %v1764 = vld [vmem:[#allocation8 + $0x380] sm:$0xff]
    %v1765 = vld [vmem:[#allocation8 + $0x388] sm:$0xff]
    %v1766 = vld [vmem:[#allocation8 + $0x390] sm:$0xff]
    %v1767 = vld [vmem:[#allocation8 + $0x398] sm:$0xff]
    %v1768 = vld [vmem:[#allocation8 + $0x3a0] sm:$0xff]
    %v1769 = vld [vmem:[#allocation8 + $0x3a8] sm:$0xff]
    %v1770 = vld [vmem:[#allocation8 + $0x3b0] sm:$0xff]
    %v1771 = vld [vmem:[#allocation8 + $0x3b8] sm:$0xff]
    %v1772 = vld [vmem:[#allocation8 + $0x3c0] sm:$0xff]
    %v1773 = vld [vmem:[#allocation8 + $0x3c8] sm:$0xff]
    %v1774 = vld [vmem:[#allocation8 + $0x3d0] sm:$0xff]
    %v1775 = vld [vmem:[#allocation8 + $0x3d8] sm:$0xff]
    %v1776 = vld [vmem:[#allocation8 + $0x3e0] sm:$0xff]
    %v1777 = vld [vmem:[#allocation8 + $0x3e8] sm:$0xff]
    %v1778 = vld [vmem:[#allocation8 + $0x3f0] sm:$0xff]
    %v1779 = vld [vmem:[#allocation8 + $0x3f8] sm:$0xff]
    %s1780 = scalar_lea.vmem [#allocation2], 2
    %v1781 = vld [vmem:[%s1780] ss:$8 sm:$0xf]
    %v1783 = vlaneseq
    %v1784 = vshrl.u32 %v1783, 7
    %v1785 = vsub.s32 0, %v1784
    %v1786 = vrot.slane %v1781, %v1785
    %v1787 = vlaneseq
    %v1788 = vshrl.u32 %v1787, 7
    %v1789 = vsub.s32 1, %v1788
    %v1790 = vrot.slane %v1781, %v1789
    %v1791 = vlaneseq
    %v1792 = vshrl.u32 %v1791, 7
    %v1793 = vsub.s32 2, %v1792
    %v1794 = vrot.slane %v1781, %v1793
    %v1795 = vlaneseq
    %v1796 = vshrl.u32 %v1795, 7
    %v1797 = vsub.s32 3, %v1796
    %v1798 = vrot.slane %v1781, %v1797
    %v1931 = vunpack.c.l.b16 %v1652
    %v1932 = vunpack.c.h.b16 %v1652
    %v1933 = vunpack.c.l.b16 %v1653
    %v1934 = vunpack.c.h.b16 %v1653
    %v1935 = vunpack.c.l.b16 %v1654
    %v1936 = vunpack.c.h.b16 %v1654
    %v1937 = vunpack.c.l.b16 %v1655
    %v1938 = vunpack.c.h.b16 %v1655
    %v1939 = vunpack.c.l.b16 %v1656
    %v1940 = vunpack.c.h.b16 %v1656
    %v1941 = vunpack.c.l.b16 %v1657
    %v1942 = vunpack.c.h.b16 %v1657
    %v1943 = vunpack.c.l.b16 %v1658
    %v1944 = vunpack.c.h.b16 %v1658
    %v1945 = vunpack.c.l.b16 %v1659
    %v1946 = vunpack.c.h.b16 %v1659
    %v1947 = vunpack.c.l.b16 %v1660
    %v1948 = vunpack.c.h.b16 %v1660
    %v1949 = vunpack.c.l.b16 %v1661
    %v1950 = vunpack.c.h.b16 %v1661
    %v1951 = vunpack.c.l.b16 %v1662
    %v1952 = vunpack.c.h.b16 %v1662
    %v1953 = vunpack.c.l.b16 %v1663
    %v1954 = vunpack.c.h.b16 %v1663
    %v1955 = vunpack.c.l.b16 %v1664
    %v1956 = vunpack.c.h.b16 %v1664
    %v1957 = vunpack.c.l.b16 %v1665
    %v1958 = vunpack.c.h.b16 %v1665
    %v1959 = vunpack.c.l.b16 %v1666
    %v1960 = vunpack.c.h.b16 %v1666
    %v1961 = vunpack.c.l.b16 %v1667
    %v1962 = vunpack.c.h.b16 %v1667
    %v1963 = vunpack.c.l.b16 %v1668
    %v1964 = vunpack.c.h.b16 %v1668
    %v1965 = vunpack.c.l.b16 %v1669
    %v1966 = vunpack.c.h.b16 %v1669
    %v1967 = vunpack.c.l.b16 %v1670
    %v1968 = vunpack.c.h.b16 %v1670
    %v1969 = vunpack.c.l.b16 %v1671
    %v1970 = vunpack.c.h.b16 %v1671
    %v1971 = vunpack.c.l.b16 %v1672
    %v1972 = vunpack.c.h.b16 %v1672
    %v1973 = vunpack.c.l.b16 %v1673
    %v1974 = vunpack.c.h.b16 %v1673
    %v1975 = vunpack.c.l.b16 %v1674
    %v1976 = vunpack.c.h.b16 %v1674
    %v1977 = vunpack.c.l.b16 %v1675
    %v1978 = vunpack.c.h.b16 %v1675
    %v1979 = vunpack.c.l.b16 %v1676
    %v1980 = vunpack.c.h.b16 %v1676
    %v1981 = vunpack.c.l.b16 %v1677
    %v1982 = vunpack.c.h.b16 %v1677
    %v1983 = vunpack.c.l.b16 %v1678
    %v1984 = vunpack.c.h.b16 %v1678
    %v1985 = vunpack.c.l.b16 %v1679
    %v1986 = vunpack.c.h.b16 %v1679
    %v1987 = vunpack.c.l.b16 %v1680
    %v1988 = vunpack.c.h.b16 %v1680
    %v1989 = vunpack.c.l.b16 %v1681
    %v1990 = vunpack.c.h.b16 %v1681
    %v1991 = vunpack.c.l.b16 %v1682
    %v1992 = vunpack.c.h.b16 %v1682
    %v1993 = vunpack.c.l.b16 %v1683
    %v1994 = vunpack.c.h.b16 %v1683
    %v1995 = vunpack.c.l.b16 %v1684
    %v1996 = vunpack.c.h.b16 %v1684
    %v1997 = vunpack.c.l.b16 %v1685
    %v1998 = vunpack.c.h.b16 %v1685
    %v1999 = vunpack.c.l.b16 %v1686
    %v2000 = vunpack.c.h.b16 %v1686
    %v2001 = vunpack.c.l.b16 %v1687
    %v2002 = vunpack.c.h.b16 %v1687
    %v2003 = vunpack.c.l.b16 %v1688
    %v2004 = vunpack.c.h.b16 %v1688
    %v2005 = vunpack.c.l.b16 %v1689
    %v2006 = vunpack.c.h.b16 %v1689
    %v2007 = vunpack.c.l.b16 %v1690
    %v2008 = vunpack.c.h.b16 %v1690
    %v2009 = vunpack.c.l.b16 %v1691
    %v2010 = vunpack.c.h.b16 %v1691
    %v2011 = vunpack.c.l.b16 %v1692
    %v2012 = vunpack.c.h.b16 %v1692
    %v2013 = vunpack.c.l.b16 %v1693
    %v2014 = vunpack.c.h.b16 %v1693
    %v2015 = vunpack.c.l.b16 %v1694
    %v2016 = vunpack.c.h.b16 %v1694
    %v2017 = vunpack.c.l.b16 %v1695
    %v2018 = vunpack.c.h.b16 %v1695
    %v2019 = vunpack.c.l.b16 %v1696
    %v2020 = vunpack.c.h.b16 %v1696
    %v2021 = vunpack.c.l.b16 %v1697
    %v2022 = vunpack.c.h.b16 %v1697
    %v2023 = vunpack.c.l.b16 %v1698
    %v2024 = vunpack.c.h.b16 %v1698
    %v2025 = vunpack.c.l.b16 %v1699
    %v2026 = vunpack.c.h.b16 %v1699
    %v2027 = vunpack.c.l.b16 %v1700
    %v2028 = vunpack.c.h.b16 %v1700
    %v2029 = vunpack.c.l.b16 %v1701
    %v2030 = vunpack.c.h.b16 %v1701
    %v2031 = vunpack.c.l.b16 %v1702
    %v2032 = vunpack.c.h.b16 %v1702
    %v2033 = vunpack.c.l.b16 %v1703
    %v2034 = vunpack.c.h.b16 %v1703
    %v2035 = vunpack.c.l.b16 %v1704
    %v2036 = vunpack.c.h.b16 %v1704
    %v2037 = vunpack.c.l.b16 %v1705
    %v2038 = vunpack.c.h.b16 %v1705
    %v2039 = vunpack.c.l.b16 %v1706
    %v2040 = vunpack.c.h.b16 %v1706
    %v2041 = vunpack.c.l.b16 %v1707
    %v2042 = vunpack.c.h.b16 %v1707
    %v2043 = vunpack.c.l.b16 %v1708
    %v2044 = vunpack.c.h.b16 %v1708
    %v2045 = vunpack.c.l.b16 %v1709
    %v2046 = vunpack.c.h.b16 %v1709
    %v2047 = vunpack.c.l.b16 %v1710
    %v2048 = vunpack.c.h.b16 %v1710
    %v2049 = vunpack.c.l.b16 %v1711
    %v2050 = vunpack.c.h.b16 %v1711
    %v2051 = vunpack.c.l.b16 %v1712
    %v2052 = vunpack.c.h.b16 %v1712
    %v2053 = vunpack.c.l.b16 %v1713
    %v2054 = vunpack.c.h.b16 %v1713
    %v2055 = vunpack.c.l.b16 %v1714
    %v2056 = vunpack.c.h.b16 %v1714
    %v2057 = vunpack.c.l.b16 %v1715
    %v2058 = vunpack.c.h.b16 %v1715
    %v2059 = vunpack.c.l.b16 %v1716
    %v2060 = vunpack.c.h.b16 %v1716
    %v2061 = vunpack.c.l.b16 %v1717
    %v2062 = vunpack.c.h.b16 %v1717
    %v2063 = vunpack.c.l.b16 %v1718
    %v2064 = vunpack.c.h.b16 %v1718
    %v2065 = vunpack.c.l.b16 %v1719
    %v2066 = vunpack.c.h.b16 %v1719
    %v2067 = vunpack.c.l.b16 %v1720
    %v2068 = vunpack.c.h.b16 %v1720
    %v2069 = vunpack.c.l.b16 %v1721
    %v2070 = vunpack.c.h.b16 %v1721
    %v2071 = vunpack.c.l.b16 %v1722
    %v2072 = vunpack.c.h.b16 %v1722
    %v2073 = vunpack.c.l.b16 %v1723
    %v2074 = vunpack.c.h.b16 %v1723
    %v2075 = vunpack.c.l.b16 %v1724
    %v2076 = vunpack.c.h.b16 %v1724
    %v2077 = vunpack.c.l.b16 %v1725
    %v2078 = vunpack.c.h.b16 %v1725
    %v2079 = vunpack.c.l.b16 %v1726
    %v2080 = vunpack.c.h.b16 %v1726
    %v2081 = vunpack.c.l.b16 %v1727
    %v2082 = vunpack.c.h.b16 %v1727
    %v2083 = vunpack.c.l.b16 %v1728
    %v2084 = vunpack.c.h.b16 %v1728
    %v2085 = vunpack.c.l.b16 %v1729
    %v2086 = vunpack.c.h.b16 %v1729
    %v2087 = vunpack.c.l.b16 %v1730
    %v2088 = vunpack.c.h.b16 %v1730
    %v2089 = vunpack.c.l.b16 %v1731
    %v2090 = vunpack.c.h.b16 %v1731
    %v2091 = vunpack.c.l.b16 %v1732
    %v2092 = vunpack.c.h.b16 %v1732
    %v2093 = vunpack.c.l.b16 %v1733
    %v2094 = vunpack.c.h.b16 %v1733
    %v2095 = vunpack.c.l.b16 %v1734
    %v2096 = vunpack.c.h.b16 %v1734
    %v2097 = vunpack.c.l.b16 %v1735
    %v2098 = vunpack.c.h.b16 %v1735
    %v2099 = vunpack.c.l.b16 %v1736
    %v2100 = vunpack.c.h.b16 %v1736
    %v2101 = vunpack.c.l.b16 %v1737
    %v2102 = vunpack.c.h.b16 %v1737
    %v2103 = vunpack.c.l.b16 %v1738
    %v2104 = vunpack.c.h.b16 %v1738
    %v2105 = vunpack.c.l.b16 %v1739
    %v2106 = vunpack.c.h.b16 %v1739
    %v2107 = vunpack.c.l.b16 %v1740
    %v2108 = vunpack.c.h.b16 %v1740
    %v2109 = vunpack.c.l.b16 %v1741
    %v2110 = vunpack.c.h.b16 %v1741
    %v2111 = vunpack.c.l.b16 %v1742
    %v2112 = vunpack.c.h.b16 %v1742
    %v2113 = vunpack.c.l.b16 %v1743
    %v2114 = vunpack.c.h.b16 %v1743
    %v2115 = vunpack.c.l.b16 %v1744
    %v2116 = vunpack.c.h.b16 %v1744
    %v2117 = vunpack.c.l.b16 %v1745
    %v2118 = vunpack.c.h.b16 %v1745
    %v2119 = vunpack.c.l.b16 %v1746
    %v2120 = vunpack.c.h.b16 %v1746
    %v2121 = vunpack.c.l.b16 %v1747
    %v2122 = vunpack.c.h.b16 %v1747
    %v2123 = vunpack.c.l.b16 %v1748
    %v2124 = vunpack.c.h.b16 %v1748
    %v2125 = vunpack.c.l.b16 %v1749
    %v2126 = vunpack.c.h.b16 %v1749
    %v2127 = vunpack.c.l.b16 %v1750
    %v2128 = vunpack.c.h.b16 %v1750
    %v2129 = vunpack.c.l.b16 %v1751
    %v2130 = vunpack.c.h.b16 %v1751
    %v2131 = vunpack.c.l.b16 %v1752
    %v2132 = vunpack.c.h.b16 %v1752
    %v2133 = vunpack.c.l.b16 %v1753
    %v2134 = vunpack.c.h.b16 %v1753
    %v2135 = vunpack.c.l.b16 %v1754
    %v2136 = vunpack.c.h.b16 %v1754
    %v2137 = vunpack.c.l.b16 %v1755
    %v2138 = vunpack.c.h.b16 %v1755
    %v2139 = vunpack.c.l.b16 %v1756
    %v2140 = vunpack.c.h.b16 %v1756
    %v2141 = vunpack.c.l.b16 %v1757
    %v2142 = vunpack.c.h.b16 %v1757
    %v2143 = vunpack.c.l.b16 %v1758
    %v2144 = vunpack.c.h.b16 %v1758
    %v2145 = vunpack.c.l.b16 %v1759
    %v2146 = vunpack.c.h.b16 %v1759
    %v2147 = vunpack.c.l.b16 %v1760
    %v2148 = vunpack.c.h.b16 %v1760
    %v2149 = vunpack.c.l.b16 %v1761
    %v2150 = vunpack.c.h.b16 %v1761
    %v2151 = vunpack.c.l.b16 %v1762
    %v2152 = vunpack.c.h.b16 %v1762
    %v2153 = vunpack.c.l.b16 %v1763
    %v2154 = vunpack.c.h.b16 %v1763
    %v2155 = vunpack.c.l.b16 %v1764
    %v2156 = vunpack.c.h.b16 %v1764
    %v2157 = vunpack.c.l.b16 %v1765
    %v2158 = vunpack.c.h.b16 %v1765
    %v2159 = vunpack.c.l.b16 %v1766
    %v2160 = vunpack.c.h.b16 %v1766
    %v2161 = vunpack.c.l.b16 %v1767
    %v2162 = vunpack.c.h.b16 %v1767
    %v2163 = vunpack.c.l.b16 %v1768
    %v2164 = vunpack.c.h.b16 %v1768
    %v2165 = vunpack.c.l.b16 %v1769
    %v2166 = vunpack.c.h.b16 %v1769
    %v2167 = vunpack.c.l.b16 %v1770
    %v2168 = vunpack.c.h.b16 %v1770
    %v2169 = vunpack.c.l.b16 %v1771
    %v2170 = vunpack.c.h.b16 %v1771
    %v2171 = vunpack.c.l.b16 %v1772
    %v2172 = vunpack.c.h.b16 %v1772
    %v2173 = vunpack.c.l.b16 %v1773
    %v2174 = vunpack.c.h.b16 %v1773
    %v2175 = vunpack.c.l.b16 %v1774
    %v2176 = vunpack.c.h.b16 %v1774
    %v2177 = vunpack.c.l.b16 %v1775
    %v2178 = vunpack.c.h.b16 %v1775
    %v2179 = vunpack.c.l.b16 %v1776
    %v2180 = vunpack.c.h.b16 %v1776
    %v2181 = vunpack.c.l.b16 %v1777
    %v2182 = vunpack.c.h.b16 %v1777
    %v2183 = vunpack.c.l.b16 %v1778
    %v2184 = vunpack.c.h.b16 %v1778
    %v2185 = vunpack.c.l.b16 %v1779
    %v2186 = vunpack.c.h.b16 %v1779
    %v2187 = vpack.c.b16 %v1935, %v1931
    %v2188 = vpack.c.b16 %v1936, %v1932
    %v2189 = vpack.c.b16 %v1937, %v1933
    %v2190 = vpack.c.b16 %v1938, %v1934
    %v2191 = vpack.c.b16 %v1943, %v1939
    %v2192 = vpack.c.b16 %v1944, %v1940
    %v2193 = vpack.c.b16 %v1945, %v1941
    %v2194 = vpack.c.b16 %v1946, %v1942
    %v2195 = vpack.c.b16 %v1951, %v1947
    %v2196 = vpack.c.b16 %v1952, %v1948
    %v2197 = vpack.c.b16 %v1953, %v1949
    %v2198 = vpack.c.b16 %v1954, %v1950
    %v2199 = vpack.c.b16 %v1959, %v1955
    %v2200 = vpack.c.b16 %v1960, %v1956
    %v2201 = vpack.c.b16 %v1961, %v1957
    %v2202 = vpack.c.b16 %v1962, %v1958
    %v2203 = vpack.c.b16 %v1967, %v1963
    %v2204 = vpack.c.b16 %v1968, %v1964
    %v2205 = vpack.c.b16 %v1969, %v1965
    %v2206 = vpack.c.b16 %v1970, %v1966
    %v2207 = vpack.c.b16 %v1975, %v1971
    %v2208 = vpack.c.b16 %v1976, %v1972
    %v2209 = vpack.c.b16 %v1977, %v1973
    %v2210 = vpack.c.b16 %v1978, %v1974
    %v2211 = vpack.c.b16 %v1983, %v1979
    %v2212 = vpack.c.b16 %v1984, %v1980
    %v2213 = vpack.c.b16 %v1985, %v1981
    %v2214 = vpack.c.b16 %v1986, %v1982
    %v2215 = vpack.c.b16 %v1991, %v1987
    %v2216 = vpack.c.b16 %v1992, %v1988
    %v2217 = vpack.c.b16 %v1993, %v1989
    %v2218 = vpack.c.b16 %v1994, %v1990
    %v2219 = vpack.c.b16 %v1999, %v1995
    %v2220 = vpack.c.b16 %v2000, %v1996
    %v2221 = vpack.c.b16 %v2001, %v1997
    %v2222 = vpack.c.b16 %v2002, %v1998
    %v2223 = vpack.c.b16 %v2007, %v2003
    %v2224 = vpack.c.b16 %v2008, %v2004
    %v2225 = vpack.c.b16 %v2009, %v2005
    %v2226 = vpack.c.b16 %v2010, %v2006
    %v2227 = vpack.c.b16 %v2015, %v2011
    %v2228 = vpack.c.b16 %v2016, %v2012
    %v2229 = vpack.c.b16 %v2017, %v2013
    %v2230 = vpack.c.b16 %v2018, %v2014
    %v2231 = vpack.c.b16 %v2023, %v2019
    %v2232 = vpack.c.b16 %v2024, %v2020
    %v2233 = vpack.c.b16 %v2025, %v2021
    %v2234 = vpack.c.b16 %v2026, %v2022
    %v2235 = vpack.c.b16 %v2031, %v2027
    %v2236 = vpack.c.b16 %v2032, %v2028
    %v2237 = vpack.c.b16 %v2033, %v2029
    %v2238 = vpack.c.b16 %v2034, %v2030
    %v2239 = vpack.c.b16 %v2039, %v2035
    %v2240 = vpack.c.b16 %v2040, %v2036
    %v2241 = vpack.c.b16 %v2041, %v2037
    %v2242 = vpack.c.b16 %v2042, %v2038
    %v2243 = vpack.c.b16 %v2047, %v2043
    %v2244 = vpack.c.b16 %v2048, %v2044
    %v2245 = vpack.c.b16 %v2049, %v2045
    %v2246 = vpack.c.b16 %v2050, %v2046
    %v2247 = vpack.c.b16 %v2055, %v2051
    %v2248 = vpack.c.b16 %v2056, %v2052
    %v2249 = vpack.c.b16 %v2057, %v2053
    %v2250 = vpack.c.b16 %v2058, %v2054
    %v2251 = vpack.c.b16 %v2063, %v2059
    %v2252 = vpack.c.b16 %v2064, %v2060
    %v2253 = vpack.c.b16 %v2065, %v2061
    %v2254 = vpack.c.b16 %v2066, %v2062
    %v2255 = vpack.c.b16 %v2071, %v2067
    %v2256 = vpack.c.b16 %v2072, %v2068
    %v2257 = vpack.c.b16 %v2073, %v2069
    %v2258 = vpack.c.b16 %v2074, %v2070
    %v2259 = vpack.c.b16 %v2079, %v2075
    %v2260 = vpack.c.b16 %v2080, %v2076
    %v2261 = vpack.c.b16 %v2081, %v2077
    %v2262 = vpack.c.b16 %v2082, %v2078
    %v2263 = vpack.c.b16 %v2087, %v2083
    %v2264 = vpack.c.b16 %v2088, %v2084
    %v2265 = vpack.c.b16 %v2089, %v2085
    %v2266 = vpack.c.b16 %v2090, %v2086
    %v2267 = vpack.c.b16 %v2095, %v2091
    %v2268 = vpack.c.b16 %v2096, %v2092
    %v2269 = vpack.c.b16 %v2097, %v2093
    %v2270 = vpack.c.b16 %v2098, %v2094
    %v2271 = vpack.c.b16 %v2103, %v2099
    %v2272 = vpack.c.b16 %v2104, %v2100
    %v2273 = vpack.c.b16 %v2105, %v2101
    %v2274 = vpack.c.b16 %v2106, %v2102
    %v2275 = vpack.c.b16 %v2111, %v2107
    %v2276 = vpack.c.b16 %v2112, %v2108
    %v2277 = vpack.c.b16 %v2113, %v2109
    %v2278 = vpack.c.b16 %v2114, %v2110
    %v2279 = vpack.c.b16 %v2119, %v2115
    %v2280 = vpack.c.b16 %v2120, %v2116
    %v2281 = vpack.c.b16 %v2121, %v2117
    %v2282 = vpack.c.b16 %v2122, %v2118
    %v2283 = vpack.c.b16 %v2127, %v2123
    %v2284 = vpack.c.b16 %v2128, %v2124
    %v2285 = vpack.c.b16 %v2129, %v2125
    %v2286 = vpack.c.b16 %v2130, %v2126
    %v2287 = vpack.c.b16 %v2135, %v2131
    %v2288 = vpack.c.b16 %v2136, %v2132
    %v2289 = vpack.c.b16 %v2137, %v2133
    %v2290 = vpack.c.b16 %v2138, %v2134
    %v2291 = vpack.c.b16 %v2143, %v2139
    %v2292 = vpack.c.b16 %v2144, %v2140
    %v2293 = vpack.c.b16 %v2145, %v2141
    %v2294 = vpack.c.b16 %v2146, %v2142
    %v2295 = vpack.c.b16 %v2151, %v2147
    %v2296 = vpack.c.b16 %v2152, %v2148
    %v2297 = vpack.c.b16 %v2153, %v2149
    %v2298 = vpack.c.b16 %v2154, %v2150
    %v2299 = vpack.c.b16 %v2159, %v2155
    %v2300 = vpack.c.b16 %v2160, %v2156
    %v2301 = vpack.c.b16 %v2161, %v2157
    %v2302 = vpack.c.b16 %v2162, %v2158
    %v2303 = vpack.c.b16 %v2167, %v2163
    %v2304 = vpack.c.b16 %v2168, %v2164
    %v2305 = vpack.c.b16 %v2169, %v2165
    %v2306 = vpack.c.b16 %v2170, %v2166
    %v2307 = vpack.c.b16 %v2175, %v2171
    %v2308 = vpack.c.b16 %v2176, %v2172
    %v2309 = vpack.c.b16 %v2177, %v2173
    %v2310 = vpack.c.b16 %v2178, %v2174
    %v2311 = vpack.c.b16 %v2183, %v2179
    %v2312 = vpack.c.b16 %v2184, %v2180
    %v2313 = vpack.c.b16 %v2185, %v2181
    %v2314 = vpack.c.b16 %v2186, %v2182
    %2443 = vmatprep.subr.bf16.mxu0 %v2216
    %2444 = vmatpush1.bf16.msra.mxu0 %v2215
    %2445 = vmatprep.subr.bf16.mxu0 %v2212
    %2446 = vmatpush1.bf16.msra.mxu0 %v2211
    %2447 = vmatprep.subr.bf16.mxu0 %v2208
    %2448 = vmatpush1.bf16.msra.mxu0 %v2207
    %2449 = vmatprep.subr.bf16.mxu0 %v2204
    %2450 = vmatpush1.bf16.msra.mxu0 %v2203
    %2451 = vmatprep.subr.bf16.mxu0 %v2200
    %2452 = vmatpush1.bf16.msra.mxu0 %v2199
    %2453 = vmatprep.subr.bf16.mxu0 %v2196
    %2454 = vmatpush1.bf16.msra.mxu0 %v2195
    %2455 = vmatprep.subr.bf16.mxu0 %v2192
    %2456 = vmatpush1.bf16.msra.mxu0 %v2191
    %2457 = vmatprep.subr.bf16.mxu0 %v2188
    %2458 = vmatpush1.bf16.msra.mxu0 %v2187
    %2459 = vmatprep.subr.bf16.mxu0 %v2248
    %2460 = vmatpush2.bf16.msra.mxu0 %v2247
    %2461 = vmatprep.subr.bf16.mxu0 %v2244
    %2462 = vmatpush2.bf16.msra.mxu0 %v2243
    %2463 = vmatprep.subr.bf16.mxu0 %v2240
    %2464 = vmatpush2.bf16.msra.mxu0 %v2239
    %2465 = vmatprep.subr.bf16.mxu0 %v2236
    %2466 = vmatpush2.bf16.msra.mxu0 %v2235
    %2467 = vmatprep.subr.bf16.mxu0 %v2232
    %2468 = vmatpush2.bf16.msra.mxu0 %v2231
    %2469 = vmatprep.subr.bf16.mxu0 %v2228
    %2470 = vmatpush2.bf16.msra.mxu0 %v2227
    %2471 = vmatprep.subr.bf16.mxu0 %v2224
    %2472 = vmatpush2.bf16.msra.mxu0 %v2223
    %2473 = vmatprep.subr.bf16.mxu0 %v2220
    %2474 = vmatpush2.bf16.msra.mxu0 %v2219
    %2475 = vmatprep.mubr.bf16.mxu0 %v1649
    %2476 = vmatmul.mubr.bf16.gmra.mxu0 %v1648
    %v2477 = vpop.f32.mrf.mxu0
    %v2478 = vadd.f32 %v1786, %v2477
    %v2479 = vpop.f32.mrf.mxu0
    %v2480 = vadd.f32 %v1790, %v2479
    %v2481 = vpop.f32.mrf.mxu0
    %v2482 = vpop.f32.mrf.mxu0
    %2483 = vdwg.mxu0
    %2484 = vmatprep.subr.bf16.mxu0 %v2280
    %2485 = vmatpush1.bf16.msra.mxu0 %v2279
    %2486 = vmatprep.subr.bf16.mxu0 %v2276
    %2487 = vmatpush1.bf16.msra.mxu0 %v2275
    %2488 = vmatprep.subr.bf16.mxu0 %v2272
    %2489 = vmatpush1.bf16.msra.mxu0 %v2271
    %2490 = vmatprep.subr.bf16.mxu0 %v2268
    %2491 = vmatpush1.bf16.msra.mxu0 %v2267
    %2492 = vmatprep.subr.bf16.mxu0 %v2264
    %2493 = vmatpush1.bf16.msra.mxu0 %v2263
    %2494 = vmatprep.subr.bf16.mxu0 %v2260
    %2495 = vmatpush1.bf16.msra.mxu0 %v2259
    %2496 = vmatprep.subr.bf16.mxu0 %v2256
    %2497 = vmatpush1.bf16.msra.mxu0 %v2255
    %2498 = vmatprep.subr.bf16.mxu0 %v2252
    %2499 = vmatpush1.bf16.msra.mxu0 %v2251
    %2500 = vmatprep.subr.bf16.mxu0 %v2312
    %2501 = vmatpush2.bf16.msra.mxu0 %v2311
    %2502 = vmatprep.subr.bf16.mxu0 %v2308
    %2503 = vmatpush2.bf16.msra.mxu0 %v2307
    %2504 = vmatprep.subr.bf16.mxu0 %v2304
    %2505 = vmatpush2.bf16.msra.mxu0 %v2303
    %2506 = vmatprep.subr.bf16.mxu0 %v2300
    %2507 = vmatpush2.bf16.msra.mxu0 %v2299
    %2508 = vmatprep.subr.bf16.mxu0 %v2296
    %2509 = vmatpush2.bf16.msra.mxu0 %v2295
    %2510 = vmatprep.subr.bf16.mxu0 %v2292
    %2511 = vmatpush2.bf16.msra.mxu0 %v2291
    %2512 = vmatprep.subr.bf16.mxu0 %v2288
    %2513 = vmatpush2.bf16.msra.mxu0 %v2287
    %2514 = vmatprep.subr.bf16.mxu0 %v2284
    %2515 = vmatpush2.bf16.msra.mxu0 %v2283
    %2516 = vmatprep.mubr.bf16.mxu0 %v1651
    %2517 = vmatmul.mubr.bf16.gmra.mxu0 %v1650
    %v2518 = vpop.f32.mrf.mxu0
    %v2519 = vadd.f32 %v2478, %v2518
    %v2520 = vpop.f32.mrf.mxu0
    %v2521 = vadd.f32 %v2480, %v2520
    %v2522 = vpop.f32.mrf.mxu0
    %v2523 = vpop.f32.mrf.mxu0
    %2524 = vdwg.mxu0
    %2525 = vmatprep.subr.bf16.mxu0 %v2218
    %2526 = vmatpush1.bf16.msra.mxu0 %v2217
    %2527 = vmatprep.subr.bf16.mxu0 %v2214
    %2528 = vmatpush1.bf16.msra.mxu0 %v2213
    %2529 = vmatprep.subr.bf16.mxu0 %v2210
    %2530 = vmatpush1.bf16.msra.mxu0 %v2209
    %2531 = vmatprep.subr.bf16.mxu0 %v2206
    %2532 = vmatpush1.bf16.msra.mxu0 %v2205
    %2533 = vmatprep.subr.bf16.mxu0 %v2202
    %2534 = vmatpush1.bf16.msra.mxu0 %v2201
    %2535 = vmatprep.subr.bf16.mxu0 %v2198
    %2536 = vmatpush1.bf16.msra.mxu0 %v2197
    %2537 = vmatprep.subr.bf16.mxu0 %v2194
    %2538 = vmatpush1.bf16.msra.mxu0 %v2193
    %2539 = vmatprep.subr.bf16.mxu0 %v2190
    %2540 = vmatpush1.bf16.msra.mxu0 %v2189
    %2541 = vmatprep.subr.bf16.mxu0 %v2250
    %2542 = vmatpush2.bf16.msra.mxu0 %v2249
    %2543 = vmatprep.subr.bf16.mxu0 %v2246
    %2544 = vmatpush2.bf16.msra.mxu0 %v2245
    %2545 = vmatprep.subr.bf16.mxu0 %v2242
    %2546 = vmatpush2.bf16.msra.mxu0 %v2241
    %2547 = vmatprep.subr.bf16.mxu0 %v2238
    %2548 = vmatpush2.bf16.msra.mxu0 %v2237
    %2549 = vmatprep.subr.bf16.mxu0 %v2234
    %2550 = vmatpush2.bf16.msra.mxu0 %v2233
    %2551 = vmatprep.subr.bf16.mxu0 %v2230
    %2552 = vmatpush2.bf16.msra.mxu0 %v2229
    %2553 = vmatprep.subr.bf16.mxu0 %v2226
    %2554 = vmatpush2.bf16.msra.mxu0 %v2225
    %2555 = vmatprep.subr.bf16.mxu0 %v2222
    %2556 = vmatpush2.bf16.msra.mxu0 %v2221
    %2557 = vmatprep.mubr.bf16.mxu0 %v1649
    %2558 = vmatmul.mubr.bf16.gmra.mxu0 %v1648
    %v2559 = vpop.f32.mrf.mxu0
    %v2560 = vadd.f32 %v1794, %v2559
    %v2561 = vpop.f32.mrf.mxu0
    %v2562 = vadd.f32 %v1798, %v2561
    %v2563 = vpop.f32.mrf.mxu0
    %v2564 = vpop.f32.mrf.mxu0
    %2565 = vdwg.mxu0
    %2566 = vmatprep.subr.bf16.mxu0 %v2282
    %2567 = vmatpush1.bf16.msra.mxu0 %v2281
    %2568 = vmatprep.subr.bf16.mxu0 %v2278
    %2569 = vmatpush1.bf16.msra.mxu0 %v2277
    %2570 = vmatprep.subr.bf16.mxu0 %v2274
    %2571 = vmatpush1.bf16.msra.mxu0 %v2273
    %2572 = vmatprep.subr.bf16.mxu0 %v2270
    %2573 = vmatpush1.bf16.msra.mxu0 %v2269
    %2574 = vmatprep.subr.bf16.mxu0 %v2266
    %2575 = vmatpush1.bf16.msra.mxu0 %v2265
    %2576 = vmatprep.subr.bf16.mxu0 %v2262
    %2577 = vmatpush1.bf16.msra.mxu0 %v2261
    %2578 = vmatprep.subr.bf16.mxu0 %v2258
    %2579 = vmatpush1.bf16.msra.mxu0 %v2257
    %2580 = vmatprep.subr.bf16.mxu0 %v2254
    %2581 = vmatpush1.bf16.msra.mxu0 %v2253
    %2582 = vmatprep.subr.bf16.mxu0 %v2314
    %2583 = vmatpush2.bf16.msra.mxu0 %v2313
    %2584 = vmatprep.subr.bf16.mxu0 %v2310
    %2585 = vmatpush2.bf16.msra.mxu0 %v2309
    %2586 = vmatprep.subr.bf16.mxu0 %v2306
    %2587 = vmatpush2.bf16.msra.mxu0 %v2305
    %2588 = vmatprep.subr.bf16.mxu0 %v2302
    %2589 = vmatpush2.bf16.msra.mxu0 %v2301
    %2590 = vmatprep.subr.bf16.mxu0 %v2298
    %2591 = vmatpush2.bf16.msra.mxu0 %v2297
    %2592 = vmatprep.subr.bf16.mxu0 %v2294
    %2593 = vmatpush2.bf16.msra.mxu0 %v2293
    %2594 = vmatprep.subr.bf16.mxu0 %v2290
    %2595 = vmatpush2.bf16.msra.mxu0 %v2289
    %2596 = vmatprep.subr.bf16.mxu0 %v2286
    %2597 = vmatpush2.bf16.msra.mxu0 %v2285
    %2598 = vmatprep.mubr.bf16.mxu0 %v1651
    %2599 = vmatmul.mubr.bf16.gmra.mxu0 %v1650
    %v2600 = vpop.f32.mrf.mxu0
    %v2601 = vadd.f32 %v2560, %v2600
    %v2602 = vpop.f32.mrf.mxu0
    %v2603 = vadd.f32 %v2562, %v2602
    %v2604 = vpop.f32.mrf.mxu0
    %v2605 = vpop.f32.mrf.mxu0
    %2606 = vdwg.mxu0
    %v2607 = vmax.f32 %v2519, 0.0
    %v2608 = vmax.f32 %v2521, 0.0
    %v2609 = vmax.f32 %v2601, 0.0
    %v2610 = vmax.f32 %v2603, 0.0
    %v2611 = vpack.c.bf16 %v2607, %v2607
    %v2612 = vpack.c.bf16 %v2608, %v2608
    %v2613 = vpack.c.bf16 %v2609, %v2609
    %v2614 = vpack.c.bf16 %v2610, %v2610
    %v2615 = vld [vmem:[#allocation10] sm:$0xff]
    %v2616 = vld [vmem:[#allocation10 + $0x8] sm:$0xff]
    %v2617 = vld [vmem:[#allocation10 + $0x10] sm:$0xff]
    %v2618 = vld [vmem:[#allocation10 + $0x18] sm:$0xff]
    %v2619 = vld [vmem:[#allocation10 + $0x20] sm:$0xff]
    %v2620 = vld [vmem:[#allocation10 + $0x28] sm:$0xff]
    %v2621 = vld [vmem:[#allocation10 + $0x30] sm:$0xff]
    %v2622 = vld [vmem:[#allocation10 + $0x38] sm:$0xff]
    %v2623 = vld [vmem:[#allocation10 + $0x40] sm:$0xff]
    %v2624 = vld [vmem:[#allocation10 + $0x48] sm:$0xff]
    %v2625 = vld [vmem:[#allocation10 + $0x50] sm:$0xff]
    %v2626 = vld [vmem:[#allocation10 + $0x58] sm:$0xff]
    %v2627 = vld [vmem:[#allocation10 + $0x60] sm:$0xff]
    %v2628 = vld [vmem:[#allocation10 + $0x68] sm:$0xff]
    %v2629 = vld [vmem:[#allocation10 + $0x70] sm:$0xff]
    %v2630 = vld [vmem:[#allocation10 + $0x78] sm:$0xff]
    %v2631 = vld [vmem:[#allocation10 + $0x80] sm:$0xff]
    %v2632 = vld [vmem:[#allocation10 + $0x88] sm:$0xff]
    %v2633 = vld [vmem:[#allocation10 + $0x90] sm:$0xff]
    %v2634 = vld [vmem:[#allocation10 + $0x98] sm:$0xff]
    %v2635 = vld [vmem:[#allocation10 + $0xa0] sm:$0xff]
    %v2636 = vld [vmem:[#allocation10 + $0xa8] sm:$0xff]
    %v2637 = vld [vmem:[#allocation10 + $0xb0] sm:$0xff]
    %v2638 = vld [vmem:[#allocation10 + $0xb8] sm:$0xff]
    %v2639 = vld [vmem:[#allocation10 + $0xc0] sm:$0xff]
    %v2640 = vld [vmem:[#allocation10 + $0xc8] sm:$0xff]
    %v2641 = vld [vmem:[#allocation10 + $0xd0] sm:$0xff]
    %v2642 = vld [vmem:[#allocation10 + $0xd8] sm:$0xff]
    %v2643 = vld [vmem:[#allocation10 + $0xe0] sm:$0xff]
    %v2644 = vld [vmem:[#allocation10 + $0xe8] sm:$0xff]
    %v2645 = vld [vmem:[#allocation10 + $0xf0] sm:$0xff]
    %v2646 = vld [vmem:[#allocation10 + $0xf8] sm:$0xff]
    %v2647 = vld [vmem:[#allocation10 + $0x100] sm:$0xff]
    %v2648 = vld [vmem:[#allocation10 + $0x108] sm:$0xff]
    %v2649 = vld [vmem:[#allocation10 + $0x110] sm:$0xff]
    %v2650 = vld [vmem:[#allocation10 + $0x118] sm:$0xff]
    %v2651 = vld [vmem:[#allocation10 + $0x120] sm:$0xff]
    %v2652 = vld [vmem:[#allocation10 + $0x128] sm:$0xff]
    %v2653 = vld [vmem:[#allocation10 + $0x130] sm:$0xff]
    %v2654 = vld [vmem:[#allocation10 + $0x138] sm:$0xff]
    %v2655 = vld [vmem:[#allocation10 + $0x140] sm:$0xff]
    %v2656 = vld [vmem:[#allocation10 + $0x148] sm:$0xff]
    %v2657 = vld [vmem:[#allocation10 + $0x150] sm:$0xff]
    %v2658 = vld [vmem:[#allocation10 + $0x158] sm:$0xff]
    %v2659 = vld [vmem:[#allocation10 + $0x160] sm:$0xff]
    %v2660 = vld [vmem:[#allocation10 + $0x168] sm:$0xff]
    %v2661 = vld [vmem:[#allocation10 + $0x170] sm:$0xff]
    %v2662 = vld [vmem:[#allocation10 + $0x178] sm:$0xff]
    %v2663 = vld [vmem:[#allocation10 + $0x180] sm:$0xff]
    %v2664 = vld [vmem:[#allocation10 + $0x188] sm:$0xff]
    %v2665 = vld [vmem:[#allocation10 + $0x190] sm:$0xff]
    %v2666 = vld [vmem:[#allocation10 + $0x198] sm:$0xff]
    %v2667 = vld [vmem:[#allocation10 + $0x1a0] sm:$0xff]
    %v2668 = vld [vmem:[#allocation10 + $0x1a8] sm:$0xff]
    %v2669 = vld [vmem:[#allocation10 + $0x1b0] sm:$0xff]
    %v2670 = vld [vmem:[#allocation10 + $0x1b8] sm:$0xff]
    %v2671 = vld [vmem:[#allocation10 + $0x1c0] sm:$0xff]
    %v2672 = vld [vmem:[#allocation10 + $0x1c8] sm:$0xff]
    %v2673 = vld [vmem:[#allocation10 + $0x1d0] sm:$0xff]
    %v2674 = vld [vmem:[#allocation10 + $0x1d8] sm:$0xff]
    %v2675 = vld [vmem:[#allocation10 + $0x1e0] sm:$0xff]
    %v2676 = vld [vmem:[#allocation10 + $0x1e8] sm:$0xff]
    %v2677 = vld [vmem:[#allocation10 + $0x1f0] sm:$0xff]
    %v2678 = vld [vmem:[#allocation10 + $0x1f8] sm:$0xff]
    %s2679 = scalar_lea.vmem [#allocation2], 3
    %v2680 = vld [vmem:[%s2679] ss:$8 sm:$0x3]
    %v2682 = vlaneseq
    %v2683 = vshrl.u32 %v2682, 7
    %v2684 = vsub.s32 0, %v2683
    %v2685 = vrot.slane %v2680, %v2684
    %v2686 = vlaneseq
    %v2687 = vshrl.u32 %v2686, 7
    %v2688 = vsub.s32 1, %v2687
    %v2689 = vrot.slane %v2680, %v2688
    %v2756 = vunpack.c.l.b16 %v2615
    %v2757 = vunpack.c.h.b16 %v2615
    %v2758 = vunpack.c.l.b16 %v2616
    %v2759 = vunpack.c.h.b16 %v2616
    %v2760 = vunpack.c.l.b16 %v2617
    %v2761 = vunpack.c.h.b16 %v2617
    %v2762 = vunpack.c.l.b16 %v2618
    %v2763 = vunpack.c.h.b16 %v2618
    %v2764 = vunpack.c.l.b16 %v2619
    %v2765 = vunpack.c.h.b16 %v2619
    %v2766 = vunpack.c.l.b16 %v2620
    %v2767 = vunpack.c.h.b16 %v2620
    %v2768 = vunpack.c.l.b16 %v2621
    %v2769 = vunpack.c.h.b16 %v2621
    %v2770 = vunpack.c.l.b16 %v2622
    %v2771 = vunpack.c.h.b16 %v2622
    %v2772 = vunpack.c.l.b16 %v2623
    %v2773 = vunpack.c.h.b16 %v2623
    %v2774 = vunpack.c.l.b16 %v2624
    %v2775 = vunpack.c.h.b16 %v2624
    %v2776 = vunpack.c.l.b16 %v2625
    %v2777 = vunpack.c.h.b16 %v2625
    %v2778 = vunpack.c.l.b16 %v2626
    %v2779 = vunpack.c.h.b16 %v2626
    %v2780 = vunpack.c.l.b16 %v2627
    %v2781 = vunpack.c.h.b16 %v2627
    %v2782 = vunpack.c.l.b16 %v2628
    %v2783 = vunpack.c.h.b16 %v2628
    %v2784 = vunpack.c.l.b16 %v2629
    %v2785 = vunpack.c.h.b16 %v2629
    %v2786 = vunpack.c.l.b16 %v2630
    %v2787 = vunpack.c.h.b16 %v2630
    %v2788 = vunpack.c.l.b16 %v2631
    %v2789 = vunpack.c.h.b16 %v2631
    %v2790 = vunpack.c.l.b16 %v2632
    %v2791 = vunpack.c.h.b16 %v2632
    %v2792 = vunpack.c.l.b16 %v2633
    %v2793 = vunpack.c.h.b16 %v2633
    %v2794 = vunpack.c.l.b16 %v2634
    %v2795 = vunpack.c.h.b16 %v2634
    %v2796 = vunpack.c.l.b16 %v2635
    %v2797 = vunpack.c.h.b16 %v2635
    %v2798 = vunpack.c.l.b16 %v2636
    %v2799 = vunpack.c.h.b16 %v2636
    %v2800 = vunpack.c.l.b16 %v2637
    %v2801 = vunpack.c.h.b16 %v2637
    %v2802 = vunpack.c.l.b16 %v2638
    %v2803 = vunpack.c.h.b16 %v2638
    %v2804 = vunpack.c.l.b16 %v2639
    %v2805 = vunpack.c.h.b16 %v2639
    %v2806 = vunpack.c.l.b16 %v2640
    %v2807 = vunpack.c.h.b16 %v2640
    %v2808 = vunpack.c.l.b16 %v2641
    %v2809 = vunpack.c.h.b16 %v2641
    %v2810 = vunpack.c.l.b16 %v2642
    %v2811 = vunpack.c.h.b16 %v2642
    %v2812 = vunpack.c.l.b16 %v2643
    %v2813 = vunpack.c.h.b16 %v2643
    %v2814 = vunpack.c.l.b16 %v2644
    %v2815 = vunpack.c.h.b16 %v2644
    %v2816 = vunpack.c.l.b16 %v2645
    %v2817 = vunpack.c.h.b16 %v2645
    %v2818 = vunpack.c.l.b16 %v2646
    %v2819 = vunpack.c.h.b16 %v2646
    %v2820 = vunpack.c.l.b16 %v2647
    %v2821 = vunpack.c.h.b16 %v2647
    %v2822 = vunpack.c.l.b16 %v2648
    %v2823 = vunpack.c.h.b16 %v2648
    %v2824 = vunpack.c.l.b16 %v2649
    %v2825 = vunpack.c.h.b16 %v2649
    %v2826 = vunpack.c.l.b16 %v2650
    %v2827 = vunpack.c.h.b16 %v2650
    %v2828 = vunpack.c.l.b16 %v2651
    %v2829 = vunpack.c.h.b16 %v2651
    %v2830 = vunpack.c.l.b16 %v2652
    %v2831 = vunpack.c.h.b16 %v2652
    %v2832 = vunpack.c.l.b16 %v2653
    %v2833 = vunpack.c.h.b16 %v2653
    %v2834 = vunpack.c.l.b16 %v2654
    %v2835 = vunpack.c.h.b16 %v2654
    %v2836 = vunpack.c.l.b16 %v2655
    %v2837 = vunpack.c.h.b16 %v2655
    %v2838 = vunpack.c.l.b16 %v2656
    %v2839 = vunpack.c.h.b16 %v2656
    %v2840 = vunpack.c.l.b16 %v2657
    %v2841 = vunpack.c.h.b16 %v2657
    %v2842 = vunpack.c.l.b16 %v2658
    %v2843 = vunpack.c.h.b16 %v2658
    %v2844 = vunpack.c.l.b16 %v2659
    %v2845 = vunpack.c.h.b16 %v2659
    %v2846 = vunpack.c.l.b16 %v2660
    %v2847 = vunpack.c.h.b16 %v2660
    %v2848 = vunpack.c.l.b16 %v2661
    %v2849 = vunpack.c.h.b16 %v2661
    %v2850 = vunpack.c.l.b16 %v2662
    %v2851 = vunpack.c.h.b16 %v2662
    %v2852 = vunpack.c.l.b16 %v2663
    %v2853 = vunpack.c.h.b16 %v2663
    %v2854 = vunpack.c.l.b16 %v2664
    %v2855 = vunpack.c.h.b16 %v2664
    %v2856 = vunpack.c.l.b16 %v2665
    %v2857 = vunpack.c.h.b16 %v2665
    %v2858 = vunpack.c.l.b16 %v2666
    %v2859 = vunpack.c.h.b16 %v2666
    %v2860 = vunpack.c.l.b16 %v2667
    %v2861 = vunpack.c.h.b16 %v2667
    %v2862 = vunpack.c.l.b16 %v2668
    %v2863 = vunpack.c.h.b16 %v2668
    %v2864 = vunpack.c.l.b16 %v2669
    %v2865 = vunpack.c.h.b16 %v2669
    %v2866 = vunpack.c.l.b16 %v2670
    %v2867 = vunpack.c.h.b16 %v2670
    %v2868 = vunpack.c.l.b16 %v2671
    %v2869 = vunpack.c.h.b16 %v2671
    %v2870 = vunpack.c.l.b16 %v2672
    %v2871 = vunpack.c.h.b16 %v2672
    %v2872 = vunpack.c.l.b16 %v2673
    %v2873 = vunpack.c.h.b16 %v2673
    %v2874 = vunpack.c.l.b16 %v2674
    %v2875 = vunpack.c.h.b16 %v2674
    %v2876 = vunpack.c.l.b16 %v2675
    %v2877 = vunpack.c.h.b16 %v2675
    %v2878 = vunpack.c.l.b16 %v2676
    %v2879 = vunpack.c.h.b16 %v2676
    %v2880 = vunpack.c.l.b16 %v2677
    %v2881 = vunpack.c.h.b16 %v2677
    %v2882 = vunpack.c.l.b16 %v2678
    %v2883 = vunpack.c.h.b16 %v2678
    %v2884 = vpack.c.b16 %v2758, %v2756
    %v2885 = vpack.c.b16 %v2759, %v2757
    %v2886 = vpack.c.b16 %v2762, %v2760
    %v2887 = vpack.c.b16 %v2763, %v2761
    %v2888 = vpack.c.b16 %v2766, %v2764
    %v2889 = vpack.c.b16 %v2767, %v2765
    %v2890 = vpack.c.b16 %v2770, %v2768
    %v2891 = vpack.c.b16 %v2771, %v2769
    %v2892 = vpack.c.b16 %v2774, %v2772
    %v2893 = vpack.c.b16 %v2775, %v2773
    %v2894 = vpack.c.b16 %v2778, %v2776
    %v2895 = vpack.c.b16 %v2779, %v2777
    %v2896 = vpack.c.b16 %v2782, %v2780
    %v2897 = vpack.c.b16 %v2783, %v2781
    %v2898 = vpack.c.b16 %v2786, %v2784
    %v2899 = vpack.c.b16 %v2787, %v2785
    %v2900 = vpack.c.b16 %v2790, %v2788
    %v2901 = vpack.c.b16 %v2791, %v2789
    %v2902 = vpack.c.b16 %v2794, %v2792
    %v2903 = vpack.c.b16 %v2795, %v2793
    %v2904 = vpack.c.b16 %v2798, %v2796
    %v2905 = vpack.c.b16 %v2799, %v2797
    %v2906 = vpack.c.b16 %v2802, %v2800
    %v2907 = vpack.c.b16 %v2803, %v2801
    %v2908 = vpack.c.b16 %v2806, %v2804
    %v2909 = vpack.c.b16 %v2807, %v2805
    %v2910 = vpack.c.b16 %v2810, %v2808
    %v2911 = vpack.c.b16 %v2811, %v2809
    %v2912 = vpack.c.b16 %v2814, %v2812
    %v2913 = vpack.c.b16 %v2815, %v2813
    %v2914 = vpack.c.b16 %v2818, %v2816
    %v2915 = vpack.c.b16 %v2819, %v2817
    %v2916 = vpack.c.b16 %v2822, %v2820
    %v2917 = vpack.c.b16 %v2823, %v2821
    %v2918 = vpack.c.b16 %v2826, %v2824
    %v2919 = vpack.c.b16 %v2827, %v2825
    %v2920 = vpack.c.b16 %v2830, %v2828
    %v2921 = vpack.c.b16 %v2831, %v2829
    %v2922 = vpack.c.b16 %v2834, %v2832
    %v2923 = vpack.c.b16 %v2835, %v2833
    %v2924 = vpack.c.b16 %v2838, %v2836
    %v2925 = vpack.c.b16 %v2839, %v2837
    %v2926 = vpack.c.b16 %v2842, %v2840
    %v2927 = vpack.c.b16 %v2843, %v2841
    %v2928 = vpack.c.b16 %v2846, %v2844
    %v2929 = vpack.c.b16 %v2847, %v2845
    %v2930 = vpack.c.b16 %v2850, %v2848
    %v2931 = vpack.c.b16 %v2851, %v2849
    %v2932 = vpack.c.b16 %v2854, %v2852
    %v2933 = vpack.c.b16 %v2855, %v2853
    %v2934 = vpack.c.b16 %v2858, %v2856
    %v2935 = vpack.c.b16 %v2859, %v2857
    %v2936 = vpack.c.b16 %v2862, %v2860
    %v2937 = vpack.c.b16 %v2863, %v2861
    %v2938 = vpack.c.b16 %v2866, %v2864
    %v2939 = vpack.c.b16 %v2867, %v2865
    %v2940 = vpack.c.b16 %v2870, %v2868
    %v2941 = vpack.c.b16 %v2871, %v2869
    %v2942 = vpack.c.b16 %v2874, %v2872
    %v2943 = vpack.c.b16 %v2875, %v2873
    %v2944 = vpack.c.b16 %v2878, %v2876
    %v2945 = vpack.c.b16 %v2879, %v2877
    %v2946 = vpack.c.b16 %v2882, %v2880
    %v2947 = vpack.c.b16 %v2883, %v2881
    %3012 = vmatprep.subr.bf16.mxu0 %v2899
    %3013 = vmatpush1.bf16.msra.mxu0 %v2898
    %3014 = vmatprep.subr.bf16.mxu0 %v2897
    %3015 = vmatpush1.bf16.msra.mxu0 %v2896
    %3016 = vmatprep.subr.bf16.mxu0 %v2895
    %3017 = vmatpush1.bf16.msra.mxu0 %v2894
    %3018 = vmatprep.subr.bf16.mxu0 %v2893
    %3019 = vmatpush1.bf16.msra.mxu0 %v2892
    %3020 = vmatprep.subr.bf16.mxu0 %v2891
    %3021 = vmatpush1.bf16.msra.mxu0 %v2890
    %3022 = vmatprep.subr.bf16.mxu0 %v2889
    %3023 = vmatpush1.bf16.msra.mxu0 %v2888
    %3024 = vmatprep.subr.bf16.mxu0 %v2887
    %3025 = vmatpush1.bf16.msra.mxu0 %v2886
    %3026 = vmatprep.subr.bf16.mxu0 %v2885
    %3027 = vmatpush1.bf16.msra.mxu0 %v2884
    %3028 = vmatprep.subr.bf16.mxu0 %v2915
    %3029 = vmatpush2.bf16.msra.mxu0 %v2914
    %3030 = vmatprep.subr.bf16.mxu0 %v2913
    %3031 = vmatpush2.bf16.msra.mxu0 %v2912
    %3032 = vmatprep.subr.bf16.mxu0 %v2911
    %3033 = vmatpush2.bf16.msra.mxu0 %v2910
    %3034 = vmatprep.subr.bf16.mxu0 %v2909
    %3035 = vmatpush2.bf16.msra.mxu0 %v2908
    %3036 = vmatprep.subr.bf16.mxu0 %v2907
    %3037 = vmatpush2.bf16.msra.mxu0 %v2906
    %3038 = vmatprep.subr.bf16.mxu0 %v2905
    %3039 = vmatpush2.bf16.msra.mxu0 %v2904
    %3040 = vmatprep.subr.bf16.mxu0 %v2903
    %3041 = vmatpush2.bf16.msra.mxu0 %v2902
    %3042 = vmatprep.subr.bf16.mxu0 %v2901
    %3043 = vmatpush2.bf16.msra.mxu0 %v2900
    %3044 = vmatprep.mubr.bf16.mxu0 %v2612
    %3045 = vmatmul.mubr.bf16.gmra.mxu0 %v2611
    %v3046 = vpop.f32.mrf.mxu0
    %v3047 = vadd.f32 %v2685, %v3046
    %v3048 = vpop.f32.mrf.mxu0
    %v3049 = vadd.f32 %v2689, %v3048
    %v3050 = vpop.f32.mrf.mxu0
    %v3051 = vpop.f32.mrf.mxu0
    %3052 = vdwg.mxu0
    %3053 = vmatprep.subr.bf16.mxu0 %v2931
    %3054 = vmatpush1.bf16.msra.mxu0 %v2930
    %3055 = vmatprep.subr.bf16.mxu0 %v2929
    %3056 = vmatpush1.bf16.msra.mxu0 %v2928
    %3057 = vmatprep.subr.bf16.mxu0 %v2927
    %3058 = vmatpush1.bf16.msra.mxu0 %v2926
    %3059 = vmatprep.subr.bf16.mxu0 %v2925
    %3060 = vmatpush1.bf16.msra.mxu0 %v2924
    %3061 = vmatprep.subr.bf16.mxu0 %v2923
    %3062 = vmatpush1.bf16.msra.mxu0 %v2922
    %3063 = vmatprep.subr.bf16.mxu0 %v2921
    %3064 = vmatpush1.bf16.msra.mxu0 %v2920
    %3065 = vmatprep.subr.bf16.mxu0 %v2919
    %3066 = vmatpush1.bf16.msra.mxu0 %v2918
    %3067 = vmatprep.subr.bf16.mxu0 %v2917
    %3068 = vmatpush1.bf16.msra.mxu0 %v2916
    %3069 = vmatprep.subr.bf16.mxu0 %v2947
    %3070 = vmatpush2.bf16.msra.mxu0 %v2946
    %3071 = vmatprep.subr.bf16.mxu0 %v2945
    %3072 = vmatpush2.bf16.msra.mxu0 %v2944
    %3073 = vmatprep.subr.bf16.mxu0 %v2943
    %3074 = vmatpush2.bf16.msra.mxu0 %v2942
    %3075 = vmatprep.subr.bf16.mxu0 %v2941
    %3076 = vmatpush2.bf16.msra.mxu0 %v2940
    %3077 = vmatprep.subr.bf16.mxu0 %v2939
    %3078 = vmatpush2.bf16.msra.mxu0 %v2938
    %3079 = vmatprep.subr.bf16.mxu0 %v2937
    %3080 = vmatpush2.bf16.msra.mxu0 %v2936
    %3081 = vmatprep.subr.bf16.mxu0 %v2935
    %3082 = vmatpush2.bf16.msra.mxu0 %v2934
    %3083 = vmatprep.subr.bf16.mxu0 %v2933
    %3084 = vmatpush2.bf16.msra.mxu0 %v2932
    %3085 = vmatprep.mubr.bf16.mxu0 %v2614
    %3086 = vmatmul.mubr.bf16.gmra.mxu0 %v2613
    %v3087 = vpop.f32.mrf.mxu0
    %v3088 = vadd.f32 %v3047, %v3087
    %v3089 = vpop.f32.mrf.mxu0
    %v3090 = vadd.f32 %v3049, %v3089
    %v3091 = vpop.f32.mrf.mxu0
    %v3092 = vpop.f32.mrf.mxu0
    %3093 = vdwg.mxu0
    %v3094 = vmax.f32 %v3088, 0.0
    %v3095 = vmax.f32 %v3090, 0.0
    %v3096 = vpack.c.bf16 %v3094, %v3094
    %v3097 = vpack.c.bf16 %v3095, %v3095
    %v3098 = vld [vmem:[#allocation11] sm:$0xff]
    %v3099 = vld [vmem:[#allocation11 + $0x8] sm:$0xff]
    %v3100 = vld [vmem:[#allocation11 + $0x10] sm:$0xff]
    %v3101 = vld [vmem:[#allocation11 + $0x18] sm:$0xff]
    %v3102 = vld [vmem:[#allocation11 + $0x20] sm:$0xff]
    %v3103 = vld [vmem:[#allocation11 + $0x28] sm:$0xff]
    %v3104 = vld [vmem:[#allocation11 + $0x30] sm:$0xff]
    %v3105 = vld [vmem:[#allocation11 + $0x38] sm:$0xff]
    %v3106 = vld [vmem:[#allocation11 + $0x40] sm:$0xff]
    %v3107 = vld [vmem:[#allocation11 + $0x48] sm:$0xff]
    %v3108 = vld [vmem:[#allocation11 + $0x50] sm:$0xff]
    %v3109 = vld [vmem:[#allocation11 + $0x58] sm:$0xff]
    %v3110 = vld [vmem:[#allocation11 + $0x60] sm:$0xff]
    %v3111 = vld [vmem:[#allocation11 + $0x68] sm:$0xff]
    %v3112 = vld [vmem:[#allocation11 + $0x70] sm:$0xff]
    %v3113 = vld [vmem:[#allocation11 + $0x78] sm:$0xff]
    %v3114 = vld [vmem:[#allocation11 + $0x80] sm:$0xff]
    %v3115 = vld [vmem:[#allocation11 + $0x88] sm:$0xff]
    %v3116 = vld [vmem:[#allocation11 + $0x90] sm:$0xff]
    %v3117 = vld [vmem:[#allocation11 + $0x98] sm:$0xff]
    %v3118 = vld [vmem:[#allocation11 + $0xa0] sm:$0xff]
    %v3119 = vld [vmem:[#allocation11 + $0xa8] sm:$0xff]
    %v3120 = vld [vmem:[#allocation11 + $0xb0] sm:$0xff]
    %v3121 = vld [vmem:[#allocation11 + $0xb8] sm:$0xff]
    %v3122 = vld [vmem:[#allocation11 + $0xc0] sm:$0xff]
    %v3123 = vld [vmem:[#allocation11 + $0xc8] sm:$0xff]
    %v3124 = vld [vmem:[#allocation11 + $0xd0] sm:$0xff]
    %v3125 = vld [vmem:[#allocation11 + $0xd8] sm:$0xff]
    %v3126 = vld [vmem:[#allocation11 + $0xe0] sm:$0xff]
    %v3127 = vld [vmem:[#allocation11 + $0xe8] sm:$0xff]
    %v3128 = vld [vmem:[#allocation11 + $0xf0] sm:$0xff]
    %v3129 = vld [vmem:[#allocation11 + $0xf8] sm:$0xff]
    %v3130 = vld [vmem:[#allocation11 + $0x100] sm:$0xff]
    %v3131 = vld [vmem:[#allocation11 + $0x108] sm:$0xff]
    %v3132 = vld [vmem:[#allocation11 + $0x110] sm:$0xff]
    %v3133 = vld [vmem:[#allocation11 + $0x118] sm:$0xff]
    %v3134 = vld [vmem:[#allocation11 + $0x120] sm:$0xff]
    %v3135 = vld [vmem:[#allocation11 + $0x128] sm:$0xff]
    %v3136 = vld [vmem:[#allocation11 + $0x130] sm:$0xff]
    %v3137 = vld [vmem:[#allocation11 + $0x138] sm:$0xff]
    %v3138 = vld [vmem:[#allocation11 + $0x140] sm:$0xff]
    %v3139 = vld [vmem:[#allocation11 + $0x148] sm:$0xff]
    %v3140 = vld [vmem:[#allocation11 + $0x150] sm:$0xff]
    %v3141 = vld [vmem:[#allocation11 + $0x158] sm:$0xff]
    %v3142 = vld [vmem:[#allocation11 + $0x160] sm:$0xff]
    %v3143 = vld [vmem:[#allocation11 + $0x168] sm:$0xff]
    %v3144 = vld [vmem:[#allocation11 + $0x170] sm:$0xff]
    %v3145 = vld [vmem:[#allocation11 + $0x178] sm:$0xff]
    %v3146 = vld [vmem:[#allocation11 + $0x180] sm:$0xff]
    %v3147 = vld [vmem:[#allocation11 + $0x188] sm:$0xff]
    %v3148 = vld [vmem:[#allocation11 + $0x190] sm:$0xff]
    %v3149 = vld [vmem:[#allocation11 + $0x198] sm:$0xff]
    %v3150 = vld [vmem:[#allocation11 + $0x1a0] sm:$0xff]
    %v3151 = vld [vmem:[#allocation11 + $0x1a8] sm:$0xff]
    %v3152 = vld [vmem:[#allocation11 + $0x1b0] sm:$0xff]
    %v3153 = vld [vmem:[#allocation11 + $0x1b8] sm:$0xff]
    %v3154 = vld [vmem:[#allocation11 + $0x1c0] sm:$0xff]
    %v3155 = vld [vmem:[#allocation11 + $0x1c8] sm:$0xff]
    %v3156 = vld [vmem:[#allocation11 + $0x1d0] sm:$0xff]
    %v3157 = vld [vmem:[#allocation11 + $0x1d8] sm:$0xff]
    %v3158 = vld [vmem:[#allocation11 + $0x1e0] sm:$0xff]
    %v3159 = vld [vmem:[#allocation11 + $0x1e8] sm:$0xff]
    %v3160 = vld [vmem:[#allocation11 + $0x1f0] sm:$0xff]
    %v3161 = vld [vmem:[#allocation11 + $0x1f8] sm:$0xff]
    %s3162 = scalar_lea.vmem [#allocation2], 4
    %v3163 = vld [vmem:[%s3162] ss:$8 sm:$0xf]
    %v3165 = vlaneseq
    %v3166 = vshrl.u32 %v3165, 7
    %v3167 = vsub.s32 0, %v3166
    %v3168 = vrot.slane %v3163, %v3167
    %v3169 = vlaneseq
    %v3170 = vshrl.u32 %v3169, 7
    %v3171 = vsub.s32 1, %v3170
    %v3172 = vrot.slane %v3163, %v3171
    %v3173 = vlaneseq
    %v3174 = vshrl.u32 %v3173, 7
    %v3175 = vsub.s32 2, %v3174
    %v3176 = vrot.slane %v3163, %v3175
    %v3177 = vlaneseq
    %v3178 = vshrl.u32 %v3177, 7
    %v3179 = vsub.s32 3, %v3178
    %v3180 = vrot.slane %v3163, %v3179
    %v3249 = vunpack.c.l.b16 %v3098
    %v3250 = vunpack.c.h.b16 %v3098
    %v3251 = vunpack.c.l.b16 %v3099
    %v3252 = vunpack.c.h.b16 %v3099
    %v3253 = vunpack.c.l.b16 %v3100
    %v3254 = vunpack.c.h.b16 %v3100
    %v3255 = vunpack.c.l.b16 %v3101
    %v3256 = vunpack.c.h.b16 %v3101
    %v3257 = vunpack.c.l.b16 %v3102
    %v3258 = vunpack.c.h.b16 %v3102
    %v3259 = vunpack.c.l.b16 %v3103
    %v3260 = vunpack.c.h.b16 %v3103
    %v3261 = vunpack.c.l.b16 %v3104
    %v3262 = vunpack.c.h.b16 %v3104
    %v3263 = vunpack.c.l.b16 %v3105
    %v3264 = vunpack.c.h.b16 %v3105
    %v3265 = vunpack.c.l.b16 %v3106
    %v3266 = vunpack.c.h.b16 %v3106
    %v3267 = vunpack.c.l.b16 %v3107
    %v3268 = vunpack.c.h.b16 %v3107
    %v3269 = vunpack.c.l.b16 %v3108
    %v3270 = vunpack.c.h.b16 %v3108
    %v3271 = vunpack.c.l.b16 %v3109
    %v3272 = vunpack.c.h.b16 %v3109
    %v3273 = vunpack.c.l.b16 %v3110
    %v3274 = vunpack.c.h.b16 %v3110
    %v3275 = vunpack.c.l.b16 %v3111
    %v3276 = vunpack.c.h.b16 %v3111
    %v3277 = vunpack.c.l.b16 %v3112
    %v3278 = vunpack.c.h.b16 %v3112
    %v3279 = vunpack.c.l.b16 %v3113
    %v3280 = vunpack.c.h.b16 %v3113
    %v3281 = vunpack.c.l.b16 %v3114
    %v3282 = vunpack.c.h.b16 %v3114
    %v3283 = vunpack.c.l.b16 %v3115
    %v3284 = vunpack.c.h.b16 %v3115
    %v3285 = vunpack.c.l.b16 %v3116
    %v3286 = vunpack.c.h.b16 %v3116
    %v3287 = vunpack.c.l.b16 %v3117
    %v3288 = vunpack.c.h.b16 %v3117
    %v3289 = vunpack.c.l.b16 %v3118
    %v3290 = vunpack.c.h.b16 %v3118
    %v3291 = vunpack.c.l.b16 %v3119
    %v3292 = vunpack.c.h.b16 %v3119
    %v3293 = vunpack.c.l.b16 %v3120
    %v3294 = vunpack.c.h.b16 %v3120
    %v3295 = vunpack.c.l.b16 %v3121
    %v3296 = vunpack.c.h.b16 %v3121
    %v3297 = vunpack.c.l.b16 %v3122
    %v3298 = vunpack.c.h.b16 %v3122
    %v3299 = vunpack.c.l.b16 %v3123
    %v3300 = vunpack.c.h.b16 %v3123
    %v3301 = vunpack.c.l.b16 %v3124
    %v3302 = vunpack.c.h.b16 %v3124
    %v3303 = vunpack.c.l.b16 %v3125
    %v3304 = vunpack.c.h.b16 %v3125
    %v3305 = vunpack.c.l.b16 %v3126
    %v3306 = vunpack.c.h.b16 %v3126
    %v3307 = vunpack.c.l.b16 %v3127
    %v3308 = vunpack.c.h.b16 %v3127
    %v3309 = vunpack.c.l.b16 %v3128
    %v3310 = vunpack.c.h.b16 %v3128
    %v3311 = vunpack.c.l.b16 %v3129
    %v3312 = vunpack.c.h.b16 %v3129
    %v3313 = vunpack.c.l.b16 %v3130
    %v3314 = vunpack.c.h.b16 %v3130
    %v3315 = vunpack.c.l.b16 %v3131
    %v3316 = vunpack.c.h.b16 %v3131
    %v3317 = vunpack.c.l.b16 %v3132
    %v3318 = vunpack.c.h.b16 %v3132
    %v3319 = vunpack.c.l.b16 %v3133
    %v3320 = vunpack.c.h.b16 %v3133
    %v3321 = vunpack.c.l.b16 %v3134
    %v3322 = vunpack.c.h.b16 %v3134
    %v3323 = vunpack.c.l.b16 %v3135
    %v3324 = vunpack.c.h.b16 %v3135
    %v3325 = vunpack.c.l.b16 %v3136
    %v3326 = vunpack.c.h.b16 %v3136
    %v3327 = vunpack.c.l.b16 %v3137
    %v3328 = vunpack.c.h.b16 %v3137
    %v3329 = vunpack.c.l.b16 %v3138
    %v3330 = vunpack.c.h.b16 %v3138
    %v3331 = vunpack.c.l.b16 %v3139
    %v3332 = vunpack.c.h.b16 %v3139
    %v3333 = vunpack.c.l.b16 %v3140
    %v3334 = vunpack.c.h.b16 %v3140
    %v3335 = vunpack.c.l.b16 %v3141
    %v3336 = vunpack.c.h.b16 %v3141
    %v3337 = vunpack.c.l.b16 %v3142
    %v3338 = vunpack.c.h.b16 %v3142
    %v3339 = vunpack.c.l.b16 %v3143
    %v3340 = vunpack.c.h.b16 %v3143
    %v3341 = vunpack.c.l.b16 %v3144
    %v3342 = vunpack.c.h.b16 %v3144
    %v3343 = vunpack.c.l.b16 %v3145
    %v3344 = vunpack.c.h.b16 %v3145
    %v3345 = vunpack.c.l.b16 %v3146
    %v3346 = vunpack.c.h.b16 %v3146
    %v3347 = vunpack.c.l.b16 %v3147
    %v3348 = vunpack.c.h.b16 %v3147
    %v3349 = vunpack.c.l.b16 %v3148
    %v3350 = vunpack.c.h.b16 %v3148
    %v3351 = vunpack.c.l.b16 %v3149
    %v3352 = vunpack.c.h.b16 %v3149
    %v3353 = vunpack.c.l.b16 %v3150
    %v3354 = vunpack.c.h.b16 %v3150
    %v3355 = vunpack.c.l.b16 %v3151
    %v3356 = vunpack.c.h.b16 %v3151
    %v3357 = vunpack.c.l.b16 %v3152
    %v3358 = vunpack.c.h.b16 %v3152
    %v3359 = vunpack.c.l.b16 %v3153
    %v3360 = vunpack.c.h.b16 %v3153
    %v3361 = vunpack.c.l.b16 %v3154
    %v3362 = vunpack.c.h.b16 %v3154
    %v3363 = vunpack.c.l.b16 %v3155
    %v3364 = vunpack.c.h.b16 %v3155
    %v3365 = vunpack.c.l.b16 %v3156
    %v3366 = vunpack.c.h.b16 %v3156
    %v3367 = vunpack.c.l.b16 %v3157
    %v3368 = vunpack.c.h.b16 %v3157
    %v3369 = vunpack.c.l.b16 %v3158
    %v3370 = vunpack.c.h.b16 %v3158
    %v3371 = vunpack.c.l.b16 %v3159
    %v3372 = vunpack.c.h.b16 %v3159
    %v3373 = vunpack.c.l.b16 %v3160
    %v3374 = vunpack.c.h.b16 %v3160
    %v3375 = vunpack.c.l.b16 %v3161
    %v3376 = vunpack.c.h.b16 %v3161
    %v3377 = vpack.c.b16 %v3253, %v3249
    %v3378 = vpack.c.b16 %v3254, %v3250
    %v3379 = vpack.c.b16 %v3255, %v3251
    %v3380 = vpack.c.b16 %v3256, %v3252
    %v3381 = vpack.c.b16 %v3261, %v3257
    %v3382 = vpack.c.b16 %v3262, %v3258
    %v3383 = vpack.c.b16 %v3263, %v3259
    %v3384 = vpack.c.b16 %v3264, %v3260
    %v3385 = vpack.c.b16 %v3269, %v3265
    %v3386 = vpack.c.b16 %v3270, %v3266
    %v3387 = vpack.c.b16 %v3271, %v3267
    %v3388 = vpack.c.b16 %v3272, %v3268
    %v3389 = vpack.c.b16 %v3277, %v3273
    %v3390 = vpack.c.b16 %v3278, %v3274
    %v3391 = vpack.c.b16 %v3279, %v3275
    %v3392 = vpack.c.b16 %v3280, %v3276
    %v3393 = vpack.c.b16 %v3285, %v3281
    %v3394 = vpack.c.b16 %v3286, %v3282
    %v3395 = vpack.c.b16 %v3287, %v3283
    %v3396 = vpack.c.b16 %v3288, %v3284
    %v3397 = vpack.c.b16 %v3293, %v3289
    %v3398 = vpack.c.b16 %v3294, %v3290
    %v3399 = vpack.c.b16 %v3295, %v3291
    %v3400 = vpack.c.b16 %v3296, %v3292
    %v3401 = vpack.c.b16 %v3301, %v3297
    %v3402 = vpack.c.b16 %v3302, %v3298
    %v3403 = vpack.c.b16 %v3303, %v3299
    %v3404 = vpack.c.b16 %v3304, %v3300
    %v3405 = vpack.c.b16 %v3309, %v3305
    %v3406 = vpack.c.b16 %v3310, %v3306
    %v3407 = vpack.c.b16 %v3311, %v3307
    %v3408 = vpack.c.b16 %v3312, %v3308
    %v3409 = vpack.c.b16 %v3317, %v3313
    %v3410 = vpack.c.b16 %v3318, %v3314
    %v3411 = vpack.c.b16 %v3319, %v3315
    %v3412 = vpack.c.b16 %v3320, %v3316
    %v3413 = vpack.c.b16 %v3325, %v3321
    %v3414 = vpack.c.b16 %v3326, %v3322
    %v3415 = vpack.c.b16 %v3327, %v3323
    %v3416 = vpack.c.b16 %v3328, %v3324
    %v3417 = vpack.c.b16 %v3333, %v3329
    %v3418 = vpack.c.b16 %v3334, %v3330
    %v3419 = vpack.c.b16 %v3335, %v3331
    %v3420 = vpack.c.b16 %v3336, %v3332
    %v3421 = vpack.c.b16 %v3341, %v3337
    %v3422 = vpack.c.b16 %v3342, %v3338
    %v3423 = vpack.c.b16 %v3343, %v3339
    %v3424 = vpack.c.b16 %v3344, %v3340
    %v3425 = vpack.c.b16 %v3349, %v3345
    %v3426 = vpack.c.b16 %v3350, %v3346
    %v3427 = vpack.c.b16 %v3351, %v3347
    %v3428 = vpack.c.b16 %v3352, %v3348
    %v3429 = vpack.c.b16 %v3357, %v3353
    %v3430 = vpack.c.b16 %v3358, %v3354
    %v3431 = vpack.c.b16 %v3359, %v3355
    %v3432 = vpack.c.b16 %v3360, %v3356
    %v3433 = vpack.c.b16 %v3365, %v3361
    %v3434 = vpack.c.b16 %v3366, %v3362
    %v3435 = vpack.c.b16 %v3367, %v3363
    %v3436 = vpack.c.b16 %v3368, %v3364
    %v3437 = vpack.c.b16 %v3373, %v3369
    %v3438 = vpack.c.b16 %v3374, %v3370
    %v3439 = vpack.c.b16 %v3375, %v3371
    %v3440 = vpack.c.b16 %v3376, %v3372
    %3505 = vmatprep.subr.bf16.mxu0 %v3406
    %3506 = vmatpush1.bf16.msra.mxu0 %v3405
    %3507 = vmatprep.subr.bf16.mxu0 %v3402
    %3508 = vmatpush1.bf16.msra.mxu0 %v3401
    %3509 = vmatprep.subr.bf16.mxu0 %v3398
    %3510 = vmatpush1.bf16.msra.mxu0 %v3397
    %3511 = vmatprep.subr.bf16.mxu0 %v3394
    %3512 = vmatpush1.bf16.msra.mxu0 %v3393
    %3513 = vmatprep.subr.bf16.mxu0 %v3390
    %3514 = vmatpush1.bf16.msra.mxu0 %v3389
    %3515 = vmatprep.subr.bf16.mxu0 %v3386
    %3516 = vmatpush1.bf16.msra.mxu0 %v3385
    %3517 = vmatprep.subr.bf16.mxu0 %v3382
    %3518 = vmatpush1.bf16.msra.mxu0 %v3381
    %3519 = vmatprep.subr.bf16.mxu0 %v3378
    %3520 = vmatpush1.bf16.msra.mxu0 %v3377
    %3521 = vmatprep.subr.bf16.mxu0 %v3438
    %3522 = vmatpush2.bf16.msra.mxu0 %v3437
    %3523 = vmatprep.subr.bf16.mxu0 %v3434
    %3524 = vmatpush2.bf16.msra.mxu0 %v3433
    %3525 = vmatprep.subr.bf16.mxu0 %v3430
    %3526 = vmatpush2.bf16.msra.mxu0 %v3429
    %3527 = vmatprep.subr.bf16.mxu0 %v3426
    %3528 = vmatpush2.bf16.msra.mxu0 %v3425
    %3529 = vmatprep.subr.bf16.mxu0 %v3422
    %3530 = vmatpush2.bf16.msra.mxu0 %v3421
    %3531 = vmatprep.subr.bf16.mxu0 %v3418
    %3532 = vmatpush2.bf16.msra.mxu0 %v3417
    %3533 = vmatprep.subr.bf16.mxu0 %v3414
    %3534 = vmatpush2.bf16.msra.mxu0 %v3413
    %3535 = vmatprep.subr.bf16.mxu0 %v3410
    %3536 = vmatpush2.bf16.msra.mxu0 %v3409
    %3537 = vmatprep.mubr.bf16.mxu0 %v3097
    %3538 = vmatmul.mubr.bf16.gmra.mxu0 %v3096
    %v3539 = vpop.f32.mrf.mxu0
    %v3540 = vadd.f32 %v3168, %v3539
    %v3541 = vpop.f32.mrf.mxu0
    %v3542 = vadd.f32 %v3172, %v3541
    %v3543 = vpop.f32.mrf.mxu0
    %v3544 = vpop.f32.mrf.mxu0
    %3545 = vdwg.mxu0
    %3546 = vmatprep.subr.bf16.mxu0 %v3408
    %3547 = vmatpush1.bf16.msra.mxu0 %v3407
    %3548 = vmatprep.subr.bf16.mxu0 %v3404
    %3549 = vmatpush1.bf16.msra.mxu0 %v3403
    %3550 = vmatprep.subr.bf16.mxu0 %v3400
    %3551 = vmatpush1.bf16.msra.mxu0 %v3399
    %3552 = vmatprep.subr.bf16.mxu0 %v3396
    %3553 = vmatpush1.bf16.msra.mxu0 %v3395
    %3554 = vmatprep.subr.bf16.mxu0 %v3392
    %3555 = vmatpush1.bf16.msra.mxu0 %v3391
    %3556 = vmatprep.subr.bf16.mxu0 %v3388
    %3557 = vmatpush1.bf16.msra.mxu0 %v3387
    %3558 = vmatprep.subr.bf16.mxu0 %v3384
    %3559 = vmatpush1.bf16.msra.mxu0 %v3383
    %3560 = vmatprep.subr.bf16.mxu0 %v3380
    %3561 = vmatpush1.bf16.msra.mxu0 %v3379
    %3562 = vmatprep.subr.bf16.mxu0 %v3440
    %3563 = vmatpush2.bf16.msra.mxu0 %v3439
    %3564 = vmatprep.subr.bf16.mxu0 %v3436
    %3565 = vmatpush2.bf16.msra.mxu0 %v3435
    %3566 = vmatprep.subr.bf16.mxu0 %v3432
    %3567 = vmatpush2.bf16.msra.mxu0 %v3431
    %3568 = vmatprep.subr.bf16.mxu0 %v3428
    %3569 = vmatpush2.bf16.msra.mxu0 %v3427
    %3570 = vmatprep.subr.bf16.mxu0 %v3424
    %3571 = vmatpush2.bf16.msra.mxu0 %v3423
    %3572 = vmatprep.subr.bf16.mxu0 %v3420
    %3573 = vmatpush2.bf16.msra.mxu0 %v3419
    %3574 = vmatprep.subr.bf16.mxu0 %v3416
    %3575 = vmatpush2.bf16.msra.mxu0 %v3415
    %3576 = vmatprep.subr.bf16.mxu0 %v3412
    %3577 = vmatpush2.bf16.msra.mxu0 %v3411
    %3578 = vmatprep.mubr.bf16.mxu0 %v3097
    %3579 = vmatmul.mubr.bf16.gmra.mxu0 %v3096
    %v3580 = vpop.f32.mrf.mxu0
    %v3581 = vadd.f32 %v3176, %v3580
    %v3582 = vpop.f32.mrf.mxu0
    %v3583 = vadd.f32 %v3180, %v3582
    %v3584 = vpop.f32.mrf.mxu0
    %v3585 = vpop.f32.mrf.mxu0
    %3586 = vdwg.mxu0
    %3587 = vst [vmem:[#allocation19] sm:$0xff] %v3540
    %3588 = vst [vmem:[#allocation19 + $0x8] sm:$0xff] %v3542
    %3589 = vst [vmem:[#allocation20] sm:$0xff] %v3581
    %3590 = vst [vmem:[#allocation20 + $0x8] sm:$0xff] %v3583
    %v3591 = vmul.f32 %v3581, 0.5
    %v3592 = vmul.f32 %v3583, 0.5
    %v3593 = vmul.f32 %v3591, 1.442695
    %v3594 = vpow.pop %v3593
    %v3595 = vmul.f32 %v3592, 1.442695
    %v3596 = vpow.pop %v3595
    %v3597 = vld [vmem:[%s1] sm:$0xff]
    %v3598 = vunpack.c.l.bf16 %v3597
    %v3599 = vunpack.c.h.bf16 %v3597
    %v3600 = vmul.f32 %v3594, %v3598
    %v3601 = vmul.f32 %v3596, %v3599
    %v3602 = vadd.f32 %v3540, %v3600
    %v3603 = vadd.f32 %v3542, %v3601
    %v3604 = vpack.c.bf16 %v3602, %v3602
    %v3605 = vpack.c.bf16 %v3603, %v3603
    %v3606 = vld [vmem:[%s8] sm:$0xff]
    %v3607 = vld [vmem:[%s8 + $0x8] sm:$0xff]
    %v3608 = vld [vmem:[%s8 + $0x10] sm:$0xff]
    %v3609 = vld [vmem:[%s8 + $0x18] sm:$0xff]
    %v3610 = vld [vmem:[%s8 + $0x20] sm:$0xff]
    %v3611 = vld [vmem:[%s8 + $0x28] sm:$0xff]
    %v3612 = vld [vmem:[%s8 + $0x30] sm:$0xff]
    %v3613 = vld [vmem:[%s8 + $0x38] sm:$0xff]
    %v3614 = vld [vmem:[%s8 + $0x40] sm:$0xff]
    %v3615 = vld [vmem:[%s8 + $0x48] sm:$0xff]
    %v3616 = vld [vmem:[%s8 + $0x50] sm:$0xff]
    %v3617 = vld [vmem:[%s8 + $0x58] sm:$0xff]
    %v3618 = vld [vmem:[%s8 + $0x60] sm:$0xff]
    %v3619 = vld [vmem:[%s8 + $0x68] sm:$0xff]
    %v3620 = vld [vmem:[%s8 + $0x70] sm:$0xff]
    %v3621 = vld [vmem:[%s8 + $0x78] sm:$0xff]
    %v3622 = vld [vmem:[%s8 + $0x80] sm:$0xff]
    %v3623 = vld [vmem:[%s8 + $0x88] sm:$0xff]
    %v3624 = vld [vmem:[%s8 + $0x90] sm:$0xff]
    %v3625 = vld [vmem:[%s8 + $0x98] sm:$0xff]
    %v3626 = vld [vmem:[%s8 + $0xa0] sm:$0xff]
    %v3627 = vld [vmem:[%s8 + $0xa8] sm:$0xff]
    %v3628 = vld [vmem:[%s8 + $0xb0] sm:$0xff]
    %v3629 = vld [vmem:[%s8 + $0xb8] sm:$0xff]
    %v3630 = vld [vmem:[%s8 + $0xc0] sm:$0xff]
    %v3631 = vld [vmem:[%s8 + $0xc8] sm:$0xff]
    %v3632 = vld [vmem:[%s8 + $0xd0] sm:$0xff]
    %v3633 = vld [vmem:[%s8 + $0xd8] sm:$0xff]
    %v3634 = vld [vmem:[%s8 + $0xe0] sm:$0xff]
    %v3635 = vld [vmem:[%s8 + $0xe8] sm:$0xff]
    %v3636 = vld [vmem:[%s8 + $0xf0] sm:$0xff]
    %v3637 = vld [vmem:[%s8 + $0xf8] sm:$0xff]
    %s3638 = scalar_lea.vmem [#allocation2], 5
    %v3639 = vld [vmem:[%s3638] ss:$8 sm:$0x3]
    %v3641 = vlaneseq
    %v3642 = vshrl.u32 %v3641, 7
    %v3643 = vsub.s32 0, %v3642
    %v3644 = vrot.slane %v3639, %v3643
    %v3645 = vlaneseq
    %v3646 = vshrl.u32 %v3645, 7
    %v3647 = vsub.s32 1, %v3646
    %v3648 = vrot.slane %v3639, %v3647
    %v3683 = vunpack.c.l.b16 %v3606
    %v3684 = vunpack.c.h.b16 %v3606
    %v3685 = vunpack.c.l.b16 %v3607
    %v3686 = vunpack.c.h.b16 %v3607
    %v3687 = vunpack.c.l.b16 %v3608
    %v3688 = vunpack.c.h.b16 %v3608
    %v3689 = vunpack.c.l.b16 %v3609
    %v3690 = vunpack.c.h.b16 %v3609
    %v3691 = vunpack.c.l.b16 %v3610
    %v3692 = vunpack.c.h.b16 %v3610
    %v3693 = vunpack.c.l.b16 %v3611
    %v3694 = vunpack.c.h.b16 %v3611
    %v3695 = vunpack.c.l.b16 %v3612
    %v3696 = vunpack.c.h.b16 %v3612
    %v3697 = vunpack.c.l.b16 %v3613
    %v3698 = vunpack.c.h.b16 %v3613
    %v3699 = vunpack.c.l.b16 %v3614
    %v3700 = vunpack.c.h.b16 %v3614
    %v3701 = vunpack.c.l.b16 %v3615
    %v3702 = vunpack.c.h.b16 %v3615
    %v3703 = vunpack.c.l.b16 %v3616
    %v3704 = vunpack.c.h.b16 %v3616
    %v3705 = vunpack.c.l.b16 %v3617
    %v3706 = vunpack.c.h.b16 %v3617
    %v3707 = vunpack.c.l.b16 %v3618
    %v3708 = vunpack.c.h.b16 %v3618
    %v3709 = vunpack.c.l.b16 %v3619
    %v3710 = vunpack.c.h.b16 %v3619
    %v3711 = vunpack.c.l.b16 %v3620
    %v3712 = vunpack.c.h.b16 %v3620
    %v3713 = vunpack.c.l.b16 %v3621
    %v3714 = vunpack.c.h.b16 %v3621
    %v3715 = vunpack.c.l.b16 %v3622
    %v3716 = vunpack.c.h.b16 %v3622
    %v3717 = vunpack.c.l.b16 %v3623
    %v3718 = vunpack.c.h.b16 %v3623
    %v3719 = vunpack.c.l.b16 %v3624
    %v3720 = vunpack.c.h.b16 %v3624
    %v3721 = vunpack.c.l.b16 %v3625
    %v3722 = vunpack.c.h.b16 %v3625
    %v3723 = vunpack.c.l.b16 %v3626
    %v3724 = vunpack.c.h.b16 %v3626
    %v3725 = vunpack.c.l.b16 %v3627
    %v3726 = vunpack.c.h.b16 %v3627
    %v3727 = vunpack.c.l.b16 %v3628
    %v3728 = vunpack.c.h.b16 %v3628
    %v3729 = vunpack.c.l.b16 %v3629
    %v3730 = vunpack.c.h.b16 %v3629
    %v3731 = vunpack.c.l.b16 %v3630
    %v3732 = vunpack.c.h.b16 %v3630
    %v3733 = vunpack.c.l.b16 %v3631
    %v3734 = vunpack.c.h.b16 %v3631
    %v3735 = vunpack.c.l.b16 %v3632
    %v3736 = vunpack.c.h.b16 %v3632
    %v3737 = vunpack.c.l.b16 %v3633
    %v3738 = vunpack.c.h.b16 %v3633
    %v3739 = vunpack.c.l.b16 %v3634
    %v3740 = vunpack.c.h.b16 %v3634
    %v3741 = vunpack.c.l.b16 %v3635
    %v3742 = vunpack.c.h.b16 %v3635
    %v3743 = vunpack.c.l.b16 %v3636
    %v3744 = vunpack.c.h.b16 %v3636
    %v3745 = vunpack.c.l.b16 %v3637
    %v3746 = vunpack.c.h.b16 %v3637
    %v3747 = vpack.c.b16 %v3685, %v3683
    %v3748 = vpack.c.b16 %v3686, %v3684
    %v3749 = vpack.c.b16 %v3689, %v3687
    %v3750 = vpack.c.b16 %v3690, %v3688
    %v3751 = vpack.c.b16 %v3693, %v3691
    %v3752 = vpack.c.b16 %v3694, %v3692
    %v3753 = vpack.c.b16 %v3697, %v3695
    %v3754 = vpack.c.b16 %v3698, %v3696
    %v3755 = vpack.c.b16 %v3701, %v3699
    %v3756 = vpack.c.b16 %v3702, %v3700
    %v3757 = vpack.c.b16 %v3705, %v3703
    %v3758 = vpack.c.b16 %v3706, %v3704
    %v3759 = vpack.c.b16 %v3709, %v3707
    %v3760 = vpack.c.b16 %v3710, %v3708
    %v3761 = vpack.c.b16 %v3713, %v3711
    %v3762 = vpack.c.b16 %v3714, %v3712
    %v3763 = vpack.c.b16 %v3717, %v3715
    %v3764 = vpack.c.b16 %v3718, %v3716
    %v3765 = vpack.c.b16 %v3721, %v3719
    %v3766 = vpack.c.b16 %v3722, %v3720
    %v3767 = vpack.c.b16 %v3725, %v3723
    %v3768 = vpack.c.b16 %v3726, %v3724
    %v3769 = vpack.c.b16 %v3729, %v3727
    %v3770 = vpack.c.b16 %v3730, %v3728
    %v3771 = vpack.c.b16 %v3733, %v3731
    %v3772 = vpack.c.b16 %v3734, %v3732
    %v3773 = vpack.c.b16 %v3737, %v3735
    %v3774 = vpack.c.b16 %v3738, %v3736
    %v3775 = vpack.c.b16 %v3741, %v3739
    %v3776 = vpack.c.b16 %v3742, %v3740
    %v3777 = vpack.c.b16 %v3745, %v3743
    %v3778 = vpack.c.b16 %v3746, %v3744
    %3811 = vmatprep.subr.bf16.mxu0 %v3762
    %3812 = vmatpush1.bf16.msra.mxu0 %v3761
    %3813 = vmatprep.subr.bf16.mxu0 %v3760
    %3814 = vmatpush1.bf16.msra.mxu0 %v3759
    %3815 = vmatprep.subr.bf16.mxu0 %v3758
    %3816 = vmatpush1.bf16.msra.mxu0 %v3757
    %3817 = vmatprep.subr.bf16.mxu0 %v3756
    %3818 = vmatpush1.bf16.msra.mxu0 %v3755
    %3819 = vmatprep.subr.bf16.mxu0 %v3754
    %3820 = vmatpush1.bf16.msra.mxu0 %v3753
    %3821 = vmatprep.subr.bf16.mxu0 %v3752
    %3822 = vmatpush1.bf16.msra.mxu0 %v3751
    %3823 = vmatprep.subr.bf16.mxu0 %v3750
    %3824 = vmatpush1.bf16.msra.mxu0 %v3749
    %3825 = vmatprep.subr.bf16.mxu0 %v3748
    %3826 = vmatpush1.bf16.msra.mxu0 %v3747
    %3827 = vmatprep.subr.bf16.mxu0 %v3778
    %3828 = vmatpush2.bf16.msra.mxu0 %v3777
    %3829 = vmatprep.subr.bf16.mxu0 %v3776
    %3830 = vmatpush2.bf16.msra.mxu0 %v3775
    %3831 = vmatprep.subr.bf16.mxu0 %v3774
    %3832 = vmatpush2.bf16.msra.mxu0 %v3773
    %3833 = vmatprep.subr.bf16.mxu0 %v3772
    %3834 = vmatpush2.bf16.msra.mxu0 %v3771
    %3835 = vmatprep.subr.bf16.mxu0 %v3770
    %3836 = vmatpush2.bf16.msra.mxu0 %v3769
    %3837 = vmatprep.subr.bf16.mxu0 %v3768
    %3838 = vmatpush2.bf16.msra.mxu0 %v3767
    %3839 = vmatprep.subr.bf16.mxu0 %v3766
    %3840 = vmatpush2.bf16.msra.mxu0 %v3765
    %3841 = vmatprep.subr.bf16.mxu0 %v3764
    %3842 = vmatpush2.bf16.msra.mxu0 %v3763
    %3843 = vmatprep.mubr.bf16.mxu0 %v3605
    %3844 = vmatmul.mubr.bf16.gmra.mxu0 %v3604
    %v3845 = vpop.f32.mrf.mxu0
    %v3846 = vadd.f32 %v3644, %v3845
    %v3847 = vpop.f32.mrf.mxu0
    %v3848 = vadd.f32 %v3648, %v3847
    %v3849 = vpop.f32.mrf.mxu0
    %v3850 = vpop.f32.mrf.mxu0
    %3851 = vdwg.mxu0
    %v3852 = vmax.f32 %v3846, 0.0
    %v3853 = vmax.f32 %v3848, 0.0
    %v3854 = vpack.c.bf16 %v3852, %v3852
    %v3855 = vpack.c.bf16 %v3853, %v3853
    %v3856 = vld [vmem:[#allocation13] sm:$0xff]
    %v3857 = vld [vmem:[#allocation13 + $0x8] sm:$0xff]
    %v3858 = vld [vmem:[#allocation13 + $0x10] sm:$0xff]
    %v3859 = vld [vmem:[#allocation13 + $0x18] sm:$0xff]
    %v3860 = vld [vmem:[#allocation13 + $0x20] sm:$0xff]
    %v3861 = vld [vmem:[#allocation13 + $0x28] sm:$0xff]
    %v3862 = vld [vmem:[#allocation13 + $0x30] sm:$0xff]
    %v3863 = vld [vmem:[#allocation13 + $0x38] sm:$0xff]
    %v3864 = vld [vmem:[#allocation13 + $0x40] sm:$0xff]
    %v3865 = vld [vmem:[#allocation13 + $0x48] sm:$0xff]
    %v3866 = vld [vmem:[#allocation13 + $0x50] sm:$0xff]
    %v3867 = vld [vmem:[#allocation13 + $0x58] sm:$0xff]
    %v3868 = vld [vmem:[#allocation13 + $0x60] sm:$0xff]
    %v3869 = vld [vmem:[#allocation13 + $0x68] sm:$0xff]
    %v3870 = vld [vmem:[#allocation13 + $0x70] sm:$0xff]
    %v3871 = vld [vmem:[#allocation13 + $0x78] sm:$0xff]
    %v3872 = vld [vmem:[#allocation13 + $0x80] sm:$0xff]
    %v3873 = vld [vmem:[#allocation13 + $0x88] sm:$0xff]
    %v3874 = vld [vmem:[#allocation13 + $0x90] sm:$0xff]
    %v3875 = vld [vmem:[#allocation13 + $0x98] sm:$0xff]
    %v3876 = vld [vmem:[#allocation13 + $0xa0] sm:$0xff]
    %v3877 = vld [vmem:[#allocation13 + $0xa8] sm:$0xff]
    %v3878 = vld [vmem:[#allocation13 + $0xb0] sm:$0xff]
    %v3879 = vld [vmem:[#allocation13 + $0xb8] sm:$0xff]
    %v3880 = vld [vmem:[#allocation13 + $0xc0] sm:$0xff]
    %v3881 = vld [vmem:[#allocation13 + $0xc8] sm:$0xff]
    %v3882 = vld [vmem:[#allocation13 + $0xd0] sm:$0xff]
    %v3883 = vld [vmem:[#allocation13 + $0xd8] sm:$0xff]
    %v3884 = vld [vmem:[#allocation13 + $0xe0] sm:$0xff]
    %v3885 = vld [vmem:[#allocation13 + $0xe8] sm:$0xff]
    %v3886 = vld [vmem:[#allocation13 + $0xf0] sm:$0xff]
    %v3887 = vld [vmem:[#allocation13 + $0xf8] sm:$0xff]
    %v3888 = vld [vmem:[#allocation13 + $0x100] sm:$0xff]
    %v3889 = vld [vmem:[#allocation13 + $0x108] sm:$0xff]
    %v3890 = vld [vmem:[#allocation13 + $0x110] sm:$0xff]
    %v3891 = vld [vmem:[#allocation13 + $0x118] sm:$0xff]
    %v3892 = vld [vmem:[#allocation13 + $0x120] sm:$0xff]
    %v3893 = vld [vmem:[#allocation13 + $0x128] sm:$0xff]
    %v3894 = vld [vmem:[#allocation13 + $0x130] sm:$0xff]
    %v3895 = vld [vmem:[#allocation13 + $0x138] sm:$0xff]
    %v3896 = vld [vmem:[#allocation13 + $0x140] sm:$0xff]
    %v3897 = vld [vmem:[#allocation13 + $0x148] sm:$0xff]
    %v3898 = vld [vmem:[#allocation13 + $0x150] sm:$0xff]
    %v3899 = vld [vmem:[#allocation13 + $0x158] sm:$0xff]
    %v3900 = vld [vmem:[#allocation13 + $0x160] sm:$0xff]
    %v3901 = vld [vmem:[#allocation13 + $0x168] sm:$0xff]
    %v3902 = vld [vmem:[#allocation13 + $0x170] sm:$0xff]
    %v3903 = vld [vmem:[#allocation13 + $0x178] sm:$0xff]
    %v3904 = vld [vmem:[#allocation13 + $0x180] sm:$0xff]
    %v3905 = vld [vmem:[#allocation13 + $0x188] sm:$0xff]
    %v3906 = vld [vmem:[#allocation13 + $0x190] sm:$0xff]
    %v3907 = vld [vmem:[#allocation13 + $0x198] sm:$0xff]
    %v3908 = vld [vmem:[#allocation13 + $0x1a0] sm:$0xff]
    %v3909 = vld [vmem:[#allocation13 + $0x1a8] sm:$0xff]
    %v3910 = vld [vmem:[#allocation13 + $0x1b0] sm:$0xff]
    %v3911 = vld [vmem:[#allocation13 + $0x1b8] sm:$0xff]
    %v3912 = vld [vmem:[#allocation13 + $0x1c0] sm:$0xff]
    %v3913 = vld [vmem:[#allocation13 + $0x1c8] sm:$0xff]
    %v3914 = vld [vmem:[#allocation13 + $0x1d0] sm:$0xff]
    %v3915 = vld [vmem:[#allocation13 + $0x1d8] sm:$0xff]
    %v3916 = vld [vmem:[#allocation13 + $0x1e0] sm:$0xff]
    %v3917 = vld [vmem:[#allocation13 + $0x1e8] sm:$0xff]
    %v3918 = vld [vmem:[#allocation13 + $0x1f0] sm:$0xff]
    %v3919 = vld [vmem:[#allocation13 + $0x1f8] sm:$0xff]
    %s3920 = scalar_lea.vmem [#allocation2], 6
    %v3921 = vld [vmem:[%s3920] ss:$8 sm:$0xf]
    %v3923 = vlaneseq
    %v3924 = vshrl.u32 %v3923, 7
    %v3925 = vsub.s32 0, %v3924
    %v3926 = vrot.slane %v3921, %v3925
    %v3927 = vlaneseq
    %v3928 = vshrl.u32 %v3927, 7
    %v3929 = vsub.s32 1, %v3928
    %v3930 = vrot.slane %v3921, %v3929
    %v3931 = vlaneseq
    %v3932 = vshrl.u32 %v3931, 7
    %v3933 = vsub.s32 2, %v3932
    %v3934 = vrot.slane %v3921, %v3933
    %v3935 = vlaneseq
    %v3936 = vshrl.u32 %v3935, 7
    %v3937 = vsub.s32 3, %v3936
    %v3938 = vrot.slane %v3921, %v3937
    %v4007 = vunpack.c.l.b16 %v3856
    %v4008 = vunpack.c.h.b16 %v3856
    %v4009 = vunpack.c.l.b16 %v3857
    %v4010 = vunpack.c.h.b16 %v3857
    %v4011 = vunpack.c.l.b16 %v3858
    %v4012 = vunpack.c.h.b16 %v3858
    %v4013 = vunpack.c.l.b16 %v3859
    %v4014 = vunpack.c.h.b16 %v3859
    %v4015 = vunpack.c.l.b16 %v3860
    %v4016 = vunpack.c.h.b16 %v3860
    %v4017 = vunpack.c.l.b16 %v3861
    %v4018 = vunpack.c.h.b16 %v3861
    %v4019 = vunpack.c.l.b16 %v3862
    %v4020 = vunpack.c.h.b16 %v3862
    %v4021 = vunpack.c.l.b16 %v3863
    %v4022 = vunpack.c.h.b16 %v3863
    %v4023 = vunpack.c.l.b16 %v3864
    %v4024 = vunpack.c.h.b16 %v3864
    %v4025 = vunpack.c.l.b16 %v3865
    %v4026 = vunpack.c.h.b16 %v3865
    %v4027 = vunpack.c.l.b16 %v3866
    %v4028 = vunpack.c.h.b16 %v3866
    %v4029 = vunpack.c.l.b16 %v3867
    %v4030 = vunpack.c.h.b16 %v3867
    %v4031 = vunpack.c.l.b16 %v3868
    %v4032 = vunpack.c.h.b16 %v3868
    %v4033 = vunpack.c.l.b16 %v3869
    %v4034 = vunpack.c.h.b16 %v3869
    %v4035 = vunpack.c.l.b16 %v3870
    %v4036 = vunpack.c.h.b16 %v3870
    %v4037 = vunpack.c.l.b16 %v3871
    %v4038 = vunpack.c.h.b16 %v3871
    %v4039 = vunpack.c.l.b16 %v3872
    %v4040 = vunpack.c.h.b16 %v3872
    %v4041 = vunpack.c.l.b16 %v3873
    %v4042 = vunpack.c.h.b16 %v3873
    %v4043 = vunpack.c.l.b16 %v3874
    %v4044 = vunpack.c.h.b16 %v3874
    %v4045 = vunpack.c.l.b16 %v3875
    %v4046 = vunpack.c.h.b16 %v3875
    %v4047 = vunpack.c.l.b16 %v3876
    %v4048 = vunpack.c.h.b16 %v3876
    %v4049 = vunpack.c.l.b16 %v3877
    %v4050 = vunpack.c.h.b16 %v3877
    %v4051 = vunpack.c.l.b16 %v3878
    %v4052 = vunpack.c.h.b16 %v3878
    %v4053 = vunpack.c.l.b16 %v3879
    %v4054 = vunpack.c.h.b16 %v3879
    %v4055 = vunpack.c.l.b16 %v3880
    %v4056 = vunpack.c.h.b16 %v3880
    %v4057 = vunpack.c.l.b16 %v3881
    %v4058 = vunpack.c.h.b16 %v3881
    %v4059 = vunpack.c.l.b16 %v3882
    %v4060 = vunpack.c.h.b16 %v3882
    %v4061 = vunpack.c.l.b16 %v3883
    %v4062 = vunpack.c.h.b16 %v3883
    %v4063 = vunpack.c.l.b16 %v3884
    %v4064 = vunpack.c.h.b16 %v3884
    %v4065 = vunpack.c.l.b16 %v3885
    %v4066 = vunpack.c.h.b16 %v3885
    %v4067 = vunpack.c.l.b16 %v3886
    %v4068 = vunpack.c.h.b16 %v3886
    %v4069 = vunpack.c.l.b16 %v3887
    %v4070 = vunpack.c.h.b16 %v3887
    %v4071 = vunpack.c.l.b16 %v3888
    %v4072 = vunpack.c.h.b16 %v3888
    %v4073 = vunpack.c.l.b16 %v3889
    %v4074 = vunpack.c.h.b16 %v3889
    %v4075 = vunpack.c.l.b16 %v3890
    %v4076 = vunpack.c.h.b16 %v3890
    %v4077 = vunpack.c.l.b16 %v3891
    %v4078 = vunpack.c.h.b16 %v3891
    %v4079 = vunpack.c.l.b16 %v3892
    %v4080 = vunpack.c.h.b16 %v3892
    %v4081 = vunpack.c.l.b16 %v3893
    %v4082 = vunpack.c.h.b16 %v3893
    %v4083 = vunpack.c.l.b16 %v3894
    %v4084 = vunpack.c.h.b16 %v3894
    %v4085 = vunpack.c.l.b16 %v3895
    %v4086 = vunpack.c.h.b16 %v3895
    %v4087 = vunpack.c.l.b16 %v3896
    %v4088 = vunpack.c.h.b16 %v3896
    %v4089 = vunpack.c.l.b16 %v3897
    %v4090 = vunpack.c.h.b16 %v3897
    %v4091 = vunpack.c.l.b16 %v3898
    %v4092 = vunpack.c.h.b16 %v3898
    %v4093 = vunpack.c.l.b16 %v3899
    %v4094 = vunpack.c.h.b16 %v3899
    %v4095 = vunpack.c.l.b16 %v3900
    %v4096 = vunpack.c.h.b16 %v3900
    %v4097 = vunpack.c.l.b16 %v3901
    %v4098 = vunpack.c.h.b16 %v3901
    %v4099 = vunpack.c.l.b16 %v3902
    %v4100 = vunpack.c.h.b16 %v3902
    %v4101 = vunpack.c.l.b16 %v3903
    %v4102 = vunpack.c.h.b16 %v3903
    %v4103 = vunpack.c.l.b16 %v3904
    %v4104 = vunpack.c.h.b16 %v3904
    %v4105 = vunpack.c.l.b16 %v3905
    %v4106 = vunpack.c.h.b16 %v3905
    %v4107 = vunpack.c.l.b16 %v3906
    %v4108 = vunpack.c.h.b16 %v3906
    %v4109 = vunpack.c.l.b16 %v3907
    %v4110 = vunpack.c.h.b16 %v3907
    %v4111 = vunpack.c.l.b16 %v3908
    %v4112 = vunpack.c.h.b16 %v3908
    %v4113 = vunpack.c.l.b16 %v3909
    %v4114 = vunpack.c.h.b16 %v3909
    %v4115 = vunpack.c.l.b16 %v3910
    %v4116 = vunpack.c.h.b16 %v3910
    %v4117 = vunpack.c.l.b16 %v3911
    %v4118 = vunpack.c.h.b16 %v3911
    %v4119 = vunpack.c.l.b16 %v3912
    %v4120 = vunpack.c.h.b16 %v3912
    %v4121 = vunpack.c.l.b16 %v3913
    %v4122 = vunpack.c.h.b16 %v3913
    %v4123 = vunpack.c.l.b16 %v3914
    %v4124 = vunpack.c.h.b16 %v3914
    %v4125 = vunpack.c.l.b16 %v3915
    %v4126 = vunpack.c.h.b16 %v3915
    %v4127 = vunpack.c.l.b16 %v3916
    %v4128 = vunpack.c.h.b16 %v3916
    %v4129 = vunpack.c.l.b16 %v3917
    %v4130 = vunpack.c.h.b16 %v3917
    %v4131 = vunpack.c.l.b16 %v3918
    %v4132 = vunpack.c.h.b16 %v3918
    %v4133 = vunpack.c.l.b16 %v3919
    %v4134 = vunpack.c.h.b16 %v3919
    %v4135 = vpack.c.b16 %v4011, %v4007
    %v4136 = vpack.c.b16 %v4012, %v4008
    %v4137 = vpack.c.b16 %v4013, %v4009
    %v4138 = vpack.c.b16 %v4014, %v4010
    %v4139 = vpack.c.b16 %v4019, %v4015
    %v4140 = vpack.c.b16 %v4020, %v4016
    %v4141 = vpack.c.b16 %v4021, %v4017
    %v4142 = vpack.c.b16 %v4022, %v4018
    %v4143 = vpack.c.b16 %v4027, %v4023
    %v4144 = vpack.c.b16 %v4028, %v4024
    %v4145 = vpack.c.b16 %v4029, %v4025
    %v4146 = vpack.c.b16 %v4030, %v4026
    %v4147 = vpack.c.b16 %v4035, %v4031
    %v4148 = vpack.c.b16 %v4036, %v4032
    %v4149 = vpack.c.b16 %v4037, %v4033
    %v4150 = vpack.c.b16 %v4038, %v4034
    %v4151 = vpack.c.b16 %v4043, %v4039
    %v4152 = vpack.c.b16 %v4044, %v4040
    %v4153 = vpack.c.b16 %v4045, %v4041
    %v4154 = vpack.c.b16 %v4046, %v4042
    %v4155 = vpack.c.b16 %v4051, %v4047
    %v4156 = vpack.c.b16 %v4052, %v4048
    %v4157 = vpack.c.b16 %v4053, %v4049
    %v4158 = vpack.c.b16 %v4054, %v4050
    %v4159 = vpack.c.b16 %v4059, %v4055
    %v4160 = vpack.c.b16 %v4060, %v4056
    %v4161 = vpack.c.b16 %v4061, %v4057
    %v4162 = vpack.c.b16 %v4062, %v4058
    %v4163 = vpack.c.b16 %v4067, %v4063
    %v4164 = vpack.c.b16 %v4068, %v4064
    %v4165 = vpack.c.b16 %v4069, %v4065
    %v4166 = vpack.c.b16 %v4070, %v4066
    %v4167 = vpack.c.b16 %v4075, %v4071
    %v4168 = vpack.c.b16 %v4076, %v4072
    %v4169 = vpack.c.b16 %v4077, %v4073
    %v4170 = vpack.c.b16 %v4078, %v4074
    %v4171 = vpack.c.b16 %v4083, %v4079
    %v4172 = vpack.c.b16 %v4084, %v4080
    %v4173 = vpack.c.b16 %v4085, %v4081
    %v4174 = vpack.c.b16 %v4086, %v4082
    %v4175 = vpack.c.b16 %v4091, %v4087
    %v4176 = vpack.c.b16 %v4092, %v4088
    %v4177 = vpack.c.b16 %v4093, %v4089
    %v4178 = vpack.c.b16 %v4094, %v4090
    %v4179 = vpack.c.b16 %v4099, %v4095
    %v4180 = vpack.c.b16 %v4100, %v4096
    %v4181 = vpack.c.b16 %v4101, %v4097
    %v4182 = vpack.c.b16 %v4102, %v4098
    %v4183 = vpack.c.b16 %v4107, %v4103
    %v4184 = vpack.c.b16 %v4108, %v4104
    %v4185 = vpack.c.b16 %v4109, %v4105
    %v4186 = vpack.c.b16 %v4110, %v4106
    %v4187 = vpack.c.b16 %v4115, %v4111
    %v4188 = vpack.c.b16 %v4116, %v4112
    %v4189 = vpack.c.b16 %v4117, %v4113
    %v4190 = vpack.c.b16 %v4118, %v4114
    %v4191 = vpack.c.b16 %v4123, %v4119
    %v4192 = vpack.c.b16 %v4124, %v4120
    %v4193 = vpack.c.b16 %v4125, %v4121
    %v4194 = vpack.c.b16 %v4126, %v4122
    %v4195 = vpack.c.b16 %v4131, %v4127
    %v4196 = vpack.c.b16 %v4132, %v4128
    %v4197 = vpack.c.b16 %v4133, %v4129
    %v4198 = vpack.c.b16 %v4134, %v4130
    %4263 = vmatprep.subr.bf16.mxu0 %v4164
    %4264 = vmatpush1.bf16.msra.mxu0 %v4163
    %4265 = vmatprep.subr.bf16.mxu0 %v4160
    %4266 = vmatpush1.bf16.msra.mxu0 %v4159
    %4267 = vmatprep.subr.bf16.mxu0 %v4156
    %4268 = vmatpush1.bf16.msra.mxu0 %v4155
    %4269 = vmatprep.subr.bf16.mxu0 %v4152
    %4270 = vmatpush1.bf16.msra.mxu0 %v4151
    %4271 = vmatprep.subr.bf16.mxu0 %v4148
    %4272 = vmatpush1.bf16.msra.mxu0 %v4147
    %4273 = vmatprep.subr.bf16.mxu0 %v4144
    %4274 = vmatpush1.bf16.msra.mxu0 %v4143
    %4275 = vmatprep.subr.bf16.mxu0 %v4140
    %4276 = vmatpush1.bf16.msra.mxu0 %v4139
    %4277 = vmatprep.subr.bf16.mxu0 %v4136
    %4278 = vmatpush1.bf16.msra.mxu0 %v4135
    %4279 = vmatprep.subr.bf16.mxu0 %v4196
    %4280 = vmatpush2.bf16.msra.mxu0 %v4195
    %4281 = vmatprep.subr.bf16.mxu0 %v4192
    %4282 = vmatpush2.bf16.msra.mxu0 %v4191
    %4283 = vmatprep.subr.bf16.mxu0 %v4188
    %4284 = vmatpush2.bf16.msra.mxu0 %v4187
    %4285 = vmatprep.subr.bf16.mxu0 %v4184
    %4286 = vmatpush2.bf16.msra.mxu0 %v4183
    %4287 = vmatprep.subr.bf16.mxu0 %v4180
    %4288 = vmatpush2.bf16.msra.mxu0 %v4179
    %4289 = vmatprep.subr.bf16.mxu0 %v4176
    %4290 = vmatpush2.bf16.msra.mxu0 %v4175
    %4291 = vmatprep.subr.bf16.mxu0 %v4172
    %4292 = vmatpush2.bf16.msra.mxu0 %v4171
    %4293 = vmatprep.subr.bf16.mxu0 %v4168
    %4294 = vmatpush2.bf16.msra.mxu0 %v4167
    %4295 = vmatprep.mubr.bf16.mxu0 %v3855
    %4296 = vmatmul.mubr.bf16.gmra.mxu0 %v3854
    %v4297 = vpop.f32.mrf.mxu0
    %v4298 = vadd.f32 %v3926, %v4297
    %v4299 = vpop.f32.mrf.mxu0
    %v4300 = vadd.f32 %v3930, %v4299
    %v4301 = vpop.f32.mrf.mxu0
    %v4302 = vpop.f32.mrf.mxu0
    %4303 = vdwg.mxu0
    %4304 = vmatprep.subr.bf16.mxu0 %v4166
    %4305 = vmatpush1.bf16.msra.mxu0 %v4165
    %4306 = vmatprep.subr.bf16.mxu0 %v4162
    %4307 = vmatpush1.bf16.msra.mxu0 %v4161
    %4308 = vmatprep.subr.bf16.mxu0 %v4158
    %4309 = vmatpush1.bf16.msra.mxu0 %v4157
    %4310 = vmatprep.subr.bf16.mxu0 %v4154
    %4311 = vmatpush1.bf16.msra.mxu0 %v4153
    %4312 = vmatprep.subr.bf16.mxu0 %v4150
    %4313 = vmatpush1.bf16.msra.mxu0 %v4149
    %4314 = vmatprep.subr.bf16.mxu0 %v4146
    %4315 = vmatpush1.bf16.msra.mxu0 %v4145
    %4316 = vmatprep.subr.bf16.mxu0 %v4142
    %4317 = vmatpush1.bf16.msra.mxu0 %v4141
    %4318 = vmatprep.subr.bf16.mxu0 %v4138
    %4319 = vmatpush1.bf16.msra.mxu0 %v4137
    %4320 = vmatprep.subr.bf16.mxu0 %v4198
    %4321 = vmatpush2.bf16.msra.mxu0 %v4197
    %4322 = vmatprep.subr.bf16.mxu0 %v4194
    %4323 = vmatpush2.bf16.msra.mxu0 %v4193
    %4324 = vmatprep.subr.bf16.mxu0 %v4190
    %4325 = vmatpush2.bf16.msra.mxu0 %v4189
    %4326 = vmatprep.subr.bf16.mxu0 %v4186
    %4327 = vmatpush2.bf16.msra.mxu0 %v4185
    %4328 = vmatprep.subr.bf16.mxu0 %v4182
    %4329 = vmatpush2.bf16.msra.mxu0 %v4181
    %4330 = vmatprep.subr.bf16.mxu0 %v4178
    %4331 = vmatpush2.bf16.msra.mxu0 %v4177
    %4332 = vmatprep.subr.bf16.mxu0 %v4174
    %4333 = vmatpush2.bf16.msra.mxu0 %v4173
    %4334 = vmatprep.subr.bf16.mxu0 %v4170
    %4335 = vmatpush2.bf16.msra.mxu0 %v4169
    %4336 = vmatprep.mubr.bf16.mxu0 %v3855
    %4337 = vmatmul.mubr.bf16.gmra.mxu0 %v3854
    %v4338 = vpop.f32.mrf.mxu0
    %v4339 = vadd.f32 %v3934, %v4338
    %v4340 = vpop.f32.mrf.mxu0
    %v4341 = vadd.f32 %v3938, %v4340
    %v4342 = vpop.f32.mrf.mxu0
    %v4343 = vpop.f32.mrf.mxu0
    %4344 = vdwg.mxu0
    %v4345 = vmax.f32 %v4298, 0.0
    %v4346 = vmax.f32 %v4300, 0.0
    %v4347 = vmax.f32 %v4339, 0.0
    %v4348 = vmax.f32 %v4341, 0.0
    %v4349 = vpack.c.bf16 %v4345, %v4345
    %v4350 = vpack.c.bf16 %v4346, %v4346
    %v4351 = vpack.c.bf16 %v4347, %v4347
    %v4352 = vpack.c.bf16 %v4348, %v4348
    %v4353 = vld [vmem:[#allocation14] sm:$0xff]
    %v4354 = vld [vmem:[#allocation14 + $0x8] sm:$0xff]
    %v4355 = vld [vmem:[#allocation14 + $0x10] sm:$0xff]
    %v4356 = vld [vmem:[#allocation14 + $0x18] sm:$0xff]
    %v4357 = vld [vmem:[#allocation14 + $0x20] sm:$0xff]
    %v4358 = vld [vmem:[#allocation14 + $0x28] sm:$0xff]
    %v4359 = vld [vmem:[#allocation14 + $0x30] sm:$0xff]
    %v4360 = vld [vmem:[#allocation14 + $0x38] sm:$0xff]
    %v4361 = vld [vmem:[#allocation14 + $0x40] sm:$0xff]
    %v4362 = vld [vmem:[#allocation14 + $0x48] sm:$0xff]
    %v4363 = vld [vmem:[#allocation14 + $0x50] sm:$0xff]
    %v4364 = vld [vmem:[#allocation14 + $0x58] sm:$0xff]
    %v4365 = vld [vmem:[#allocation14 + $0x60] sm:$0xff]
    %v4366 = vld [vmem:[#allocation14 + $0x68] sm:$0xff]
    %v4367 = vld [vmem:[#allocation14 + $0x70] sm:$0xff]
    %v4368 = vld [vmem:[#allocation14 + $0x78] sm:$0xff]
    %v4369 = vld [vmem:[#allocation14 + $0x80] sm:$0xff]
    %v4370 = vld [vmem:[#allocation14 + $0x88] sm:$0xff]
    %v4371 = vld [vmem:[#allocation14 + $0x90] sm:$0xff]
    %v4372 = vld [vmem:[#allocation14 + $0x98] sm:$0xff]
    %v4373 = vld [vmem:[#allocation14 + $0xa0] sm:$0xff]
    %v4374 = vld [vmem:[#allocation14 + $0xa8] sm:$0xff]
    %v4375 = vld [vmem:[#allocation14 + $0xb0] sm:$0xff]
    %v4376 = vld [vmem:[#allocation14 + $0xb8] sm:$0xff]
    %v4377 = vld [vmem:[#allocation14 + $0xc0] sm:$0xff]
    %v4378 = vld [vmem:[#allocation14 + $0xc8] sm:$0xff]
    %v4379 = vld [vmem:[#allocation14 + $0xd0] sm:$0xff]
    %v4380 = vld [vmem:[#allocation14 + $0xd8] sm:$0xff]
    %v4381 = vld [vmem:[#allocation14 + $0xe0] sm:$0xff]
    %v4382 = vld [vmem:[#allocation14 + $0xe8] sm:$0xff]
    %v4383 = vld [vmem:[#allocation14 + $0xf0] sm:$0xff]
    %v4384 = vld [vmem:[#allocation14 + $0xf8] sm:$0xff]
    %v4385 = vld [vmem:[#allocation14 + $0x100] sm:$0xff]
    %v4386 = vld [vmem:[#allocation14 + $0x108] sm:$0xff]
    %v4387 = vld [vmem:[#allocation14 + $0x110] sm:$0xff]
    %v4388 = vld [vmem:[#allocation14 + $0x118] sm:$0xff]
    %v4389 = vld [vmem:[#allocation14 + $0x120] sm:$0xff]
    %v4390 = vld [vmem:[#allocation14 + $0x128] sm:$0xff]
    %v4391 = vld [vmem:[#allocation14 + $0x130] sm:$0xff]
    %v4392 = vld [vmem:[#allocation14 + $0x138] sm:$0xff]
    %v4393 = vld [vmem:[#allocation14 + $0x140] sm:$0xff]
    %v4394 = vld [vmem:[#allocation14 + $0x148] sm:$0xff]
    %v4395 = vld [vmem:[#allocation14 + $0x150] sm:$0xff]
    %v4396 = vld [vmem:[#allocation14 + $0x158] sm:$0xff]
    %v4397 = vld [vmem:[#allocation14 + $0x160] sm:$0xff]
    %v4398 = vld [vmem:[#allocation14 + $0x168] sm:$0xff]
    %v4399 = vld [vmem:[#allocation14 + $0x170] sm:$0xff]
    %v4400 = vld [vmem:[#allocation14 + $0x178] sm:$0xff]
    %v4401 = vld [vmem:[#allocation14 + $0x180] sm:$0xff]
    %v4402 = vld [vmem:[#allocation14 + $0x188] sm:$0xff]
    %v4403 = vld [vmem:[#allocation14 + $0x190] sm:$0xff]
    %v4404 = vld [vmem:[#allocation14 + $0x198] sm:$0xff]
    %v4405 = vld [vmem:[#allocation14 + $0x1a0] sm:$0xff]
    %v4406 = vld [vmem:[#allocation14 + $0x1a8] sm:$0xff]
    %v4407 = vld [vmem:[#allocation14 + $0x1b0] sm:$0xff]
    %v4408 = vld [vmem:[#allocation14 + $0x1b8] sm:$0xff]
    %v4409 = vld [vmem:[#allocation14 + $0x1c0] sm:$0xff]
    %v4410 = vld [vmem:[#allocation14 + $0x1c8] sm:$0xff]
    %v4411 = vld [vmem:[#allocation14 + $0x1d0] sm:$0xff]
    %v4412 = vld [vmem:[#allocation14 + $0x1d8] sm:$0xff]
    %v4413 = vld [vmem:[#allocation14 + $0x1e0] sm:$0xff]
    %v4414 = vld [vmem:[#allocation14 + $0x1e8] sm:$0xff]
    %v4415 = vld [vmem:[#allocation14 + $0x1f0] sm:$0xff]
    %v4416 = vld [vmem:[#allocation14 + $0x1f8] sm:$0xff]
    %v4417 = vld [vmem:[#allocation14 + $0x200] sm:$0xff]
    %v4418 = vld [vmem:[#allocation14 + $0x208] sm:$0xff]
    %v4419 = vld [vmem:[#allocation14 + $0x210] sm:$0xff]
    %v4420 = vld [vmem:[#allocation14 + $0x218] sm:$0xff]
    %v4421 = vld [vmem:[#allocation14 + $0x220] sm:$0xff]
    %v4422 = vld [vmem:[#allocation14 + $0x228] sm:$0xff]
    %v4423 = vld [vmem:[#allocation14 + $0x230] sm:$0xff]
    %v4424 = vld [vmem:[#allocation14 + $0x238] sm:$0xff]
    %v4425 = vld [vmem:[#allocation14 + $0x240] sm:$0xff]
    %v4426 = vld [vmem:[#allocation14 + $0x248] sm:$0xff]
    %v4427 = vld [vmem:[#allocation14 + $0x250] sm:$0xff]
    %v4428 = vld [vmem:[#allocation14 + $0x258] sm:$0xff]
    %v4429 = vld [vmem:[#allocation14 + $0x260] sm:$0xff]
    %v4430 = vld [vmem:[#allocation14 + $0x268] sm:$0xff]
    %v4431 = vld [vmem:[#allocation14 + $0x270] sm:$0xff]
    %v4432 = vld [vmem:[#allocation14 + $0x278] sm:$0xff]
    %v4433 = vld [vmem:[#allocation14 + $0x280] sm:$0xff]
    %v4434 = vld [vmem:[#allocation14 + $0x288] sm:$0xff]
    %v4435 = vld [vmem:[#allocation14 + $0x290] sm:$0xff]
    %v4436 = vld [vmem:[#allocation14 + $0x298] sm:$0xff]
    %v4437 = vld [vmem:[#allocation14 + $0x2a0] sm:$0xff]
    %v4438 = vld [vmem:[#allocation14 + $0x2a8] sm:$0xff]
    %v4439 = vld [vmem:[#allocation14 + $0x2b0] sm:$0xff]
    %v4440 = vld [vmem:[#allocation14 + $0x2b8] sm:$0xff]
    %v4441 = vld [vmem:[#allocation14 + $0x2c0] sm:$0xff]
    %v4442 = vld [vmem:[#allocation14 + $0x2c8] sm:$0xff]
    %v4443 = vld [vmem:[#allocation14 + $0x2d0] sm:$0xff]
    %v4444 = vld [vmem:[#allocation14 + $0x2d8] sm:$0xff]
    %v4445 = vld [vmem:[#allocation14 + $0x2e0] sm:$0xff]
    %v4446 = vld [vmem:[#allocation14 + $0x2e8] sm:$0xff]
    %v4447 = vld [vmem:[#allocation14 + $0x2f0] sm:$0xff]
    %v4448 = vld [vmem:[#allocation14 + $0x2f8] sm:$0xff]
    %v4449 = vld [vmem:[#allocation14 + $0x300] sm:$0xff]
    %v4450 = vld [vmem:[#allocation14 + $0x308] sm:$0xff]
    %v4451 = vld [vmem:[#allocation14 + $0x310] sm:$0xff]
    %v4452 = vld [vmem:[#allocation14 + $0x318] sm:$0xff]
    %v4453 = vld [vmem:[#allocation14 + $0x320] sm:$0xff]
    %v4454 = vld [vmem:[#allocation14 + $0x328] sm:$0xff]
    %v4455 = vld [vmem:[#allocation14 + $0x330] sm:$0xff]
    %v4456 = vld [vmem:[#allocation14 + $0x338] sm:$0xff]
    %v4457 = vld [vmem:[#allocation14 + $0x340] sm:$0xff]
    %v4458 = vld [vmem:[#allocation14 + $0x348] sm:$0xff]
    %v4459 = vld [vmem:[#allocation14 + $0x350] sm:$0xff]
    %v4460 = vld [vmem:[#allocation14 + $0x358] sm:$0xff]
    %v4461 = vld [vmem:[#allocation14 + $0x360] sm:$0xff]
    %v4462 = vld [vmem:[#allocation14 + $0x368] sm:$0xff]
    %v4463 = vld [vmem:[#allocation14 + $0x370] sm:$0xff]
    %v4464 = vld [vmem:[#allocation14 + $0x378] sm:$0xff]
    %v4465 = vld [vmem:[#allocation14 + $0x380] sm:$0xff]
    %v4466 = vld [vmem:[#allocation14 + $0x388] sm:$0xff]
    %v4467 = vld [vmem:[#allocation14 + $0x390] sm:$0xff]
    %v4468 = vld [vmem:[#allocation14 + $0x398] sm:$0xff]
    %v4469 = vld [vmem:[#allocation14 + $0x3a0] sm:$0xff]
    %v4470 = vld [vmem:[#allocation14 + $0x3a8] sm:$0xff]
    %v4471 = vld [vmem:[#allocation14 + $0x3b0] sm:$0xff]
    %v4472 = vld [vmem:[#allocation14 + $0x3b8] sm:$0xff]
    %v4473 = vld [vmem:[#allocation14 + $0x3c0] sm:$0xff]
    %v4474 = vld [vmem:[#allocation14 + $0x3c8] sm:$0xff]
    %v4475 = vld [vmem:[#allocation14 + $0x3d0] sm:$0xff]
    %v4476 = vld [vmem:[#allocation14 + $0x3d8] sm:$0xff]
    %v4477 = vld [vmem:[#allocation14 + $0x3e0] sm:$0xff]
    %v4478 = vld [vmem:[#allocation14 + $0x3e8] sm:$0xff]
    %v4479 = vld [vmem:[#allocation14 + $0x3f0] sm:$0xff]
    %v4480 = vld [vmem:[#allocation14 + $0x3f8] sm:$0xff]
    %s4481 = scalar_lea.vmem [#allocation2], 7
    %v4482 = vld [vmem:[%s4481] ss:$8 sm:$0xf]
    %v4484 = vlaneseq
    %v4485 = vshrl.u32 %v4484, 7
    %v4486 = vsub.s32 0, %v4485
    %v4487 = vrot.slane %v4482, %v4486
    %v4488 = vlaneseq
    %v4489 = vshrl.u32 %v4488, 7
    %v4490 = vsub.s32 1, %v4489
    %v4491 = vrot.slane %v4482, %v4490
    %v4492 = vlaneseq
    %v4493 = vshrl.u32 %v4492, 7
    %v4494 = vsub.s32 2, %v4493
    %v4495 = vrot.slane %v4482, %v4494
    %v4496 = vlaneseq
    %v4497 = vshrl.u32 %v4496, 7
    %v4498 = vsub.s32 3, %v4497
    %v4499 = vrot.slane %v4482, %v4498
    %v4632 = vunpack.c.l.b16 %v4353
    %v4633 = vunpack.c.h.b16 %v4353
    %v4634 = vunpack.c.l.b16 %v4354
    %v4635 = vunpack.c.h.b16 %v4354
    %v4636 = vunpack.c.l.b16 %v4355
    %v4637 = vunpack.c.h.b16 %v4355
    %v4638 = vunpack.c.l.b16 %v4356
    %v4639 = vunpack.c.h.b16 %v4356
    %v4640 = vunpack.c.l.b16 %v4357
    %v4641 = vunpack.c.h.b16 %v4357
    %v4642 = vunpack.c.l.b16 %v4358
    %v4643 = vunpack.c.h.b16 %v4358
    %v4644 = vunpack.c.l.b16 %v4359
    %v4645 = vunpack.c.h.b16 %v4359
    %v4646 = vunpack.c.l.b16 %v4360
    %v4647 = vunpack.c.h.b16 %v4360
    %v4648 = vunpack.c.l.b16 %v4361
    %v4649 = vunpack.c.h.b16 %v4361
    %v4650 = vunpack.c.l.b16 %v4362
    %v4651 = vunpack.c.h.b16 %v4362
    %v4652 = vunpack.c.l.b16 %v4363
    %v4653 = vunpack.c.h.b16 %v4363
    %v4654 = vunpack.c.l.b16 %v4364
    %v4655 = vunpack.c.h.b16 %v4364
    %v4656 = vunpack.c.l.b16 %v4365
    %v4657 = vunpack.c.h.b16 %v4365
    %v4658 = vunpack.c.l.b16 %v4366
    %v4659 = vunpack.c.h.b16 %v4366
    %v4660 = vunpack.c.l.b16 %v4367
    %v4661 = vunpack.c.h.b16 %v4367
    %v4662 = vunpack.c.l.b16 %v4368
    %v4663 = vunpack.c.h.b16 %v4368
    %v4664 = vunpack.c.l.b16 %v4369
    %v4665 = vunpack.c.h.b16 %v4369
    %v4666 = vunpack.c.l.b16 %v4370
    %v4667 = vunpack.c.h.b16 %v4370
    %v4668 = vunpack.c.l.b16 %v4371
    %v4669 = vunpack.c.h.b16 %v4371
    %v4670 = vunpack.c.l.b16 %v4372
    %v4671 = vunpack.c.h.b16 %v4372
    %v4672 = vunpack.c.l.b16 %v4373
    %v4673 = vunpack.c.h.b16 %v4373
    %v4674 = vunpack.c.l.b16 %v4374
    %v4675 = vunpack.c.h.b16 %v4374
    %v4676 = vunpack.c.l.b16 %v4375
    %v4677 = vunpack.c.h.b16 %v4375
    %v4678 = vunpack.c.l.b16 %v4376
    %v4679 = vunpack.c.h.b16 %v4376
    %v4680 = vunpack.c.l.b16 %v4377
    %v4681 = vunpack.c.h.b16 %v4377
    %v4682 = vunpack.c.l.b16 %v4378
    %v4683 = vunpack.c.h.b16 %v4378
    %v4684 = vunpack.c.l.b16 %v4379
    %v4685 = vunpack.c.h.b16 %v4379
    %v4686 = vunpack.c.l.b16 %v4380
    %v4687 = vunpack.c.h.b16 %v4380
    %v4688 = vunpack.c.l.b16 %v4381
    %v4689 = vunpack.c.h.b16 %v4381
    %v4690 = vunpack.c.l.b16 %v4382
    %v4691 = vunpack.c.h.b16 %v4382
    %v4692 = vunpack.c.l.b16 %v4383
    %v4693 = vunpack.c.h.b16 %v4383
    %v4694 = vunpack.c.l.b16 %v4384
    %v4695 = vunpack.c.h.b16 %v4384
    %v4696 = vunpack.c.l.b16 %v4385
    %v4697 = vunpack.c.h.b16 %v4385
    %v4698 = vunpack.c.l.b16 %v4386
    %v4699 = vunpack.c.h.b16 %v4386
    %v4700 = vunpack.c.l.b16 %v4387
    %v4701 = vunpack.c.h.b16 %v4387
    %v4702 = vunpack.c.l.b16 %v4388
    %v4703 = vunpack.c.h.b16 %v4388
    %v4704 = vunpack.c.l.b16 %v4389
    %v4705 = vunpack.c.h.b16 %v4389
    %v4706 = vunpack.c.l.b16 %v4390
    %v4707 = vunpack.c.h.b16 %v4390
    %v4708 = vunpack.c.l.b16 %v4391
    %v4709 = vunpack.c.h.b16 %v4391
    %v4710 = vunpack.c.l.b16 %v4392
    %v4711 = vunpack.c.h.b16 %v4392
    %v4712 = vunpack.c.l.b16 %v4393
    %v4713 = vunpack.c.h.b16 %v4393
    %v4714 = vunpack.c.l.b16 %v4394
    %v4715 = vunpack.c.h.b16 %v4394
    %v4716 = vunpack.c.l.b16 %v4395
    %v4717 = vunpack.c.h.b16 %v4395
    %v4718 = vunpack.c.l.b16 %v4396
    %v4719 = vunpack.c.h.b16 %v4396
    %v4720 = vunpack.c.l.b16 %v4397
    %v4721 = vunpack.c.h.b16 %v4397
    %v4722 = vunpack.c.l.b16 %v4398
    %v4723 = vunpack.c.h.b16 %v4398
    %v4724 = vunpack.c.l.b16 %v4399
    %v4725 = vunpack.c.h.b16 %v4399
    %v4726 = vunpack.c.l.b16 %v4400
    %v4727 = vunpack.c.h.b16 %v4400
    %v4728 = vunpack.c.l.b16 %v4401
    %v4729 = vunpack.c.h.b16 %v4401
    %v4730 = vunpack.c.l.b16 %v4402
    %v4731 = vunpack.c.h.b16 %v4402
    %v4732 = vunpack.c.l.b16 %v4403
    %v4733 = vunpack.c.h.b16 %v4403
    %v4734 = vunpack.c.l.b16 %v4404
    %v4735 = vunpack.c.h.b16 %v4404
    %v4736 = vunpack.c.l.b16 %v4405
    %v4737 = vunpack.c.h.b16 %v4405
    %v4738 = vunpack.c.l.b16 %v4406
    %v4739 = vunpack.c.h.b16 %v4406
    %v4740 = vunpack.c.l.b16 %v4407
    %v4741 = vunpack.c.h.b16 %v4407
    %v4742 = vunpack.c.l.b16 %v4408
    %v4743 = vunpack.c.h.b16 %v4408
    %v4744 = vunpack.c.l.b16 %v4409
    %v4745 = vunpack.c.h.b16 %v4409
    %v4746 = vunpack.c.l.b16 %v4410
    %v4747 = vunpack.c.h.b16 %v4410
    %v4748 = vunpack.c.l.b16 %v4411
    %v4749 = vunpack.c.h.b16 %v4411
    %v4750 = vunpack.c.l.b16 %v4412
    %v4751 = vunpack.c.h.b16 %v4412
    %v4752 = vunpack.c.l.b16 %v4413
    %v4753 = vunpack.c.h.b16 %v4413
    %v4754 = vunpack.c.l.b16 %v4414
    %v4755 = vunpack.c.h.b16 %v4414
    %v4756 = vunpack.c.l.b16 %v4415
    %v4757 = vunpack.c.h.b16 %v4415
    %v4758 = vunpack.c.l.b16 %v4416
    %v4759 = vunpack.c.h.b16 %v4416
    %v4760 = vunpack.c.l.b16 %v4417
    %v4761 = vunpack.c.h.b16 %v4417
    %v4762 = vunpack.c.l.b16 %v4418
    %v4763 = vunpack.c.h.b16 %v4418
    %v4764 = vunpack.c.l.b16 %v4419
    %v4765 = vunpack.c.h.b16 %v4419
    %v4766 = vunpack.c.l.b16 %v4420
    %v4767 = vunpack.c.h.b16 %v4420
    %v4768 = vunpack.c.l.b16 %v4421
    %v4769 = vunpack.c.h.b16 %v4421
    %v4770 = vunpack.c.l.b16 %v4422
    %v4771 = vunpack.c.h.b16 %v4422
    %v4772 = vunpack.c.l.b16 %v4423
    %v4773 = vunpack.c.h.b16 %v4423
    %v4774 = vunpack.c.l.b16 %v4424
    %v4775 = vunpack.c.h.b16 %v4424
    %v4776 = vunpack.c.l.b16 %v4425
    %v4777 = vunpack.c.h.b16 %v4425
    %v4778 = vunpack.c.l.b16 %v4426
    %v4779 = vunpack.c.h.b16 %v4426
    %v4780 = vunpack.c.l.b16 %v4427
    %v4781 = vunpack.c.h.b16 %v4427
    %v4782 = vunpack.c.l.b16 %v4428
    %v4783 = vunpack.c.h.b16 %v4428
    %v4784 = vunpack.c.l.b16 %v4429
    %v4785 = vunpack.c.h.b16 %v4429
    %v4786 = vunpack.c.l.b16 %v4430
    %v4787 = vunpack.c.h.b16 %v4430
    %v4788 = vunpack.c.l.b16 %v4431
    %v4789 = vunpack.c.h.b16 %v4431
    %v4790 = vunpack.c.l.b16 %v4432
    %v4791 = vunpack.c.h.b16 %v4432
    %v4792 = vunpack.c.l.b16 %v4433
    %v4793 = vunpack.c.h.b16 %v4433
    %v4794 = vunpack.c.l.b16 %v4434
    %v4795 = vunpack.c.h.b16 %v4434
    %v4796 = vunpack.c.l.b16 %v4435
    %v4797 = vunpack.c.h.b16 %v4435
    %v4798 = vunpack.c.l.b16 %v4436
    %v4799 = vunpack.c.h.b16 %v4436
    %v4800 = vunpack.c.l.b16 %v4437
    %v4801 = vunpack.c.h.b16 %v4437
    %v4802 = vunpack.c.l.b16 %v4438
    %v4803 = vunpack.c.h.b16 %v4438
    %v4804 = vunpack.c.l.b16 %v4439
    %v4805 = vunpack.c.h.b16 %v4439
    %v4806 = vunpack.c.l.b16 %v4440
    %v4807 = vunpack.c.h.b16 %v4440
    %v4808 = vunpack.c.l.b16 %v4441
    %v4809 = vunpack.c.h.b16 %v4441
    %v4810 = vunpack.c.l.b16 %v4442
    %v4811 = vunpack.c.h.b16 %v4442
    %v4812 = vunpack.c.l.b16 %v4443
    %v4813 = vunpack.c.h.b16 %v4443
    %v4814 = vunpack.c.l.b16 %v4444
    %v4815 = vunpack.c.h.b16 %v4444
    %v4816 = vunpack.c.l.b16 %v4445
    %v4817 = vunpack.c.h.b16 %v4445
    %v4818 = vunpack.c.l.b16 %v4446
    %v4819 = vunpack.c.h.b16 %v4446
    %v4820 = vunpack.c.l.b16 %v4447
    %v4821 = vunpack.c.h.b16 %v4447
    %v4822 = vunpack.c.l.b16 %v4448
    %v4823 = vunpack.c.h.b16 %v4448
    %v4824 = vunpack.c.l.b16 %v4449
    %v4825 = vunpack.c.h.b16 %v4449
    %v4826 = vunpack.c.l.b16 %v4450
    %v4827 = vunpack.c.h.b16 %v4450
    %v4828 = vunpack.c.l.b16 %v4451
    %v4829 = vunpack.c.h.b16 %v4451
    %v4830 = vunpack.c.l.b16 %v4452
    %v4831 = vunpack.c.h.b16 %v4452
    %v4832 = vunpack.c.l.b16 %v4453
    %v4833 = vunpack.c.h.b16 %v4453
    %v4834 = vunpack.c.l.b16 %v4454
    %v4835 = vunpack.c.h.b16 %v4454
    %v4836 = vunpack.c.l.b16 %v4455
    %v4837 = vunpack.c.h.b16 %v4455
    %v4838 = vunpack.c.l.b16 %v4456
    %v4839 = vunpack.c.h.b16 %v4456
    %v4840 = vunpack.c.l.b16 %v4457
    %v4841 = vunpack.c.h.b16 %v4457
    %v4842 = vunpack.c.l.b16 %v4458
    %v4843 = vunpack.c.h.b16 %v4458
    %v4844 = vunpack.c.l.b16 %v4459
    %v4845 = vunpack.c.h.b16 %v4459
    %v4846 = vunpack.c.l.b16 %v4460
    %v4847 = vunpack.c.h.b16 %v4460
    %v4848 = vunpack.c.l.b16 %v4461
    %v4849 = vunpack.c.h.b16 %v4461
    %v4850 = vunpack.c.l.b16 %v4462
    %v4851 = vunpack.c.h.b16 %v4462
    %v4852 = vunpack.c.l.b16 %v4463
    %v4853 = vunpack.c.h.b16 %v4463
    %v4854 = vunpack.c.l.b16 %v4464
    %v4855 = vunpack.c.h.b16 %v4464
    %v4856 = vunpack.c.l.b16 %v4465
    %v4857 = vunpack.c.h.b16 %v4465
    %v4858 = vunpack.c.l.b16 %v4466
    %v4859 = vunpack.c.h.b16 %v4466
    %v4860 = vunpack.c.l.b16 %v4467
    %v4861 = vunpack.c.h.b16 %v4467
    %v4862 = vunpack.c.l.b16 %v4468
    %v4863 = vunpack.c.h.b16 %v4468
    %v4864 = vunpack.c.l.b16 %v4469
    %v4865 = vunpack.c.h.b16 %v4469
    %v4866 = vunpack.c.l.b16 %v4470
    %v4867 = vunpack.c.h.b16 %v4470
    %v4868 = vunpack.c.l.b16 %v4471
    %v4869 = vunpack.c.h.b16 %v4471
    %v4870 = vunpack.c.l.b16 %v4472
    %v4871 = vunpack.c.h.b16 %v4472
    %v4872 = vunpack.c.l.b16 %v4473
    %v4873 = vunpack.c.h.b16 %v4473
    %v4874 = vunpack.c.l.b16 %v4474
    %v4875 = vunpack.c.h.b16 %v4474
    %v4876 = vunpack.c.l.b16 %v4475
    %v4877 = vunpack.c.h.b16 %v4475
    %v4878 = vunpack.c.l.b16 %v4476
    %v4879 = vunpack.c.h.b16 %v4476
    %v4880 = vunpack.c.l.b16 %v4477
    %v4881 = vunpack.c.h.b16 %v4477
    %v4882 = vunpack.c.l.b16 %v4478
    %v4883 = vunpack.c.h.b16 %v4478
    %v4884 = vunpack.c.l.b16 %v4479
    %v4885 = vunpack.c.h.b16 %v4479
    %v4886 = vunpack.c.l.b16 %v4480
    %v4887 = vunpack.c.h.b16 %v4480
    %v4888 = vpack.c.b16 %v4636, %v4632
    %v4889 = vpack.c.b16 %v4637, %v4633
    %v4890 = vpack.c.b16 %v4638, %v4634
    %v4891 = vpack.c.b16 %v4639, %v4635
    %v4892 = vpack.c.b16 %v4644, %v4640
    %v4893 = vpack.c.b16 %v4645, %v4641
    %v4894 = vpack.c.b16 %v4646, %v4642
    %v4895 = vpack.c.b16 %v4647, %v4643
    %v4896 = vpack.c.b16 %v4652, %v4648
    %v4897 = vpack.c.b16 %v4653, %v4649
    %v4898 = vpack.c.b16 %v4654, %v4650
    %v4899 = vpack.c.b16 %v4655, %v4651
    %v4900 = vpack.c.b16 %v4660, %v4656
    %v4901 = vpack.c.b16 %v4661, %v4657
    %v4902 = vpack.c.b16 %v4662, %v4658
    %v4903 = vpack.c.b16 %v4663, %v4659
    %v4904 = vpack.c.b16 %v4668, %v4664
    %v4905 = vpack.c.b16 %v4669, %v4665
    %v4906 = vpack.c.b16 %v4670, %v4666
    %v4907 = vpack.c.b16 %v4671, %v4667
    %v4908 = vpack.c.b16 %v4676, %v4672
    %v4909 = vpack.c.b16 %v4677, %v4673
    %v4910 = vpack.c.b16 %v4678, %v4674
    %v4911 = vpack.c.b16 %v4679, %v4675
    %v4912 = vpack.c.b16 %v4684, %v4680
    %v4913 = vpack.c.b16 %v4685, %v4681
    %v4914 = vpack.c.b16 %v4686, %v4682
    %v4915 = vpack.c.b16 %v4687, %v4683
    %v4916 = vpack.c.b16 %v4692, %v4688
    %v4917 = vpack.c.b16 %v4693, %v4689
    %v4918 = vpack.c.b16 %v4694, %v4690
    %v4919 = vpack.c.b16 %v4695, %v4691
    %v4920 = vpack.c.b16 %v4700, %v4696
    %v4921 = vpack.c.b16 %v4701, %v4697
    %v4922 = vpack.c.b16 %v4702, %v4698
    %v4923 = vpack.c.b16 %v4703, %v4699
    %v4924 = vpack.c.b16 %v4708, %v4704
    %v4925 = vpack.c.b16 %v4709, %v4705
    %v4926 = vpack.c.b16 %v4710, %v4706
    %v4927 = vpack.c.b16 %v4711, %v4707
    %v4928 = vpack.c.b16 %v4716, %v4712
    %v4929 = vpack.c.b16 %v4717, %v4713
    %v4930 = vpack.c.b16 %v4718, %v4714
    %v4931 = vpack.c.b16 %v4719, %v4715
    %v4932 = vpack.c.b16 %v4724, %v4720
    %v4933 = vpack.c.b16 %v4725, %v4721
    %v4934 = vpack.c.b16 %v4726, %v4722
    %v4935 = vpack.c.b16 %v4727, %v4723
    %v4936 = vpack.c.b16 %v4732, %v4728
    %v4937 = vpack.c.b16 %v4733, %v4729
    %v4938 = vpack.c.b16 %v4734, %v4730
    %v4939 = vpack.c.b16 %v4735, %v4731
    %v4940 = vpack.c.b16 %v4740, %v4736
    %v4941 = vpack.c.b16 %v4741, %v4737
    %v4942 = vpack.c.b16 %v4742, %v4738
    %v4943 = vpack.c.b16 %v4743, %v4739
    %v4944 = vpack.c.b16 %v4748, %v4744
    %v4945 = vpack.c.b16 %v4749, %v4745
    %v4946 = vpack.c.b16 %v4750, %v4746
    %v4947 = vpack.c.b16 %v4751, %v4747
    %v4948 = vpack.c.b16 %v4756, %v4752
    %v4949 = vpack.c.b16 %v4757, %v4753
    %v4950 = vpack.c.b16 %v4758, %v4754
    %v4951 = vpack.c.b16 %v4759, %v4755
    %v4952 = vpack.c.b16 %v4764, %v4760
    %v4953 = vpack.c.b16 %v4765, %v4761
    %v4954 = vpack.c.b16 %v4766, %v4762
    %v4955 = vpack.c.b16 %v4767, %v4763
    %v4956 = vpack.c.b16 %v4772, %v4768
    %v4957 = vpack.c.b16 %v4773, %v4769
    %v4958 = vpack.c.b16 %v4774, %v4770
    %v4959 = vpack.c.b16 %v4775, %v4771
    %v4960 = vpack.c.b16 %v4780, %v4776
    %v4961 = vpack.c.b16 %v4781, %v4777
    %v4962 = vpack.c.b16 %v4782, %v4778
    %v4963 = vpack.c.b16 %v4783, %v4779
    %v4964 = vpack.c.b16 %v4788, %v4784
    %v4965 = vpack.c.b16 %v4789, %v4785
    %v4966 = vpack.c.b16 %v4790, %v4786
    %v4967 = vpack.c.b16 %v4791, %v4787
    %v4968 = vpack.c.b16 %v4796, %v4792
    %v4969 = vpack.c.b16 %v4797, %v4793
    %v4970 = vpack.c.b16 %v4798, %v4794
    %v4971 = vpack.c.b16 %v4799, %v4795
    %v4972 = vpack.c.b16 %v4804, %v4800
    %v4973 = vpack.c.b16 %v4805, %v4801
    %v4974 = vpack.c.b16 %v4806, %v4802
    %v4975 = vpack.c.b16 %v4807, %v4803
    %v4976 = vpack.c.b16 %v4812, %v4808
    %v4977 = vpack.c.b16 %v4813, %v4809
    %v4978 = vpack.c.b16 %v4814, %v4810
    %v4979 = vpack.c.b16 %v4815, %v4811
    %v4980 = vpack.c.b16 %v4820, %v4816
    %v4981 = vpack.c.b16 %v4821, %v4817
    %v4982 = vpack.c.b16 %v4822, %v4818
    %v4983 = vpack.c.b16 %v4823, %v4819
    %v4984 = vpack.c.b16 %v4828, %v4824
    %v4985 = vpack.c.b16 %v4829, %v4825
    %v4986 = vpack.c.b16 %v4830, %v4826
    %v4987 = vpack.c.b16 %v4831, %v4827
    %v4988 = vpack.c.b16 %v4836, %v4832
    %v4989 = vpack.c.b16 %v4837, %v4833
    %v4990 = vpack.c.b16 %v4838, %v4834
    %v4991 = vpack.c.b16 %v4839, %v4835
    %v4992 = vpack.c.b16 %v4844, %v4840
    %v4993 = vpack.c.b16 %v4845, %v4841
    %v4994 = vpack.c.b16 %v4846, %v4842
    %v4995 = vpack.c.b16 %v4847, %v4843
    %v4996 = vpack.c.b16 %v4852, %v4848
    %v4997 = vpack.c.b16 %v4853, %v4849
    %v4998 = vpack.c.b16 %v4854, %v4850
    %v4999 = vpack.c.b16 %v4855, %v4851
    %v5000 = vpack.c.b16 %v4860, %v4856
    %v5001 = vpack.c.b16 %v4861, %v4857
    %v5002 = vpack.c.b16 %v4862, %v4858
    %v5003 = vpack.c.b16 %v4863, %v4859
    %v5004 = vpack.c.b16 %v4868, %v4864
    %v5005 = vpack.c.b16 %v4869, %v4865
    %v5006 = vpack.c.b16 %v4870, %v4866
    %v5007 = vpack.c.b16 %v4871, %v4867
    %v5008 = vpack.c.b16 %v4876, %v4872
    %v5009 = vpack.c.b16 %v4877, %v4873
    %v5010 = vpack.c.b16 %v4878, %v4874
    %v5011 = vpack.c.b16 %v4879, %v4875
    %v5012 = vpack.c.b16 %v4884, %v4880
    %v5013 = vpack.c.b16 %v4885, %v4881
    %v5014 = vpack.c.b16 %v4886, %v4882
    %v5015 = vpack.c.b16 %v4887, %v4883
    %5144 = vmatprep.subr.bf16.mxu0 %v4917
    %5145 = vmatpush1.bf16.msra.mxu0 %v4916
    %5146 = vmatprep.subr.bf16.mxu0 %v4913
    %5147 = vmatpush1.bf16.msra.mxu0 %v4912
    %5148 = vmatprep.subr.bf16.mxu0 %v4909
    %5149 = vmatpush1.bf16.msra.mxu0 %v4908
    %5150 = vmatprep.subr.bf16.mxu0 %v4905
    %5151 = vmatpush1.bf16.msra.mxu0 %v4904
    %5152 = vmatprep.subr.bf16.mxu0 %v4901
    %5153 = vmatpush1.bf16.msra.mxu0 %v4900
    %5154 = vmatprep.subr.bf16.mxu0 %v4897
    %5155 = vmatpush1.bf16.msra.mxu0 %v4896
    %5156 = vmatprep.subr.bf16.mxu0 %v4893
    %5157 = vmatpush1.bf16.msra.mxu0 %v4892
    %5158 = vmatprep.subr.bf16.mxu0 %v4889
    %5159 = vmatpush1.bf16.msra.mxu0 %v4888
    %5160 = vmatprep.subr.bf16.mxu0 %v4949
    %5161 = vmatpush2.bf16.msra.mxu0 %v4948
    %5162 = vmatprep.subr.bf16.mxu0 %v4945
    %5163 = vmatpush2.bf16.msra.mxu0 %v4944
    %5164 = vmatprep.subr.bf16.mxu0 %v4941
    %5165 = vmatpush2.bf16.msra.mxu0 %v4940
    %5166 = vmatprep.subr.bf16.mxu0 %v4937
    %5167 = vmatpush2.bf16.msra.mxu0 %v4936
    %5168 = vmatprep.subr.bf16.mxu0 %v4933
    %5169 = vmatpush2.bf16.msra.mxu0 %v4932
    %5170 = vmatprep.subr.bf16.mxu0 %v4929
    %5171 = vmatpush2.bf16.msra.mxu0 %v4928
    %5172 = vmatprep.subr.bf16.mxu0 %v4925
    %5173 = vmatpush2.bf16.msra.mxu0 %v4924
    %5174 = vmatprep.subr.bf16.mxu0 %v4921
    %5175 = vmatpush2.bf16.msra.mxu0 %v4920
    %5176 = vmatprep.mubr.bf16.mxu0 %v4350
    %5177 = vmatmul.mubr.bf16.gmra.mxu0 %v4349
    %v5178 = vpop.f32.mrf.mxu0
    %v5179 = vadd.f32 %v4487, %v5178
    %v5180 = vpop.f32.mrf.mxu0
    %v5181 = vadd.f32 %v4491, %v5180
    %v5182 = vpop.f32.mrf.mxu0
    %v5183 = vpop.f32.mrf.mxu0
    %5184 = vdwg.mxu0
    %5185 = vmatprep.subr.bf16.mxu0 %v4981
    %5186 = vmatpush1.bf16.msra.mxu0 %v4980
    %5187 = vmatprep.subr.bf16.mxu0 %v4977
    %5188 = vmatpush1.bf16.msra.mxu0 %v4976
    %5189 = vmatprep.subr.bf16.mxu0 %v4973
    %5190 = vmatpush1.bf16.msra.mxu0 %v4972
    %5191 = vmatprep.subr.bf16.mxu0 %v4969
    %5192 = vmatpush1.bf16.msra.mxu0 %v4968
    %5193 = vmatprep.subr.bf16.mxu0 %v4965
    %5194 = vmatpush1.bf16.msra.mxu0 %v4964
    %5195 = vmatprep.subr.bf16.mxu0 %v4961
    %5196 = vmatpush1.bf16.msra.mxu0 %v4960
    %5197 = vmatprep.subr.bf16.mxu0 %v4957
    %5198 = vmatpush1.bf16.msra.mxu0 %v4956
    %5199 = vmatprep.subr.bf16.mxu0 %v4953
    %5200 = vmatpush1.bf16.msra.mxu0 %v4952
    %5201 = vmatprep.subr.bf16.mxu0 %v5013
    %5202 = vmatpush2.bf16.msra.mxu0 %v5012
    %5203 = vmatprep.subr.bf16.mxu0 %v5009
    %5204 = vmatpush2.bf16.msra.mxu0 %v5008
    %5205 = vmatprep.subr.bf16.mxu0 %v5005
    %5206 = vmatpush2.bf16.msra.mxu0 %v5004
    %5207 = vmatprep.subr.bf16.mxu0 %v5001
    %5208 = vmatpush2.bf16.msra.mxu0 %v5000
    %5209 = vmatprep.subr.bf16.mxu0 %v4997
    %5210 = vmatpush2.bf16.msra.mxu0 %v4996
    %5211 = vmatprep.subr.bf16.mxu0 %v4993
    %5212 = vmatpush2.bf16.msra.mxu0 %v4992
    %5213 = vmatprep.subr.bf16.mxu0 %v4989
    %5214 = vmatpush2.bf16.msra.mxu0 %v4988
    %5215 = vmatprep.subr.bf16.mxu0 %v4985
    %5216 = vmatpush2.bf16.msra.mxu0 %v4984
    %5217 = vmatprep.mubr.bf16.mxu0 %v4352
    %5218 = vmatmul.mubr.bf16.gmra.mxu0 %v4351
    %v5219 = vpop.f32.mrf.mxu0
    %v5220 = vadd.f32 %v5179, %v5219
    %v5221 = vpop.f32.mrf.mxu0
    %v5222 = vadd.f32 %v5181, %v5221
    %v5223 = vpop.f32.mrf.mxu0
    %v5224 = vpop.f32.mrf.mxu0
    %5225 = vdwg.mxu0
    %5226 = vmatprep.subr.bf16.mxu0 %v4919
    %5227 = vmatpush1.bf16.msra.mxu0 %v4918
    %5228 = vmatprep.subr.bf16.mxu0 %v4915
    %5229 = vmatpush1.bf16.msra.mxu0 %v4914
    %5230 = vmatprep.subr.bf16.mxu0 %v4911
    %5231 = vmatpush1.bf16.msra.mxu0 %v4910
    %5232 = vmatprep.subr.bf16.mxu0 %v4907
    %5233 = vmatpush1.bf16.msra.mxu0 %v4906
    %5234 = vmatprep.subr.bf16.mxu0 %v4903
    %5235 = vmatpush1.bf16.msra.mxu0 %v4902
    %5236 = vmatprep.subr.bf16.mxu0 %v4899
    %5237 = vmatpush1.bf16.msra.mxu0 %v4898
    %5238 = vmatprep.subr.bf16.mxu0 %v4895
    %5239 = vmatpush1.bf16.msra.mxu0 %v4894
    %5240 = vmatprep.subr.bf16.mxu0 %v4891
    %5241 = vmatpush1.bf16.msra.mxu0 %v4890
    %5242 = vmatprep.subr.bf16.mxu0 %v4951
    %5243 = vmatpush2.bf16.msra.mxu0 %v4950
    %5244 = vmatprep.subr.bf16.mxu0 %v4947
    %5245 = vmatpush2.bf16.msra.mxu0 %v4946
    %5246 = vmatprep.subr.bf16.mxu0 %v4943
    %5247 = vmatpush2.bf16.msra.mxu0 %v4942
    %5248 = vmatprep.subr.bf16.mxu0 %v4939
    %5249 = vmatpush2.bf16.msra.mxu0 %v4938
    %5250 = vmatprep.subr.bf16.mxu0 %v4935
    %5251 = vmatpush2.bf16.msra.mxu0 %v4934
    %5252 = vmatprep.subr.bf16.mxu0 %v4931
    %5253 = vmatpush2.bf16.msra.mxu0 %v4930
    %5254 = vmatprep.subr.bf16.mxu0 %v4927
    %5255 = vmatpush2.bf16.msra.mxu0 %v4926
    %5256 = vmatprep.subr.bf16.mxu0 %v4923
    %5257 = vmatpush2.bf16.msra.mxu0 %v4922
    %5258 = vmatprep.mubr.bf16.mxu0 %v4350
    %5259 = vmatmul.mubr.bf16.gmra.mxu0 %v4349
    %v5260 = vpop.f32.mrf.mxu0
    %v5261 = vadd.f32 %v4495, %v5260
    %v5262 = vpop.f32.mrf.mxu0
    %v5263 = vadd.f32 %v4499, %v5262
    %v5264 = vpop.f32.mrf.mxu0
    %v5265 = vpop.f32.mrf.mxu0
    %5266 = vdwg.mxu0
    %5267 = vmatprep.subr.bf16.mxu0 %v4983
    %5268 = vmatpush1.bf16.msra.mxu0 %v4982
    %5269 = vmatprep.subr.bf16.mxu0 %v4979
    %5270 = vmatpush1.bf16.msra.mxu0 %v4978
    %5271 = vmatprep.subr.bf16.mxu0 %v4975
    %5272 = vmatpush1.bf16.msra.mxu0 %v4974
    %5273 = vmatprep.subr.bf16.mxu0 %v4971
    %5274 = vmatpush1.bf16.msra.mxu0 %v4970
    %5275 = vmatprep.subr.bf16.mxu0 %v4967
    %5276 = vmatpush1.bf16.msra.mxu0 %v4966
    %5277 = vmatprep.subr.bf16.mxu0 %v4963
    %5278 = vmatpush1.bf16.msra.mxu0 %v4962
    %5279 = vmatprep.subr.bf16.mxu0 %v4959
    %5280 = vmatpush1.bf16.msra.mxu0 %v4958
    %5281 = vmatprep.subr.bf16.mxu0 %v4955
    %5282 = vmatpush1.bf16.msra.mxu0 %v4954
    %5283 = vmatprep.subr.bf16.mxu0 %v5015
    %5284 = vmatpush2.bf16.msra.mxu0 %v5014
    %5285 = vmatprep.subr.bf16.mxu0 %v5011
    %5286 = vmatpush2.bf16.msra.mxu0 %v5010
    %5287 = vmatprep.subr.bf16.mxu0 %v5007
    %5288 = vmatpush2.bf16.msra.mxu0 %v5006
    %5289 = vmatprep.subr.bf16.mxu0 %v5003
    %5290 = vmatpush2.bf16.msra.mxu0 %v5002
    %5291 = vmatprep.subr.bf16.mxu0 %v4999
    %5292 = vmatpush2.bf16.msra.mxu0 %v4998
    %5293 = vmatprep.subr.bf16.mxu0 %v4995
    %5294 = vmatpush2.bf16.msra.mxu0 %v4994
    %5295 = vmatprep.subr.bf16.mxu0 %v4991
    %5296 = vmatpush2.bf16.msra.mxu0 %v4990
    %5297 = vmatprep.subr.bf16.mxu0 %v4987
    %5298 = vmatpush2.bf16.msra.mxu0 %v4986
    %5299 = vmatprep.mubr.bf16.mxu0 %v4352
    %5300 = vmatmul.mubr.bf16.gmra.mxu0 %v4351
    %v5301 = vpop.f32.mrf.mxu0
    %v5302 = vadd.f32 %v5261, %v5301
    %v5303 = vpop.f32.mrf.mxu0
    %v5304 = vadd.f32 %v5263, %v5303
    %v5305 = vpop.f32.mrf.mxu0
    %v5306 = vpop.f32.mrf.mxu0
    %5307 = vdwg.mxu0
    %v5308 = vmax.f32 %v5220, 0.0
    %v5309 = vmax.f32 %v5222, 0.0
    %v5310 = vmax.f32 %v5302, 0.0
    %v5311 = vmax.f32 %v5304, 0.0
    %v5312 = vpack.c.bf16 %v5308, %v5308
    %v5313 = vpack.c.bf16 %v5309, %v5309
    %v5314 = vpack.c.bf16 %v5310, %v5310
    %v5315 = vpack.c.bf16 %v5311, %v5311
    %v5316 = vld [vmem:[#allocation16] sm:$0xff]
    %v5317 = vld [vmem:[#allocation16 + $0x8] sm:$0xff]
    %v5318 = vld [vmem:[#allocation16 + $0x10] sm:$0xff]
    %v5319 = vld [vmem:[#allocation16 + $0x18] sm:$0xff]
    %v5320 = vld [vmem:[#allocation16 + $0x20] sm:$0xff]
    %v5321 = vld [vmem:[#allocation16 + $0x28] sm:$0xff]
    %v5322 = vld [vmem:[#allocation16 + $0x30] sm:$0xff]
    %v5323 = vld [vmem:[#allocation16 + $0x38] sm:$0xff]
    %v5324 = vld [vmem:[#allocation16 + $0x40] sm:$0xff]
    %v5325 = vld [vmem:[#allocation16 + $0x48] sm:$0xff]
    %v5326 = vld [vmem:[#allocation16 + $0x50] sm:$0xff]
    %v5327 = vld [vmem:[#allocation16 + $0x58] sm:$0xff]
    %v5328 = vld [vmem:[#allocation16 + $0x60] sm:$0xff]
    %v5329 = vld [vmem:[#allocation16 + $0x68] sm:$0xff]
    %v5330 = vld [vmem:[#allocation16 + $0x70] sm:$0xff]
    %v5331 = vld [vmem:[#allocation16 + $0x78] sm:$0xff]
    %v5332 = vld [vmem:[#allocation16 + $0x80] sm:$0xff]
    %v5333 = vld [vmem:[#allocation16 + $0x88] sm:$0xff]
    %v5334 = vld [vmem:[#allocation16 + $0x90] sm:$0xff]
    %v5335 = vld [vmem:[#allocation16 + $0x98] sm:$0xff]
    %v5336 = vld [vmem:[#allocation16 + $0xa0] sm:$0xff]
    %v5337 = vld [vmem:[#allocation16 + $0xa8] sm:$0xff]
    %v5338 = vld [vmem:[#allocation16 + $0xb0] sm:$0xff]
    %v5339 = vld [vmem:[#allocation16 + $0xb8] sm:$0xff]
    %v5340 = vld [vmem:[#allocation16 + $0xc0] sm:$0xff]
    %v5341 = vld [vmem:[#allocation16 + $0xc8] sm:$0xff]
    %v5342 = vld [vmem:[#allocation16 + $0xd0] sm:$0xff]
    %v5343 = vld [vmem:[#allocation16 + $0xd8] sm:$0xff]
    %v5344 = vld [vmem:[#allocation16 + $0xe0] sm:$0xff]
    %v5345 = vld [vmem:[#allocation16 + $0xe8] sm:$0xff]
    %v5346 = vld [vmem:[#allocation16 + $0xf0] sm:$0xff]
    %v5347 = vld [vmem:[#allocation16 + $0xf8] sm:$0xff]
    %v5348 = vld [vmem:[#allocation16 + $0x100] sm:$0xff]
    %v5349 = vld [vmem:[#allocation16 + $0x108] sm:$0xff]
    %v5350 = vld [vmem:[#allocation16 + $0x110] sm:$0xff]
    %v5351 = vld [vmem:[#allocation16 + $0x118] sm:$0xff]
    %v5352 = vld [vmem:[#allocation16 + $0x120] sm:$0xff]
    %v5353 = vld [vmem:[#allocation16 + $0x128] sm:$0xff]
    %v5354 = vld [vmem:[#allocation16 + $0x130] sm:$0xff]
    %v5355 = vld [vmem:[#allocation16 + $0x138] sm:$0xff]
    %v5356 = vld [vmem:[#allocation16 + $0x140] sm:$0xff]
    %v5357 = vld [vmem:[#allocation16 + $0x148] sm:$0xff]
    %v5358 = vld [vmem:[#allocation16 + $0x150] sm:$0xff]
    %v5359 = vld [vmem:[#allocation16 + $0x158] sm:$0xff]
    %v5360 = vld [vmem:[#allocation16 + $0x160] sm:$0xff]
    %v5361 = vld [vmem:[#allocation16 + $0x168] sm:$0xff]
    %v5362 = vld [vmem:[#allocation16 + $0x170] sm:$0xff]
    %v5363 = vld [vmem:[#allocation16 + $0x178] sm:$0xff]
    %v5364 = vld [vmem:[#allocation16 + $0x180] sm:$0xff]
    %v5365 = vld [vmem:[#allocation16 + $0x188] sm:$0xff]
    %v5366 = vld [vmem:[#allocation16 + $0x190] sm:$0xff]
    %v5367 = vld [vmem:[#allocation16 + $0x198] sm:$0xff]
    %v5368 = vld [vmem:[#allocation16 + $0x1a0] sm:$0xff]
    %v5369 = vld [vmem:[#allocation16 + $0x1a8] sm:$0xff]
    %v5370 = vld [vmem:[#allocation16 + $0x1b0] sm:$0xff]
    %v5371 = vld [vmem:[#allocation16 + $0x1b8] sm:$0xff]
    %v5372 = vld [vmem:[#allocation16 + $0x1c0] sm:$0xff]
    %v5373 = vld [vmem:[#allocation16 + $0x1c8] sm:$0xff]
    %v5374 = vld [vmem:[#allocation16 + $0x1d0] sm:$0xff]
    %v5375 = vld [vmem:[#allocation16 + $0x1d8] sm:$0xff]
    %v5376 = vld [vmem:[#allocation16 + $0x1e0] sm:$0xff]
    %v5377 = vld [vmem:[#allocation16 + $0x1e8] sm:$0xff]
    %v5378 = vld [vmem:[#allocation16 + $0x1f0] sm:$0xff]
    %v5379 = vld [vmem:[#allocation16 + $0x1f8] sm:$0xff]
    %v5380 = vld [vmem:[#allocation16 + $0x200] sm:$0xff]
    %v5381 = vld [vmem:[#allocation16 + $0x208] sm:$0xff]
    %v5382 = vld [vmem:[#allocation16 + $0x210] sm:$0xff]
    %v5383 = vld [vmem:[#allocation16 + $0x218] sm:$0xff]
    %v5384 = vld [vmem:[#allocation16 + $0x220] sm:$0xff]
    %v5385 = vld [vmem:[#allocation16 + $0x228] sm:$0xff]
    %v5386 = vld [vmem:[#allocation16 + $0x230] sm:$0xff]
    %v5387 = vld [vmem:[#allocation16 + $0x238] sm:$0xff]
    %v5388 = vld [vmem:[#allocation16 + $0x240] sm:$0xff]
    %v5389 = vld [vmem:[#allocation16 + $0x248] sm:$0xff]
    %v5390 = vld [vmem:[#allocation16 + $0x250] sm:$0xff]
    %v5391 = vld [vmem:[#allocation16 + $0x258] sm:$0xff]
    %v5392 = vld [vmem:[#allocation16 + $0x260] sm:$0xff]
    %v5393 = vld [vmem:[#allocation16 + $0x268] sm:$0xff]
    %v5394 = vld [vmem:[#allocation16 + $0x270] sm:$0xff]
    %v5395 = vld [vmem:[#allocation16 + $0x278] sm:$0xff]
    %v5396 = vld [vmem:[#allocation16 + $0x280] sm:$0xff]
    %v5397 = vld [vmem:[#allocation16 + $0x288] sm:$0xff]
    %v5398 = vld [vmem:[#allocation16 + $0x290] sm:$0xff]
    %v5399 = vld [vmem:[#allocation16 + $0x298] sm:$0xff]
    %v5400 = vld [vmem:[#allocation16 + $0x2a0] sm:$0xff]
    %v5401 = vld [vmem:[#allocation16 + $0x2a8] sm:$0xff]
    %v5402 = vld [vmem:[#allocation16 + $0x2b0] sm:$0xff]
    %v5403 = vld [vmem:[#allocation16 + $0x2b8] sm:$0xff]
    %v5404 = vld [vmem:[#allocation16 + $0x2c0] sm:$0xff]
    %v5405 = vld [vmem:[#allocation16 + $0x2c8] sm:$0xff]
    %v5406 = vld [vmem:[#allocation16 + $0x2d0] sm:$0xff]
    %v5407 = vld [vmem:[#allocation16 + $0x2d8] sm:$0xff]
    %v5408 = vld [vmem:[#allocation16 + $0x2e0] sm:$0xff]
    %v5409 = vld [vmem:[#allocation16 + $0x2e8] sm:$0xff]
    %v5410 = vld [vmem:[#allocation16 + $0x2f0] sm:$0xff]
    %v5411 = vld [vmem:[#allocation16 + $0x2f8] sm:$0xff]
    %v5412 = vld [vmem:[#allocation16 + $0x300] sm:$0xff]
    %v5413 = vld [vmem:[#allocation16 + $0x308] sm:$0xff]
    %v5414 = vld [vmem:[#allocation16 + $0x310] sm:$0xff]
    %v5415 = vld [vmem:[#allocation16 + $0x318] sm:$0xff]
    %v5416 = vld [vmem:[#allocation16 + $0x320] sm:$0xff]
    %v5417 = vld [vmem:[#allocation16 + $0x328] sm:$0xff]
    %v5418 = vld [vmem:[#allocation16 + $0x330] sm:$0xff]
    %v5419 = vld [vmem:[#allocation16 + $0x338] sm:$0xff]
    %v5420 = vld [vmem:[#allocation16 + $0x340] sm:$0xff]
    %v5421 = vld [vmem:[#allocation16 + $0x348] sm:$0xff]
    %v5422 = vld [vmem:[#allocation16 + $0x350] sm:$0xff]
    %v5423 = vld [vmem:[#allocation16 + $0x358] sm:$0xff]
    %v5424 = vld [vmem:[#allocation16 + $0x360] sm:$0xff]
    %v5425 = vld [vmem:[#allocation16 + $0x368] sm:$0xff]
    %v5426 = vld [vmem:[#allocation16 + $0x370] sm:$0xff]
    %v5427 = vld [vmem:[#allocation16 + $0x378] sm:$0xff]
    %v5428 = vld [vmem:[#allocation16 + $0x380] sm:$0xff]
    %v5429 = vld [vmem:[#allocation16 + $0x388] sm:$0xff]
    %v5430 = vld [vmem:[#allocation16 + $0x390] sm:$0xff]
    %v5431 = vld [vmem:[#allocation16 + $0x398] sm:$0xff]
    %v5432 = vld [vmem:[#allocation16 + $0x3a0] sm:$0xff]
    %v5433 = vld [vmem:[#allocation16 + $0x3a8] sm:$0xff]
    %v5434 = vld [vmem:[#allocation16 + $0x3b0] sm:$0xff]
    %v5435 = vld [vmem:[#allocation16 + $0x3b8] sm:$0xff]
    %v5436 = vld [vmem:[#allocation16 + $0x3c0] sm:$0xff]
    %v5437 = vld [vmem:[#allocation16 + $0x3c8] sm:$0xff]
    %v5438 = vld [vmem:[#allocation16 + $0x3d0] sm:$0xff]
    %v5439 = vld [vmem:[#allocation16 + $0x3d8] sm:$0xff]
    %v5440 = vld [vmem:[#allocation16 + $0x3e0] sm:$0xff]
    %v5441 = vld [vmem:[#allocation16 + $0x3e8] sm:$0xff]
    %v5442 = vld [vmem:[#allocation16 + $0x3f0] sm:$0xff]
    %v5443 = vld [vmem:[#allocation16 + $0x3f8] sm:$0xff]
    %s5444 = scalar_lea.vmem [#allocation2], 32
    %v5445 = vld [vmem:[%s5444] ss:$8 sm:$0xf]
    %v5447 = vlaneseq
    %v5448 = vshrl.u32 %v5447, 7
    %v5449 = vsub.s32 0, %v5448
    %v5450 = vrot.slane %v5445, %v5449
    %v5451 = vlaneseq
    %v5452 = vshrl.u32 %v5451, 7
    %v5453 = vsub.s32 1, %v5452
    %v5454 = vrot.slane %v5445, %v5453
    %v5455 = vlaneseq
    %v5456 = vshrl.u32 %v5455, 7
    %v5457 = vsub.s32 2, %v5456
    %v5458 = vrot.slane %v5445, %v5457
    %v5459 = vlaneseq
    %v5460 = vshrl.u32 %v5459, 7
    %v5461 = vsub.s32 3, %v5460
    %v5462 = vrot.slane %v5445, %v5461
    %v5595 = vunpack.c.l.b16 %v5316
    %v5596 = vunpack.c.h.b16 %v5316
    %v5597 = vunpack.c.l.b16 %v5317
    %v5598 = vunpack.c.h.b16 %v5317
    %v5599 = vunpack.c.l.b16 %v5318
    %v5600 = vunpack.c.h.b16 %v5318
    %v5601 = vunpack.c.l.b16 %v5319
    %v5602 = vunpack.c.h.b16 %v5319
    %v5603 = vunpack.c.l.b16 %v5320
    %v5604 = vunpack.c.h.b16 %v5320
    %v5605 = vunpack.c.l.b16 %v5321
    %v5606 = vunpack.c.h.b16 %v5321
    %v5607 = vunpack.c.l.b16 %v5322
    %v5608 = vunpack.c.h.b16 %v5322
    %v5609 = vunpack.c.l.b16 %v5323
    %v5610 = vunpack.c.h.b16 %v5323
    %v5611 = vunpack.c.l.b16 %v5324
    %v5612 = vunpack.c.h.b16 %v5324
    %v5613 = vunpack.c.l.b16 %v5325
    %v5614 = vunpack.c.h.b16 %v5325
    %v5615 = vunpack.c.l.b16 %v5326
    %v5616 = vunpack.c.h.b16 %v5326
    %v5617 = vunpack.c.l.b16 %v5327
    %v5618 = vunpack.c.h.b16 %v5327
    %v5619 = vunpack.c.l.b16 %v5328
    %v5620 = vunpack.c.h.b16 %v5328
    %v5621 = vunpack.c.l.b16 %v5329
    %v5622 = vunpack.c.h.b16 %v5329
    %v5623 = vunpack.c.l.b16 %v5330
    %v5624 = vunpack.c.h.b16 %v5330
    %v5625 = vunpack.c.l.b16 %v5331
    %v5626 = vunpack.c.h.b16 %v5331
    %v5627 = vunpack.c.l.b16 %v5332
    %v5628 = vunpack.c.h.b16 %v5332
    %v5629 = vunpack.c.l.b16 %v5333
    %v5630 = vunpack.c.h.b16 %v5333
    %v5631 = vunpack.c.l.b16 %v5334
    %v5632 = vunpack.c.h.b16 %v5334
    %v5633 = vunpack.c.l.b16 %v5335
    %v5634 = vunpack.c.h.b16 %v5335
    %v5635 = vunpack.c.l.b16 %v5336
    %v5636 = vunpack.c.h.b16 %v5336
    %v5637 = vunpack.c.l.b16 %v5337
    %v5638 = vunpack.c.h.b16 %v5337
    %v5639 = vunpack.c.l.b16 %v5338
    %v5640 = vunpack.c.h.b16 %v5338
    %v5641 = vunpack.c.l.b16 %v5339
    %v5642 = vunpack.c.h.b16 %v5339
    %v5643 = vunpack.c.l.b16 %v5340
    %v5644 = vunpack.c.h.b16 %v5340
    %v5645 = vunpack.c.l.b16 %v5341
    %v5646 = vunpack.c.h.b16 %v5341
    %v5647 = vunpack.c.l.b16 %v5342
    %v5648 = vunpack.c.h.b16 %v5342
    %v5649 = vunpack.c.l.b16 %v5343
    %v5650 = vunpack.c.h.b16 %v5343
    %v5651 = vunpack.c.l.b16 %v5344
    %v5652 = vunpack.c.h.b16 %v5344
    %v5653 = vunpack.c.l.b16 %v5345
    %v5654 = vunpack.c.h.b16 %v5345
    %v5655 = vunpack.c.l.b16 %v5346
    %v5656 = vunpack.c.h.b16 %v5346
    %v5657 = vunpack.c.l.b16 %v5347
    %v5658 = vunpack.c.h.b16 %v5347
    %v5659 = vunpack.c.l.b16 %v5348
    %v5660 = vunpack.c.h.b16 %v5348
    %v5661 = vunpack.c.l.b16 %v5349
    %v5662 = vunpack.c.h.b16 %v5349
    %v5663 = vunpack.c.l.b16 %v5350
    %v5664 = vunpack.c.h.b16 %v5350
    %v5665 = vunpack.c.l.b16 %v5351
    %v5666 = vunpack.c.h.b16 %v5351
    %v5667 = vunpack.c.l.b16 %v5352
    %v5668 = vunpack.c.h.b16 %v5352
    %v5669 = vunpack.c.l.b16 %v5353
    %v5670 = vunpack.c.h.b16 %v5353
    %v5671 = vunpack.c.l.b16 %v5354
    %v5672 = vunpack.c.h.b16 %v5354
    %v5673 = vunpack.c.l.b16 %v5355
    %v5674 = vunpack.c.h.b16 %v5355
    %v5675 = vunpack.c.l.b16 %v5356
    %v5676 = vunpack.c.h.b16 %v5356
    %v5677 = vunpack.c.l.b16 %v5357
    %v5678 = vunpack.c.h.b16 %v5357
    %v5679 = vunpack.c.l.b16 %v5358
    %v5680 = vunpack.c.h.b16 %v5358
    %v5681 = vunpack.c.l.b16 %v5359
    %v5682 = vunpack.c.h.b16 %v5359
    %v5683 = vunpack.c.l.b16 %v5360
    %v5684 = vunpack.c.h.b16 %v5360
    %v5685 = vunpack.c.l.b16 %v5361
    %v5686 = vunpack.c.h.b16 %v5361
    %v5687 = vunpack.c.l.b16 %v5362
    %v5688 = vunpack.c.h.b16 %v5362
    %v5689 = vunpack.c.l.b16 %v5363
    %v5690 = vunpack.c.h.b16 %v5363
    %v5691 = vunpack.c.l.b16 %v5364
    %v5692 = vunpack.c.h.b16 %v5364
    %v5693 = vunpack.c.l.b16 %v5365
    %v5694 = vunpack.c.h.b16 %v5365
    %v5695 = vunpack.c.l.b16 %v5366
    %v5696 = vunpack.c.h.b16 %v5366
    %v5697 = vunpack.c.l.b16 %v5367
    %v5698 = vunpack.c.h.b16 %v5367
    %v5699 = vunpack.c.l.b16 %v5368
    %v5700 = vunpack.c.h.b16 %v5368
    %v5701 = vunpack.c.l.b16 %v5369
    %v5702 = vunpack.c.h.b16 %v5369
    %v5703 = vunpack.c.l.b16 %v5370
    %v5704 = vunpack.c.h.b16 %v5370
    %v5705 = vunpack.c.l.b16 %v5371
    %v5706 = vunpack.c.h.b16 %v5371
    %v5707 = vunpack.c.l.b16 %v5372
    %v5708 = vunpack.c.h.b16 %v5372
    %v5709 = vunpack.c.l.b16 %v5373
    %v5710 = vunpack.c.h.b16 %v5373
    %v5711 = vunpack.c.l.b16 %v5374
    %v5712 = vunpack.c.h.b16 %v5374
    %v5713 = vunpack.c.l.b16 %v5375
    %v5714 = vunpack.c.h.b16 %v5375
    %v5715 = vunpack.c.l.b16 %v5376
    %v5716 = vunpack.c.h.b16 %v5376
    %v5717 = vunpack.c.l.b16 %v5377
    %v5718 = vunpack.c.h.b16 %v5377
    %v5719 = vunpack.c.l.b16 %v5378
    %v5720 = vunpack.c.h.b16 %v5378
    %v5721 = vunpack.c.l.b16 %v5379
    %v5722 = vunpack.c.h.b16 %v5379
    %v5723 = vunpack.c.l.b16 %v5380
    %v5724 = vunpack.c.h.b16 %v5380
    %v5725 = vunpack.c.l.b16 %v5381
    %v5726 = vunpack.c.h.b16 %v5381
    %v5727 = vunpack.c.l.b16 %v5382
    %v5728 = vunpack.c.h.b16 %v5382
    %v5729 = vunpack.c.l.b16 %v5383
    %v5730 = vunpack.c.h.b16 %v5383
    %v5731 = vunpack.c.l.b16 %v5384
    %v5732 = vunpack.c.h.b16 %v5384
    %v5733 = vunpack.c.l.b16 %v5385
    %v5734 = vunpack.c.h.b16 %v5385
    %v5735 = vunpack.c.l.b16 %v5386
    %v5736 = vunpack.c.h.b16 %v5386
    %v5737 = vunpack.c.l.b16 %v5387
    %v5738 = vunpack.c.h.b16 %v5387
    %v5739 = vunpack.c.l.b16 %v5388
    %v5740 = vunpack.c.h.b16 %v5388
    %v5741 = vunpack.c.l.b16 %v5389
    %v5742 = vunpack.c.h.b16 %v5389
    %v5743 = vunpack.c.l.b16 %v5390
    %v5744 = vunpack.c.h.b16 %v5390
    %v5745 = vunpack.c.l.b16 %v5391
    %v5746 = vunpack.c.h.b16 %v5391
    %v5747 = vunpack.c.l.b16 %v5392
    %v5748 = vunpack.c.h.b16 %v5392
    %v5749 = vunpack.c.l.b16 %v5393
    %v5750 = vunpack.c.h.b16 %v5393
    %v5751 = vunpack.c.l.b16 %v5394
    %v5752 = vunpack.c.h.b16 %v5394
    %v5753 = vunpack.c.l.b16 %v5395
    %v5754 = vunpack.c.h.b16 %v5395
    %v5755 = vunpack.c.l.b16 %v5396
    %v5756 = vunpack.c.h.b16 %v5396
    %v5757 = vunpack.c.l.b16 %v5397
    %v5758 = vunpack.c.h.b16 %v5397
    %v5759 = vunpack.c.l.b16 %v5398
    %v5760 = vunpack.c.h.b16 %v5398
    %v5761 = vunpack.c.l.b16 %v5399
    %v5762 = vunpack.c.h.b16 %v5399
    %v5763 = vunpack.c.l.b16 %v5400
    %v5764 = vunpack.c.h.b16 %v5400
    %v5765 = vunpack.c.l.b16 %v5401
    %v5766 = vunpack.c.h.b16 %v5401
    %v5767 = vunpack.c.l.b16 %v5402
    %v5768 = vunpack.c.h.b16 %v5402
    %v5769 = vunpack.c.l.b16 %v5403
    %v5770 = vunpack.c.h.b16 %v5403
    %v5771 = vunpack.c.l.b16 %v5404
    %v5772 = vunpack.c.h.b16 %v5404
    %v5773 = vunpack.c.l.b16 %v5405
    %v5774 = vunpack.c.h.b16 %v5405
    %v5775 = vunpack.c.l.b16 %v5406
    %v5776 = vunpack.c.h.b16 %v5406
    %v5777 = vunpack.c.l.b16 %v5407
    %v5778 = vunpack.c.h.b16 %v5407
    %v5779 = vunpack.c.l.b16 %v5408
    %v5780 = vunpack.c.h.b16 %v5408
    %v5781 = vunpack.c.l.b16 %v5409
    %v5782 = vunpack.c.h.b16 %v5409
    %v5783 = vunpack.c.l.b16 %v5410
    %v5784 = vunpack.c.h.b16 %v5410
    %v5785 = vunpack.c.l.b16 %v5411
    %v5786 = vunpack.c.h.b16 %v5411
    %v5787 = vunpack.c.l.b16 %v5412
    %v5788 = vunpack.c.h.b16 %v5412
    %v5789 = vunpack.c.l.b16 %v5413
    %v5790 = vunpack.c.h.b16 %v5413
    %v5791 = vunpack.c.l.b16 %v5414
    %v5792 = vunpack.c.h.b16 %v5414
    %v5793 = vunpack.c.l.b16 %v5415
    %v5794 = vunpack.c.h.b16 %v5415
    %v5795 = vunpack.c.l.b16 %v5416
    %v5796 = vunpack.c.h.b16 %v5416
    %v5797 = vunpack.c.l.b16 %v5417
    %v5798 = vunpack.c.h.b16 %v5417
    %v5799 = vunpack.c.l.b16 %v5418
    %v5800 = vunpack.c.h.b16 %v5418
    %v5801 = vunpack.c.l.b16 %v5419
    %v5802 = vunpack.c.h.b16 %v5419
    %v5803 = vunpack.c.l.b16 %v5420
    %v5804 = vunpack.c.h.b16 %v5420
    %v5805 = vunpack.c.l.b16 %v5421
    %v5806 = vunpack.c.h.b16 %v5421
    %v5807 = vunpack.c.l.b16 %v5422
    %v5808 = vunpack.c.h.b16 %v5422
    %v5809 = vunpack.c.l.b16 %v5423
    %v5810 = vunpack.c.h.b16 %v5423
    %v5811 = vunpack.c.l.b16 %v5424
    %v5812 = vunpack.c.h.b16 %v5424
    %v5813 = vunpack.c.l.b16 %v5425
    %v5814 = vunpack.c.h.b16 %v5425
    %v5815 = vunpack.c.l.b16 %v5426
    %v5816 = vunpack.c.h.b16 %v5426
    %v5817 = vunpack.c.l.b16 %v5427
    %v5818 = vunpack.c.h.b16 %v5427
    %v5819 = vunpack.c.l.b16 %v5428
    %v5820 = vunpack.c.h.b16 %v5428
    %v5821 = vunpack.c.l.b16 %v5429
    %v5822 = vunpack.c.h.b16 %v5429
    %v5823 = vunpack.c.l.b16 %v5430
    %v5824 = vunpack.c.h.b16 %v5430
    %v5825 = vunpack.c.l.b16 %v5431
    %v5826 = vunpack.c.h.b16 %v5431
    %v5827 = vunpack.c.l.b16 %v5432
    %v5828 = vunpack.c.h.b16 %v5432
    %v5829 = vunpack.c.l.b16 %v5433
    %v5830 = vunpack.c.h.b16 %v5433
    %v5831 = vunpack.c.l.b16 %v5434
    %v5832 = vunpack.c.h.b16 %v5434
    %v5833 = vunpack.c.l.b16 %v5435
    %v5834 = vunpack.c.h.b16 %v5435
    %v5835 = vunpack.c.l.b16 %v5436
    %v5836 = vunpack.c.h.b16 %v5436
    %v5837 = vunpack.c.l.b16 %v5437
    %v5838 = vunpack.c.h.b16 %v5437
    %v5839 = vunpack.c.l.b16 %v5438
    %v5840 = vunpack.c.h.b16 %v5438
    %v5841 = vunpack.c.l.b16 %v5439
    %v5842 = vunpack.c.h.b16 %v5439
    %v5843 = vunpack.c.l.b16 %v5440
    %v5844 = vunpack.c.h.b16 %v5440
    %v5845 = vunpack.c.l.b16 %v5441
    %v5846 = vunpack.c.h.b16 %v5441
    %v5847 = vunpack.c.l.b16 %v5442
    %v5848 = vunpack.c.h.b16 %v5442
    %v5849 = vunpack.c.l.b16 %v5443
    %v5850 = vunpack.c.h.b16 %v5443
    %v5851 = vpack.c.b16 %v5599, %v5595
    %v5852 = vpack.c.b16 %v5600, %v5596
    %v5853 = vpack.c.b16 %v5601, %v5597
    %v5854 = vpack.c.b16 %v5602, %v5598
    %v5855 = vpack.c.b16 %v5607, %v5603
    %v5856 = vpack.c.b16 %v5608, %v5604
    %v5857 = vpack.c.b16 %v5609, %v5605
    %v5858 = vpack.c.b16 %v5610, %v5606
    %v5859 = vpack.c.b16 %v5615, %v5611
    %v5860 = vpack.c.b16 %v5616, %v5612
    %v5861 = vpack.c.b16 %v5617, %v5613
    %v5862 = vpack.c.b16 %v5618, %v5614
    %v5863 = vpack.c.b16 %v5623, %v5619
    %v5864 = vpack.c.b16 %v5624, %v5620
    %v5865 = vpack.c.b16 %v5625, %v5621
    %v5866 = vpack.c.b16 %v5626, %v5622
    %v5867 = vpack.c.b16 %v5631, %v5627
    %v5868 = vpack.c.b16 %v5632, %v5628
    %v5869 = vpack.c.b16 %v5633, %v5629
    %v5870 = vpack.c.b16 %v5634, %v5630
    %v5871 = vpack.c.b16 %v5639, %v5635
    %v5872 = vpack.c.b16 %v5640, %v5636
    %v5873 = vpack.c.b16 %v5641, %v5637
    %v5874 = vpack.c.b16 %v5642, %v5638
    %v5875 = vpack.c.b16 %v5647, %v5643
    %v5876 = vpack.c.b16 %v5648, %v5644
    %v5877 = vpack.c.b16 %v5649, %v5645
    %v5878 = vpack.c.b16 %v5650, %v5646
    %v5879 = vpack.c.b16 %v5655, %v5651
    %v5880 = vpack.c.b16 %v5656, %v5652
    %v5881 = vpack.c.b16 %v5657, %v5653
    %v5882 = vpack.c.b16 %v5658, %v5654
    %v5883 = vpack.c.b16 %v5663, %v5659
    %v5884 = vpack.c.b16 %v5664, %v5660
    %v5885 = vpack.c.b16 %v5665, %v5661
    %v5886 = vpack.c.b16 %v5666, %v5662
    %v5887 = vpack.c.b16 %v5671, %v5667
    %v5888 = vpack.c.b16 %v5672, %v5668
    %v5889 = vpack.c.b16 %v5673, %v5669
    %v5890 = vpack.c.b16 %v5674, %v5670
    %v5891 = vpack.c.b16 %v5679, %v5675
    %v5892 = vpack.c.b16 %v5680, %v5676
    %v5893 = vpack.c.b16 %v5681, %v5677
    %v5894 = vpack.c.b16 %v5682, %v5678
    %v5895 = vpack.c.b16 %v5687, %v5683
    %v5896 = vpack.c.b16 %v5688, %v5684
    %v5897 = vpack.c.b16 %v5689, %v5685
    %v5898 = vpack.c.b16 %v5690, %v5686
    %v5899 = vpack.c.b16 %v5695, %v5691
    %v5900 = vpack.c.b16 %v5696, %v5692
    %v5901 = vpack.c.b16 %v5697, %v5693
    %v5902 = vpack.c.b16 %v5698, %v5694
    %v5903 = vpack.c.b16 %v5703, %v5699
    %v5904 = vpack.c.b16 %v5704, %v5700
    %v5905 = vpack.c.b16 %v5705, %v5701
    %v5906 = vpack.c.b16 %v5706, %v5702
    %v5907 = vpack.c.b16 %v5711, %v5707
    %v5908 = vpack.c.b16 %v5712, %v5708
    %v5909 = vpack.c.b16 %v5713, %v5709
    %v5910 = vpack.c.b16 %v5714, %v5710
    %v5911 = vpack.c.b16 %v5719, %v5715
    %v5912 = vpack.c.b16 %v5720, %v5716
    %v5913 = vpack.c.b16 %v5721, %v5717
    %v5914 = vpack.c.b16 %v5722, %v5718
    %v5915 = vpack.c.b16 %v5727, %v5723
    %v5916 = vpack.c.b16 %v5728, %v5724
    %v5917 = vpack.c.b16 %v5729, %v5725
    %v5918 = vpack.c.b16 %v5730, %v5726
    %v5919 = vpack.c.b16 %v5735, %v5731
    %v5920 = vpack.c.b16 %v5736, %v5732
    %v5921 = vpack.c.b16 %v5737, %v5733
    %v5922 = vpack.c.b16 %v5738, %v5734
    %v5923 = vpack.c.b16 %v5743, %v5739
    %v5924 = vpack.c.b16 %v5744, %v5740
    %v5925 = vpack.c.b16 %v5745, %v5741
    %v5926 = vpack.c.b16 %v5746, %v5742
    %v5927 = vpack.c.b16 %v5751, %v5747
    %v5928 = vpack.c.b16 %v5752, %v5748
    %v5929 = vpack.c.b16 %v5753, %v5749
    %v5930 = vpack.c.b16 %v5754, %v5750
    %v5931 = vpack.c.b16 %v5759, %v5755
    %v5932 = vpack.c.b16 %v5760, %v5756
    %v5933 = vpack.c.b16 %v5761, %v5757
    %v5934 = vpack.c.b16 %v5762, %v5758
    %v5935 = vpack.c.b16 %v5767, %v5763
    %v5936 = vpack.c.b16 %v5768, %v5764
    %v5937 = vpack.c.b16 %v5769, %v5765
    %v5938 = vpack.c.b16 %v5770, %v5766
    %v5939 = vpack.c.b16 %v5775, %v5771
    %v5940 = vpack.c.b16 %v5776, %v5772
    %v5941 = vpack.c.b16 %v5777, %v5773
    %v5942 = vpack.c.b16 %v5778, %v5774
    %v5943 = vpack.c.b16 %v5783, %v5779
    %v5944 = vpack.c.b16 %v5784, %v5780
    %v5945 = vpack.c.b16 %v5785, %v5781
    %v5946 = vpack.c.b16 %v5786, %v5782
    %v5947 = vpack.c.b16 %v5791, %v5787
    %v5948 = vpack.c.b16 %v5792, %v5788
    %v5949 = vpack.c.b16 %v5793, %v5789
    %v5950 = vpack.c.b16 %v5794, %v5790
    %v5951 = vpack.c.b16 %v5799, %v5795
    %v5952 = vpack.c.b16 %v5800, %v5796
    %v5953 = vpack.c.b16 %v5801, %v5797
    %v5954 = vpack.c.b16 %v5802, %v5798
    %v5955 = vpack.c.b16 %v5807, %v5803
    %v5956 = vpack.c.b16 %v5808, %v5804
    %v5957 = vpack.c.b16 %v5809, %v5805
    %v5958 = vpack.c.b16 %v5810, %v5806
    %v5959 = vpack.c.b16 %v5815, %v5811
    %v5960 = vpack.c.b16 %v5816, %v5812
    %v5961 = vpack.c.b16 %v5817, %v5813
    %v5962 = vpack.c.b16 %v5818, %v5814
    %v5963 = vpack.c.b16 %v5823, %v5819
    %v5964 = vpack.c.b16 %v5824, %v5820
    %v5965 = vpack.c.b16 %v5825, %v5821
    %v5966 = vpack.c.b16 %v5826, %v5822
    %v5967 = vpack.c.b16 %v5831, %v5827
    %v5968 = vpack.c.b16 %v5832, %v5828
    %v5969 = vpack.c.b16 %v5833, %v5829
    %v5970 = vpack.c.b16 %v5834, %v5830
    %v5971 = vpack.c.b16 %v5839, %v5835
    %v5972 = vpack.c.b16 %v5840, %v5836
    %v5973 = vpack.c.b16 %v5841, %v5837
    %v5974 = vpack.c.b16 %v5842, %v5838
    %v5975 = vpack.c.b16 %v5847, %v5843
    %v5976 = vpack.c.b16 %v5848, %v5844
    %v5977 = vpack.c.b16 %v5849, %v5845
    %v5978 = vpack.c.b16 %v5850, %v5846
    %6107 = vmatprep.subr.bf16.mxu0 %v5880
    %6108 = vmatpush1.bf16.msra.mxu0 %v5879
    %6109 = vmatprep.subr.bf16.mxu0 %v5876
    %6110 = vmatpush1.bf16.msra.mxu0 %v5875
    %6111 = vmatprep.subr.bf16.mxu0 %v5872
    %6112 = vmatpush1.bf16.msra.mxu0 %v5871
    %6113 = vmatprep.subr.bf16.mxu0 %v5868
    %6114 = vmatpush1.bf16.msra.mxu0 %v5867
    %6115 = vmatprep.subr.bf16.mxu0 %v5864
    %6116 = vmatpush1.bf16.msra.mxu0 %v5863
    %6117 = vmatprep.subr.bf16.mxu0 %v5860
    %6118 = vmatpush1.bf16.msra.mxu0 %v5859
    %6119 = vmatprep.subr.bf16.mxu0 %v5856
    %6120 = vmatpush1.bf16.msra.mxu0 %v5855
    %6121 = vmatprep.subr.bf16.mxu0 %v5852
    %6122 = vmatpush1.bf16.msra.mxu0 %v5851
    %6123 = vmatprep.subr.bf16.mxu0 %v5912
    %6124 = vmatpush2.bf16.msra.mxu0 %v5911
    %6125 = vmatprep.subr.bf16.mxu0 %v5908
    %6126 = vmatpush2.bf16.msra.mxu0 %v5907
    %6127 = vmatprep.subr.bf16.mxu0 %v5904
    %6128 = vmatpush2.bf16.msra.mxu0 %v5903
    %6129 = vmatprep.subr.bf16.mxu0 %v5900
    %6130 = vmatpush2.bf16.msra.mxu0 %v5899
    %6131 = vmatprep.subr.bf16.mxu0 %v5896
    %6132 = vmatpush2.bf16.msra.mxu0 %v5895
    %6133 = vmatprep.subr.bf16.mxu0 %v5892
    %6134 = vmatpush2.bf16.msra.mxu0 %v5891
    %6135 = vmatprep.subr.bf16.mxu0 %v5888
    %6136 = vmatpush2.bf16.msra.mxu0 %v5887
    %6137 = vmatprep.subr.bf16.mxu0 %v5884
    %6138 = vmatpush2.bf16.msra.mxu0 %v5883
    %6139 = vmatprep.mubr.bf16.mxu0 %v5313
    %6140 = vmatmul.mubr.bf16.gmra.mxu0 %v5312
    %v6141 = vpop.f32.mrf.mxu0
    %v6142 = vadd.f32 %v5450, %v6141
    %v6143 = vpop.f32.mrf.mxu0
    %v6144 = vadd.f32 %v5454, %v6143
    %v6145 = vpop.f32.mrf.mxu0
    %v6146 = vpop.f32.mrf.mxu0
    %6147 = vdwg.mxu0
    %6148 = vmatprep.subr.bf16.mxu0 %v5944
    %6149 = vmatpush1.bf16.msra.mxu0 %v5943
    %6150 = vmatprep.subr.bf16.mxu0 %v5940
    %6151 = vmatpush1.bf16.msra.mxu0 %v5939
    %6152 = vmatprep.subr.bf16.mxu0 %v5936
    %6153 = vmatpush1.bf16.msra.mxu0 %v5935
    %6154 = vmatprep.subr.bf16.mxu0 %v5932
    %6155 = vmatpush1.bf16.msra.mxu0 %v5931
    %6156 = vmatprep.subr.bf16.mxu0 %v5928
    %6157 = vmatpush1.bf16.msra.mxu0 %v5927
    %6158 = vmatprep.subr.bf16.mxu0 %v5924
    %6159 = vmatpush1.bf16.msra.mxu0 %v5923
    %6160 = vmatprep.subr.bf16.mxu0 %v5920
    %6161 = vmatpush1.bf16.msra.mxu0 %v5919
    %6162 = vmatprep.subr.bf16.mxu0 %v5916
    %6163 = vmatpush1.bf16.msra.mxu0 %v5915
    %6164 = vmatprep.subr.bf16.mxu0 %v5976
    %6165 = vmatpush2.bf16.msra.mxu0 %v5975
    %6166 = vmatprep.subr.bf16.mxu0 %v5972
    %6167 = vmatpush2.bf16.msra.mxu0 %v5971
    %6168 = vmatprep.subr.bf16.mxu0 %v5968
    %6169 = vmatpush2.bf16.msra.mxu0 %v5967
    %6170 = vmatprep.subr.bf16.mxu0 %v5964
    %6171 = vmatpush2.bf16.msra.mxu0 %v5963
    %6172 = vmatprep.subr.bf16.mxu0 %v5960
    %6173 = vmatpush2.bf16.msra.mxu0 %v5959
    %6174 = vmatprep.subr.bf16.mxu0 %v5956
    %6175 = vmatpush2.bf16.msra.mxu0 %v5955
    %6176 = vmatprep.subr.bf16.mxu0 %v5952
    %6177 = vmatpush2.bf16.msra.mxu0 %v5951
    %6178 = vmatprep.subr.bf16.mxu0 %v5948
    %6179 = vmatpush2.bf16.msra.mxu0 %v5947
    %6180 = vmatprep.mubr.bf16.mxu0 %v5315
    %6181 = vmatmul.mubr.bf16.gmra.mxu0 %v5314
    %v6182 = vpop.f32.mrf.mxu0
    %v6183 = vadd.f32 %v6142, %v6182
    %v6184 = vpop.f32.mrf.mxu0
    %v6185 = vadd.f32 %v6144, %v6184
    %v6186 = vpop.f32.mrf.mxu0
    %v6187 = vpop.f32.mrf.mxu0
    %6188 = vdwg.mxu0
    %6189 = vmatprep.subr.bf16.mxu0 %v5882
    %6190 = vmatpush1.bf16.msra.mxu0 %v5881
    %6191 = vmatprep.subr.bf16.mxu0 %v5878
    %6192 = vmatpush1.bf16.msra.mxu0 %v5877
    %6193 = vmatprep.subr.bf16.mxu0 %v5874
    %6194 = vmatpush1.bf16.msra.mxu0 %v5873
    %6195 = vmatprep.subr.bf16.mxu0 %v5870
    %6196 = vmatpush1.bf16.msra.mxu0 %v5869
    %6197 = vmatprep.subr.bf16.mxu0 %v5866
    %6198 = vmatpush1.bf16.msra.mxu0 %v5865
    %6199 = vmatprep.subr.bf16.mxu0 %v5862
    %6200 = vmatpush1.bf16.msra.mxu0 %v5861
    %6201 = vmatprep.subr.bf16.mxu0 %v5858
    %6202 = vmatpush1.bf16.msra.mxu0 %v5857
    %6203 = vmatprep.subr.bf16.mxu0 %v5854
    %6204 = vmatpush1.bf16.msra.mxu0 %v5853
    %6205 = vmatprep.subr.bf16.mxu0 %v5914
    %6206 = vmatpush2.bf16.msra.mxu0 %v5913
    %6207 = vmatprep.subr.bf16.mxu0 %v5910
    %6208 = vmatpush2.bf16.msra.mxu0 %v5909
    %6209 = vmatprep.subr.bf16.mxu0 %v5906
    %6210 = vmatpush2.bf16.msra.mxu0 %v5905
    %6211 = vmatprep.subr.bf16.mxu0 %v5902
    %6212 = vmatpush2.bf16.msra.mxu0 %v5901
    %6213 = vmatprep.subr.bf16.mxu0 %v5898
    %6214 = vmatpush2.bf16.msra.mxu0 %v5897
    %6215 = vmatprep.subr.bf16.mxu0 %v5894
    %6216 = vmatpush2.bf16.msra.mxu0 %v5893
    %6217 = vmatprep.subr.bf16.mxu0 %v5890
    %6218 = vmatpush2.bf16.msra.mxu0 %v5889
    %6219 = vmatprep.subr.bf16.mxu0 %v5886
    %6220 = vmatpush2.bf16.msra.mxu0 %v5885
    %6221 = vmatprep.mubr.bf16.mxu0 %v5313
    %6222 = vmatmul.mubr.bf16.gmra.mxu0 %v5312
    %v6223 = vpop.f32.mrf.mxu0
    %v6224 = vadd.f32 %v5458, %v6223
    %v6225 = vpop.f32.mrf.mxu0
    %v6226 = vadd.f32 %v5462, %v6225
    %v6227 = vpop.f32.mrf.mxu0
    %v6228 = vpop.f32.mrf.mxu0
    %6229 = vdwg.mxu0
    %6230 = vmatprep.subr.bf16.mxu0 %v5946
    %6231 = vmatpush1.bf16.msra.mxu0 %v5945
    %6232 = vmatprep.subr.bf16.mxu0 %v5942
    %6233 = vmatpush1.bf16.msra.mxu0 %v5941
    %6234 = vmatprep.subr.bf16.mxu0 %v5938
    %6235 = vmatpush1.bf16.msra.mxu0 %v5937
    %6236 = vmatprep.subr.bf16.mxu0 %v5934
    %6237 = vmatpush1.bf16.msra.mxu0 %v5933
    %6238 = vmatprep.subr.bf16.mxu0 %v5930
    %6239 = vmatpush1.bf16.msra.mxu0 %v5929
    %6240 = vmatprep.subr.bf16.mxu0 %v5926
    %6241 = vmatpush1.bf16.msra.mxu0 %v5925
    %6242 = vmatprep.subr.bf16.mxu0 %v5922
    %6243 = vmatpush1.bf16.msra.mxu0 %v5921
    %6244 = vmatprep.subr.bf16.mxu0 %v5918
    %6245 = vmatpush1.bf16.msra.mxu0 %v5917
    %6246 = vmatprep.subr.bf16.mxu0 %v5978
    %6247 = vmatpush2.bf16.msra.mxu0 %v5977
    %6248 = vmatprep.subr.bf16.mxu0 %v5974
    %6249 = vmatpush2.bf16.msra.mxu0 %v5973
    %6250 = vmatprep.subr.bf16.mxu0 %v5970
    %6251 = vmatpush2.bf16.msra.mxu0 %v5969
    %6252 = vmatprep.subr.bf16.mxu0 %v5966
    %6253 = vmatpush2.bf16.msra.mxu0 %v5965
    %6254 = vmatprep.subr.bf16.mxu0 %v5962
    %6255 = vmatpush2.bf16.msra.mxu0 %v5961
    %6256 = vmatprep.subr.bf16.mxu0 %v5958
    %6257 = vmatpush2.bf16.msra.mxu0 %v5957
    %6258 = vmatprep.subr.bf16.mxu0 %v5954
    %6259 = vmatpush2.bf16.msra.mxu0 %v5953
    %6260 = vmatprep.subr.bf16.mxu0 %v5950
    %6261 = vmatpush2.bf16.msra.mxu0 %v5949
    %6262 = vmatprep.mubr.bf16.mxu0 %v5315
    %6263 = vmatmul.mubr.bf16.gmra.mxu0 %v5314
    %v6264 = vpop.f32.mrf.mxu0
    %v6265 = vadd.f32 %v6224, %v6264
    %v6266 = vpop.f32.mrf.mxu0
    %v6267 = vadd.f32 %v6226, %v6266
    %v6268 = vpop.f32.mrf.mxu0
    %v6269 = vpop.f32.mrf.mxu0
    %6270 = vdwg.mxu0
    %v6271 = vmax.f32 %v6183, 0.0
    %v6272 = vmax.f32 %v6185, 0.0
    %v6273 = vmax.f32 %v6265, 0.0
    %v6274 = vmax.f32 %v6267, 0.0
    %v6275 = vpack.c.bf16 %v6271, %v6271
    %v6276 = vpack.c.bf16 %v6272, %v6272
    %v6277 = vpack.c.bf16 %v6273, %v6273
    %v6278 = vpack.c.bf16 %v6274, %v6274
    %v6279 = vld [vmem:[#allocation17] sm:$0xff]
    %v6280 = vld [vmem:[#allocation17 + $0x8] sm:$0xff]
    %v6281 = vld [vmem:[#allocation17 + $0x10] sm:$0xff]
    %v6282 = vld [vmem:[#allocation17 + $0x18] sm:$0xff]
    %v6283 = vld [vmem:[#allocation17 + $0x20] sm:$0xff]
    %v6284 = vld [vmem:[#allocation17 + $0x28] sm:$0xff]
    %v6285 = vld [vmem:[#allocation17 + $0x30] sm:$0xff]
    %v6286 = vld [vmem:[#allocation17 + $0x38] sm:$0xff]
    %v6287 = vld [vmem:[#allocation17 + $0x40] sm:$0xff]
    %v6288 = vld [vmem:[#allocation17 + $0x48] sm:$0xff]
    %v6289 = vld [vmem:[#allocation17 + $0x50] sm:$0xff]
    %v6290 = vld [vmem:[#allocation17 + $0x58] sm:$0xff]
    %v6291 = vld [vmem:[#allocation17 + $0x60] sm:$0xff]
    %v6292 = vld [vmem:[#allocation17 + $0x68] sm:$0xff]
    %v6293 = vld [vmem:[#allocation17 + $0x70] sm:$0xff]
    %v6294 = vld [vmem:[#allocation17 + $0x78] sm:$0xff]
    %v6295 = vld [vmem:[#allocation17 + $0x80] sm:$0xff]
    %v6296 = vld [vmem:[#allocation17 + $0x88] sm:$0xff]
    %v6297 = vld [vmem:[#allocation17 + $0x90] sm:$0xff]
    %v6298 = vld [vmem:[#allocation17 + $0x98] sm:$0xff]
    %v6299 = vld [vmem:[#allocation17 + $0xa0] sm:$0xff]
    %v6300 = vld [vmem:[#allocation17 + $0xa8] sm:$0xff]
    %v6301 = vld [vmem:[#allocation17 + $0xb0] sm:$0xff]
    %v6302 = vld [vmem:[#allocation17 + $0xb8] sm:$0xff]
    %v6303 = vld [vmem:[#allocation17 + $0xc0] sm:$0xff]
    %v6304 = vld [vmem:[#allocation17 + $0xc8] sm:$0xff]
    %v6305 = vld [vmem:[#allocation17 + $0xd0] sm:$0xff]
    %v6306 = vld [vmem:[#allocation17 + $0xd8] sm:$0xff]
    %v6307 = vld [vmem:[#allocation17 + $0xe0] sm:$0xff]
    %v6308 = vld [vmem:[#allocation17 + $0xe8] sm:$0xff]
    %v6309 = vld [vmem:[#allocation17 + $0xf0] sm:$0xff]
    %v6310 = vld [vmem:[#allocation17 + $0xf8] sm:$0xff]
    %v6311 = vld [vmem:[#allocation17 + $0x100] sm:$0xff]
    %v6312 = vld [vmem:[#allocation17 + $0x108] sm:$0xff]
    %v6313 = vld [vmem:[#allocation17 + $0x110] sm:$0xff]
    %v6314 = vld [vmem:[#allocation17 + $0x118] sm:$0xff]
    %v6315 = vld [vmem:[#allocation17 + $0x120] sm:$0xff]
    %v6316 = vld [vmem:[#allocation17 + $0x128] sm:$0xff]
    %v6317 = vld [vmem:[#allocation17 + $0x130] sm:$0xff]
    %v6318 = vld [vmem:[#allocation17 + $0x138] sm:$0xff]
    %v6319 = vld [vmem:[#allocation17 + $0x140] sm:$0xff]
    %v6320 = vld [vmem:[#allocation17 + $0x148] sm:$0xff]
    %v6321 = vld [vmem:[#allocation17 + $0x150] sm:$0xff]
    %v6322 = vld [vmem:[#allocation17 + $0x158] sm:$0xff]
    %v6323 = vld [vmem:[#allocation17 + $0x160] sm:$0xff]
    %v6324 = vld [vmem:[#allocation17 + $0x168] sm:$0xff]
    %v6325 = vld [vmem:[#allocation17 + $0x170] sm:$0xff]
    %v6326 = vld [vmem:[#allocation17 + $0x178] sm:$0xff]
    %v6327 = vld [vmem:[#allocation17 + $0x180] sm:$0xff]
    %v6328 = vld [vmem:[#allocation17 + $0x188] sm:$0xff]
    %v6329 = vld [vmem:[#allocation17 + $0x190] sm:$0xff]
    %v6330 = vld [vmem:[#allocation17 + $0x198] sm:$0xff]
    %v6331 = vld [vmem:[#allocation17 + $0x1a0] sm:$0xff]
    %v6332 = vld [vmem:[#allocation17 + $0x1a8] sm:$0xff]
    %v6333 = vld [vmem:[#allocation17 + $0x1b0] sm:$0xff]
    %v6334 = vld [vmem:[#allocation17 + $0x1b8] sm:$0xff]
    %v6335 = vld [vmem:[#allocation17 + $0x1c0] sm:$0xff]
    %v6336 = vld [vmem:[#allocation17 + $0x1c8] sm:$0xff]
    %v6337 = vld [vmem:[#allocation17 + $0x1d0] sm:$0xff]
    %v6338 = vld [vmem:[#allocation17 + $0x1d8] sm:$0xff]
    %v6339 = vld [vmem:[#allocation17 + $0x1e0] sm:$0xff]
    %v6340 = vld [vmem:[#allocation17 + $0x1e8] sm:$0xff]
    %v6341 = vld [vmem:[#allocation17 + $0x1f0] sm:$0xff]
    %v6342 = vld [vmem:[#allocation17 + $0x1f8] sm:$0xff]
    %s6343 = scalar_lea.vmem [#allocation2], 33
    %v6344 = vld [vmem:[%s6343] ss:$8 sm:$0x3]
    %v6346 = vlaneseq
    %v6347 = vshrl.u32 %v6346, 7
    %v6348 = vsub.s32 0, %v6347
    %v6349 = vrot.slane %v6344, %v6348
    %v6350 = vlaneseq
    %v6351 = vshrl.u32 %v6350, 7
    %v6352 = vsub.s32 1, %v6351
    %v6353 = vrot.slane %v6344, %v6352
    %v6420 = vunpack.c.l.b16 %v6279
    %v6421 = vunpack.c.h.b16 %v6279
    %v6422 = vunpack.c.l.b16 %v6280
    %v6423 = vunpack.c.h.b16 %v6280
    %v6424 = vunpack.c.l.b16 %v6281
    %v6425 = vunpack.c.h.b16 %v6281
    %v6426 = vunpack.c.l.b16 %v6282
    %v6427 = vunpack.c.h.b16 %v6282
    %v6428 = vunpack.c.l.b16 %v6283
    %v6429 = vunpack.c.h.b16 %v6283
    %v6430 = vunpack.c.l.b16 %v6284
    %v6431 = vunpack.c.h.b16 %v6284
    %v6432 = vunpack.c.l.b16 %v6285
    %v6433 = vunpack.c.h.b16 %v6285
    %v6434 = vunpack.c.l.b16 %v6286
    %v6435 = vunpack.c.h.b16 %v6286
    %v6436 = vunpack.c.l.b16 %v6287
    %v6437 = vunpack.c.h.b16 %v6287
    %v6438 = vunpack.c.l.b16 %v6288
    %v6439 = vunpack.c.h.b16 %v6288
    %v6440 = vunpack.c.l.b16 %v6289
    %v6441 = vunpack.c.h.b16 %v6289
    %v6442 = vunpack.c.l.b16 %v6290
    %v6443 = vunpack.c.h.b16 %v6290
    %v6444 = vunpack.c.l.b16 %v6291
    %v6445 = vunpack.c.h.b16 %v6291
    %v6446 = vunpack.c.l.b16 %v6292
    %v6447 = vunpack.c.h.b16 %v6292
    %v6448 = vunpack.c.l.b16 %v6293
    %v6449 = vunpack.c.h.b16 %v6293
    %v6450 = vunpack.c.l.b16 %v6294
    %v6451 = vunpack.c.h.b16 %v6294
    %v6452 = vunpack.c.l.b16 %v6295
    %v6453 = vunpack.c.h.b16 %v6295
    %v6454 = vunpack.c.l.b16 %v6296
    %v6455 = vunpack.c.h.b16 %v6296
    %v6456 = vunpack.c.l.b16 %v6297
    %v6457 = vunpack.c.h.b16 %v6297
    %v6458 = vunpack.c.l.b16 %v6298
    %v6459 = vunpack.c.h.b16 %v6298
    %v6460 = vunpack.c.l.b16 %v6299
    %v6461 = vunpack.c.h.b16 %v6299
    %v6462 = vunpack.c.l.b16 %v6300
    %v6463 = vunpack.c.h.b16 %v6300
    %v6464 = vunpack.c.l.b16 %v6301
    %v6465 = vunpack.c.h.b16 %v6301
    %v6466 = vunpack.c.l.b16 %v6302
    %v6467 = vunpack.c.h.b16 %v6302
    %v6468 = vunpack.c.l.b16 %v6303
    %v6469 = vunpack.c.h.b16 %v6303
    %v6470 = vunpack.c.l.b16 %v6304
    %v6471 = vunpack.c.h.b16 %v6304
    %v6472 = vunpack.c.l.b16 %v6305
    %v6473 = vunpack.c.h.b16 %v6305
    %v6474 = vunpack.c.l.b16 %v6306
    %v6475 = vunpack.c.h.b16 %v6306
    %v6476 = vunpack.c.l.b16 %v6307
    %v6477 = vunpack.c.h.b16 %v6307
    %v6478 = vunpack.c.l.b16 %v6308
    %v6479 = vunpack.c.h.b16 %v6308
    %v6480 = vunpack.c.l.b16 %v6309
    %v6481 = vunpack.c.h.b16 %v6309
    %v6482 = vunpack.c.l.b16 %v6310
    %v6483 = vunpack.c.h.b16 %v6310
    %v6484 = vunpack.c.l.b16 %v6311
    %v6485 = vunpack.c.h.b16 %v6311
    %v6486 = vunpack.c.l.b16 %v6312
    %v6487 = vunpack.c.h.b16 %v6312
    %v6488 = vunpack.c.l.b16 %v6313
    %v6489 = vunpack.c.h.b16 %v6313
    %v6490 = vunpack.c.l.b16 %v6314
    %v6491 = vunpack.c.h.b16 %v6314
    %v6492 = vunpack.c.l.b16 %v6315
    %v6493 = vunpack.c.h.b16 %v6315
    %v6494 = vunpack.c.l.b16 %v6316
    %v6495 = vunpack.c.h.b16 %v6316
    %v6496 = vunpack.c.l.b16 %v6317
    %v6497 = vunpack.c.h.b16 %v6317
    %v6498 = vunpack.c.l.b16 %v6318
    %v6499 = vunpack.c.h.b16 %v6318
    %v6500 = vunpack.c.l.b16 %v6319
    %v6501 = vunpack.c.h.b16 %v6319
    %v6502 = vunpack.c.l.b16 %v6320
    %v6503 = vunpack.c.h.b16 %v6320
    %v6504 = vunpack.c.l.b16 %v6321
    %v6505 = vunpack.c.h.b16 %v6321
    %v6506 = vunpack.c.l.b16 %v6322
    %v6507 = vunpack.c.h.b16 %v6322
    %v6508 = vunpack.c.l.b16 %v6323
    %v6509 = vunpack.c.h.b16 %v6323
    %v6510 = vunpack.c.l.b16 %v6324
    %v6511 = vunpack.c.h.b16 %v6324
    %v6512 = vunpack.c.l.b16 %v6325
    %v6513 = vunpack.c.h.b16 %v6325
    %v6514 = vunpack.c.l.b16 %v6326
    %v6515 = vunpack.c.h.b16 %v6326
    %v6516 = vunpack.c.l.b16 %v6327
    %v6517 = vunpack.c.h.b16 %v6327
    %v6518 = vunpack.c.l.b16 %v6328
    %v6519 = vunpack.c.h.b16 %v6328
    %v6520 = vunpack.c.l.b16 %v6329
    %v6521 = vunpack.c.h.b16 %v6329
    %v6522 = vunpack.c.l.b16 %v6330
    %v6523 = vunpack.c.h.b16 %v6330
    %v6524 = vunpack.c.l.b16 %v6331
    %v6525 = vunpack.c.h.b16 %v6331
    %v6526 = vunpack.c.l.b16 %v6332
    %v6527 = vunpack.c.h.b16 %v6332
    %v6528 = vunpack.c.l.b16 %v6333
    %v6529 = vunpack.c.h.b16 %v6333
    %v6530 = vunpack.c.l.b16 %v6334
    %v6531 = vunpack.c.h.b16 %v6334
    %v6532 = vunpack.c.l.b16 %v6335
    %v6533 = vunpack.c.h.b16 %v6335
    %v6534 = vunpack.c.l.b16 %v6336
    %v6535 = vunpack.c.h.b16 %v6336
    %v6536 = vunpack.c.l.b16 %v6337
    %v6537 = vunpack.c.h.b16 %v6337
    %v6538 = vunpack.c.l.b16 %v6338
    %v6539 = vunpack.c.h.b16 %v6338
    %v6540 = vunpack.c.l.b16 %v6339
    %v6541 = vunpack.c.h.b16 %v6339
    %v6542 = vunpack.c.l.b16 %v6340
    %v6543 = vunpack.c.h.b16 %v6340
    %v6544 = vunpack.c.l.b16 %v6341
    %v6545 = vunpack.c.h.b16 %v6341
    %v6546 = vunpack.c.l.b16 %v6342
    %v6547 = vunpack.c.h.b16 %v6342
    %v6548 = vpack.c.b16 %v6422, %v6420
    %v6549 = vpack.c.b16 %v6423, %v6421
    %v6550 = vpack.c.b16 %v6426, %v6424
    %v6551 = vpack.c.b16 %v6427, %v6425
    %v6552 = vpack.c.b16 %v6430, %v6428
    %v6553 = vpack.c.b16 %v6431, %v6429
    %v6554 = vpack.c.b16 %v6434, %v6432
    %v6555 = vpack.c.b16 %v6435, %v6433
    %v6556 = vpack.c.b16 %v6438, %v6436
    %v6557 = vpack.c.b16 %v6439, %v6437
    %v6558 = vpack.c.b16 %v6442, %v6440
    %v6559 = vpack.c.b16 %v6443, %v6441
    %v6560 = vpack.c.b16 %v6446, %v6444
    %v6561 = vpack.c.b16 %v6447, %v6445
    %v6562 = vpack.c.b16 %v6450, %v6448
    %v6563 = vpack.c.b16 %v6451, %v6449
    %v6564 = vpack.c.b16 %v6454, %v6452
    %v6565 = vpack.c.b16 %v6455, %v6453
    %v6566 = vpack.c.b16 %v6458, %v6456
    %v6567 = vpack.c.b16 %v6459, %v6457
    %v6568 = vpack.c.b16 %v6462, %v6460
    %v6569 = vpack.c.b16 %v6463, %v6461
    %v6570 = vpack.c.b16 %v6466, %v6464
    %v6571 = vpack.c.b16 %v6467, %v6465
    %v6572 = vpack.c.b16 %v6470, %v6468
    %v6573 = vpack.c.b16 %v6471, %v6469
    %v6574 = vpack.c.b16 %v6474, %v6472
    %v6575 = vpack.c.b16 %v6475, %v6473
    %v6576 = vpack.c.b16 %v6478, %v6476
    %v6577 = vpack.c.b16 %v6479, %v6477
    %v6578 = vpack.c.b16 %v6482, %v6480
    %v6579 = vpack.c.b16 %v6483, %v6481
    %v6580 = vpack.c.b16 %v6486, %v6484
    %v6581 = vpack.c.b16 %v6487, %v6485
    %v6582 = vpack.c.b16 %v6490, %v6488
    %v6583 = vpack.c.b16 %v6491, %v6489
    %v6584 = vpack.c.b16 %v6494, %v6492
    %v6585 = vpack.c.b16 %v6495, %v6493
    %v6586 = vpack.c.b16 %v6498, %v6496
    %v6587 = vpack.c.b16 %v6499, %v6497
    %v6588 = vpack.c.b16 %v6502, %v6500
    %v6589 = vpack.c.b16 %v6503, %v6501
    %v6590 = vpack.c.b16 %v6506, %v6504
    %v6591 = vpack.c.b16 %v6507, %v6505
    %v6592 = vpack.c.b16 %v6510, %v6508
    %v6593 = vpack.c.b16 %v6511, %v6509
    %v6594 = vpack.c.b16 %v6514, %v6512
    %v6595 = vpack.c.b16 %v6515, %v6513
    %v6596 = vpack.c.b16 %v6518, %v6516
    %v6597 = vpack.c.b16 %v6519, %v6517
    %v6598 = vpack.c.b16 %v6522, %v6520
    %v6599 = vpack.c.b16 %v6523, %v6521
    %v6600 = vpack.c.b16 %v6526, %v6524
    %v6601 = vpack.c.b16 %v6527, %v6525
    %v6602 = vpack.c.b16 %v6530, %v6528
    %v6603 = vpack.c.b16 %v6531, %v6529
    %v6604 = vpack.c.b16 %v6534, %v6532
    %v6605 = vpack.c.b16 %v6535, %v6533
    %v6606 = vpack.c.b16 %v6538, %v6536
    %v6607 = vpack.c.b16 %v6539, %v6537
    %v6608 = vpack.c.b16 %v6542, %v6540
    %v6609 = vpack.c.b16 %v6543, %v6541
    %v6610 = vpack.c.b16 %v6546, %v6544
    %v6611 = vpack.c.b16 %v6547, %v6545
    %6676 = vmatprep.subr.bf16.mxu0 %v6563
    %6677 = vmatpush1.bf16.msra.mxu0 %v6562
    %6678 = vmatprep.subr.bf16.mxu0 %v6561
    %6679 = vmatpush1.bf16.msra.mxu0 %v6560
    %6680 = vmatprep.subr.bf16.mxu0 %v6559
    %6681 = vmatpush1.bf16.msra.mxu0 %v6558
    %6682 = vmatprep.subr.bf16.mxu0 %v6557
    %6683 = vmatpush1.bf16.msra.mxu0 %v6556
    %6684 = vmatprep.subr.bf16.mxu0 %v6555
    %6685 = vmatpush1.bf16.msra.mxu0 %v6554
    %6686 = vmatprep.subr.bf16.mxu0 %v6553
    %6687 = vmatpush1.bf16.msra.mxu0 %v6552
    %6688 = vmatprep.subr.bf16.mxu0 %v6551
    %6689 = vmatpush1.bf16.msra.mxu0 %v6550
    %6690 = vmatprep.subr.bf16.mxu0 %v6549
    %6691 = vmatpush1.bf16.msra.mxu0 %v6548
    %6692 = vmatprep.subr.bf16.mxu0 %v6579
    %6693 = vmatpush2.bf16.msra.mxu0 %v6578
    %6694 = vmatprep.subr.bf16.mxu0 %v6577
    %6695 = vmatpush2.bf16.msra.mxu0 %v6576
    %6696 = vmatprep.subr.bf16.mxu0 %v6575
    %6697 = vmatpush2.bf16.msra.mxu0 %v6574
    %6698 = vmatprep.subr.bf16.mxu0 %v6573
    %6699 = vmatpush2.bf16.msra.mxu0 %v6572
    %6700 = vmatprep.subr.bf16.mxu0 %v6571
    %6701 = vmatpush2.bf16.msra.mxu0 %v6570
    %6702 = vmatprep.subr.bf16.mxu0 %v6569
    %6703 = vmatpush2.bf16.msra.mxu0 %v6568
    %6704 = vmatprep.subr.bf16.mxu0 %v6567
    %6705 = vmatpush2.bf16.msra.mxu0 %v6566
    %6706 = vmatprep.subr.bf16.mxu0 %v6565
    %6707 = vmatpush2.bf16.msra.mxu0 %v6564
    %6708 = vmatprep.mubr.bf16.mxu0 %v6276
    %6709 = vmatmul.mubr.bf16.gmra.mxu0 %v6275
    %v6710 = vpop.f32.mrf.mxu0
    %v6711 = vadd.f32 %v6349, %v6710
    %v6712 = vpop.f32.mrf.mxu0
    %v6713 = vadd.f32 %v6353, %v6712
    %v6714 = vpop.f32.mrf.mxu0
    %v6715 = vpop.f32.mrf.mxu0
    %6716 = vdwg.mxu0
    %6717 = vmatprep.subr.bf16.mxu0 %v6595
    %6718 = vmatpush1.bf16.msra.mxu0 %v6594
    %6719 = vmatprep.subr.bf16.mxu0 %v6593
    %6720 = vmatpush1.bf16.msra.mxu0 %v6592
    %6721 = vmatprep.subr.bf16.mxu0 %v6591
    %6722 = vmatpush1.bf16.msra.mxu0 %v6590
    %6723 = vmatprep.subr.bf16.mxu0 %v6589
    %6724 = vmatpush1.bf16.msra.mxu0 %v6588
    %6725 = vmatprep.subr.bf16.mxu0 %v6587
    %6726 = vmatpush1.bf16.msra.mxu0 %v6586
    %6727 = vmatprep.subr.bf16.mxu0 %v6585
    %6728 = vmatpush1.bf16.msra.mxu0 %v6584
    %6729 = vmatprep.subr.bf16.mxu0 %v6583
    %6730 = vmatpush1.bf16.msra.mxu0 %v6582
    %6731 = vmatprep.subr.bf16.mxu0 %v6581
    %6732 = vmatpush1.bf16.msra.mxu0 %v6580
    %6733 = vmatprep.subr.bf16.mxu0 %v6611
    %6734 = vmatpush2.bf16.msra.mxu0 %v6610
    %6735 = vmatprep.subr.bf16.mxu0 %v6609
    %6736 = vmatpush2.bf16.msra.mxu0 %v6608
    %6737 = vmatprep.subr.bf16.mxu0 %v6607
    %6738 = vmatpush2.bf16.msra.mxu0 %v6606
    %6739 = vmatprep.subr.bf16.mxu0 %v6605
    %6740 = vmatpush2.bf16.msra.mxu0 %v6604
    %6741 = vmatprep.subr.bf16.mxu0 %v6603
    %6742 = vmatpush2.bf16.msra.mxu0 %v6602
    %6743 = vmatprep.subr.bf16.mxu0 %v6601
    %6744 = vmatpush2.bf16.msra.mxu0 %v6600
    %6745 = vmatprep.subr.bf16.mxu0 %v6599
    %6746 = vmatpush2.bf16.msra.mxu0 %v6598
    %6747 = vmatprep.subr.bf16.mxu0 %v6597
    %6748 = vmatpush2.bf16.msra.mxu0 %v6596
    %6749 = vmatprep.mubr.bf16.mxu0 %v6278
    %6750 = vmatmul.mubr.bf16.gmra.mxu0 %v6277
    %v6751 = vpop.f32.mrf.mxu0
    %v6752 = vadd.f32 %v6711, %v6751
    %v6753 = vpop.f32.mrf.mxu0
    %v6754 = vadd.f32 %v6713, %v6753
    %v6755 = vpop.f32.mrf.mxu0
    %v6756 = vpop.f32.mrf.mxu0
    %6757 = vdwg.mxu0
    %v6758 = vmax.f32 %v6752, 0.0
    %v6759 = vmax.f32 %v6754, 0.0
    %6760 = vst [vmem:[%s13] sm:$0xff] %v6758
    %6761 = vst [vmem:[%s13 + $0x8] sm:$0xff] %v6759
    // Predicated region
    $region94: #{vae_forward.1} parent=1 // pred_check
      _
    $region95: #{vae_forward.1} parent=1 // pred_check_branch
      %6763 = sbr.rel (0) target = $region97
    $region96: #{vae_forward.1} parent=1 // pred_region
      _
    $region97: #{vae_forward.1} parent=1 // pred_fallthru
      _
    // Predicated region
    $region98: #{vae_forward.1} parent=1 // pred_check
      _
    $region99: #{vae_forward.1} parent=1 // pred_check_branch
      %6765 = sbr.rel (0) target = $region101
    $region100: #{vae_forward.1} parent=1 // pred_region
      %s6767 = ssub.s32 256, 256
      %6768 = vsyncadd [#allocation4], %s6767
      %s6770 = sshll.u32 [#allocation19], 4
      %s6771 = int_to_ptr.vmem [resolvable:$true] %s6770
      %6773 = dma.vmem_to_hbm [thread:$0]  %s6771, 256, %s14, [#allocation4]
    $region101: #{vae_forward.1} parent=1 // pred_fallthru
      _
    // Predicated region
    $region102: #{vae_forward.1} parent=1 // pred_check
      _
    $region103: #{vae_forward.1} parent=1 // pred_check_branch
      %6775 = sbr.rel (0) target = $region105
    $region104: #{vae_forward.1} parent=1 // pred_region
      %s6777 = ssub.s32 256, 256
      %6778 = vsyncadd [#allocation21], %s6777
      %s6780 = sshll.u32 [#allocation20], 4
      %s6781 = int_to_ptr.vmem [resolvable:$true] %s6780
      %6783 = dma.vmem_to_hbm [thread:$0]  %s6781, 256, %s15, [#allocation21]
    $region105: #{vae_forward.1} parent=1 // pred_fallthru
      _
    // Predicated region
    $region106: #{vae_forward.1} parent=1 // pred_check
      _
    $region107: #{vae_forward.1} parent=1 // pred_check_branch
      %6785 = sbr.rel (0) target = $region109
    $region108: #{vae_forward.1} parent=1 // pred_region
      _
    $region109: #{vae_forward.1} parent=1 // pred_fallthru
      _
    // Predicated region
    $region110: #{vae_forward.1} parent=1 // pred_check
      _
    $region111: #{vae_forward.1} parent=1 // pred_check_branch
      %6787 = sbr.rel (0) target = $region113
    $region112: #{vae_forward.1} parent=1 // pred_region
      %6788 = dma.done [#allocation4], 256
    $region113: #{vae_forward.1} parent=1 // pred_fallthru
      _
    // Predicated region
    $region114: #{vae_forward.1} parent=1 // pred_check
      _
    $region115: #{vae_forward.1} parent=1 // pred_check_branch
      %6790 = sbr.rel (0) target = $region117
    $region116: #{vae_forward.1} parent=1 // pred_region
      %6791 = dma.done [#allocation21], 256
    $region117: #{vae_forward.1} parent=1 // pred_fallthru
      _
    %6792 = vsyncpa [#allocation3], 1
    %6793 = vsyncpa [#allocation6], 1
    %6794 = vsyncpa [#allocation9], 1
    %6795 = vsyncpa [#allocation12], 1
    %6796 = vsyncpa [#allocation15], 1
    %6797 = vsyncpa [#allocation18], 1
    %6798 = vsyncpa [#allocation4], 1
    %6799 = vsyncpa [#allocation21], 1

</llo_original>
